<compile_context>
chip_gen: v6e
topology: v6e:2x2x1
jax: 0.10.0
libtpu: 0.0.40
codegen_flags: <defaults>
</compile_context>

<pallas_src>
import functools

import jax
import jax.numpy as jnp
from jax.experimental import pallas as pl
from jax.experimental.pallas import tpu as pltpu

BN_EPS = 1e-5


# ----------------------------- Pallas kernel --------------------------------

def _basic_block_kernel(*refs, stride, OH, OW, CH, has_down):
    """One grid step == one batch image.  Computes the full BasicBlock."""
    if has_down:
        xph_ref, w1_ref, w2_ref, aff_ref, wsc_ref, o_ref, pad_ref, lhs_ref = refs
    else:
        xph_ref, w1_ref, w2_ref, aff_ref, o_ref, pad_ref, lhs_ref = refs
        wsc_ref = None

    s = stride
    Cin = xph_ref.shape[-1]
    P = pad_ref.shape[-1]
    aff = aff_ref[...]                 # (6, P) f32: s1, b1, s2, b2, ssc, bsc

    # Zero only the 1-pixel halo ring of the conv1 staging scratch; the
    # interior is fully overwritten every grid step.
    zr = jnp.zeros((1, OW + 2, P), pad_ref.dtype)
    zc = jnp.zeros((OH + 2, 1, P), pad_ref.dtype)
    pad_ref[0:1, :, :] = zr
    pad_ref[OH + 1:OH + 2, :, :] = zr
    pad_ref[:, 0:1, :] = zc
    pad_ref[:, OW + 1:OW + 2, :] = zc

    # Static output-row chunks so per-chunk f32 accumulators fit in vregs.
    chunks = [(r0, min(CH, OH - r0)) for r0 in range(0, OH, CH)]

    # ---- conv1: 3x3 / stride s, + BN1 + ReLU -> bf16 halo scratch ----------
    # Per kernel row di, the three width taps are merged into one (m, 3*Cin)
    # LHS staged in VMEM, so each dot has K = 3*Cin (fills the MXU depth).
    for r0, rows in chunks:
        m = rows * OW
        acc = jnp.zeros((m, P), jnp.float32)
        for di in range(3):
            qi = di // s
            for dj in range(3):
                pidx = (di % s) * s + (dj % s)     # phase plane for this tap
                qj = dj // s                        # within-plane col offset
                a = xph_ref[pidx, qi + r0:qi + r0 + rows, qj:qj + OW, :]
                lhs_ref[:m, dj * Cin:(dj + 1) * Cin] = a.reshape(m, Cin)
            acc = acc + jnp.dot(lhs_ref[:m, :3 * Cin], w1_ref[di],
                                preferred_element_type=jnp.float32)
        out1 = jnp.maximum(acc * aff[0:1, :] + aff[1:2, :], 0.0)
        pad_ref[1 + r0:1 + r0 + rows, 1:1 + OW, :] = (
            out1.reshape(rows, OW, P).astype(pad_ref.dtype))

    # ---- conv2: 3x3 / stride 1, + BN2, fused shortcut + residual + ReLU ----
    sc_plane = (1 % s) * s + (1 % s)   # phase plane holding x[::s, ::s]
    sc_off = 1 if s == 1 else 0
    for r0, rows in chunks:
        m = rows * OW
        acc = jnp.zeros((m, P), jnp.float32)
        for di in range(3):
            for dj in range(3):
                a = pad_ref[di + r0:di + r0 + rows, dj:dj + OW, :]
                lhs_ref[:m, dj * P:(dj + 1) * P] = a.reshape(m, P)
            acc = acc + jnp.dot(lhs_ref[:m, :3 * P], w2_ref[di],
                                preferred_element_type=jnp.float32)
        out2 = acc * aff[2:3, :] + aff[3:4, :]

        xs = xph_ref[sc_plane, sc_off + r0:sc_off + r0 + rows,
                     sc_off:sc_off + OW, :].reshape(m, Cin)
        if has_down:
            sc = jnp.dot(xs, wsc_ref[...], preferred_element_type=jnp.float32)
            sc = sc * aff[4:5, :] + aff[5:6, :]
        else:
            sc = xs.astype(jnp.float32)            # identity path: Cin == P
        y = jnp.maximum(out2 + sc, 0.0)
        o_ref[r0 * OW:r0 * OW + m, :] = y


# ------------------------------ wrappers -------------------------------------

def _fold_bn(bn):
    gamma, beta, mean, var = bn
    scale = gamma / jnp.sqrt(var + BN_EPS)
    return scale, beta - mean * scale


def _phase_planes(xp, stride, OH, OW):
    """Split a padded NHWC image into stride*stride unit-stride phase planes.

    Tap (di, dj) of a 3x3 / stride-s conv reads plane (di % s)*s + (dj % s) at
    within-plane offset (di // s, dj // s); every in-kernel slice is then a
    plain unit-stride window (no strided VMEM access, no 9x im2col copy).
    """
    qmax = (3 - 1) // stride
    PH, PW = OH + qmax, OW + qmax
    planes = []
    for ph in range(stride):
        for pw in range(stride):
            sl = xp[:, ph::stride, pw::stride, :][:, :PH, :PW, :]
            dh, dw = PH - sl.shape[1], PW - sl.shape[2]
            if dh or dw:
                sl = jnp.pad(sl, ((0, 0), (0, dh), (0, dw), (0, 0)))
            planes.append(sl)
    return jnp.stack(planes, axis=1)              # (B, s*s, PH, PW, C)


def basic_block_forward(params, x_nchw, stride):
    """BasicBlock forward (eval-mode BN).  NCHW in / NCHW out (f32)."""
    x = jnp.transpose(x_nchw, (0, 2, 3, 1)).astype(jnp.bfloat16)   # NHWC bf16
    B, H, W, Cin = x.shape
    P = params["conv1_w"].shape[0]
    s = stride
    OH = (H + 2 - 3) // s + 1
    OW = (W + 2 - 3) // s + 1
    has_down = "sc_conv_w" in params
    if not has_down:
        assert s == 1 and Cin == P, (
            "identity shortcut requires stride == 1 and in_planes == planes")

    xp = jnp.pad(x, ((0, 0), (1, 1), (1, 1), (0, 0)))
    xph = _phase_planes(xp, s, OH, OW)            # (B, s*s, PH, PW, Cin) bf16
    n_phase, PH, PW = xph.shape[1], xph.shape[2], xph.shape[3]

    # Weights: (Cout, Cin, 3, 3) -> (KH, 3*Cin, Cout); column index dj*C + c
    # matches the in-kernel width-merged LHS staging.  bf16 MXU operands.
    w1 = jnp.transpose(params["conv1_w"], (2, 3, 1, 0)).reshape(3, 3 * Cin, P)
    w2 = jnp.transpose(params["conv2_w"], (2, 3, 1, 0)).reshape(3, 3 * P, P)
    w1 = w1.astype(jnp.bfloat16)
    w2 = w2.astype(jnp.bfloat16)

    # Folded eval-mode BatchNorm -> per-channel scale/bias rows (f32).
    s1, b1 = _fold_bn(params["bn1"])
    s2c, b2c = _fold_bn(params["bn2"])
    if has_down:
        ssc, bsc = _fold_bn(params["sc_bn"])
    else:
        ssc = jnp.ones((P,), jnp.float32)
        bsc = jnp.zeros((P,), jnp.float32)
    aff = jnp.stack([s1, b1, s2c, b2c, ssc, bsc], axis=0).astype(jnp.float32)

    M = OH * OW
    Kmax = max(Cin, P)
    CH = max(1, min(OH, 128 // max(OW, 1)))       # ~128 output pixels / chunk

    in_specs = [
        pl.BlockSpec((None, n_phase, PH, PW, Cin), lambda b: (b, 0, 0, 0, 0)),
        pl.BlockSpec((3, 3 * Cin, P), lambda b: (0, 0, 0)),
        pl.BlockSpec((3, 3 * P, P), lambda b: (0, 0, 0)),
        pl.BlockSpec((6, P), lambda b: (0, 0)),
    ]
    args = [xph, w1, w2, aff]
    if has_down:
        wsc = params["sc_conv_w"].reshape(P, Cin).T.astype(jnp.bfloat16)
        in_specs.append(pl.BlockSpec((Cin, P), lambda b: (0, 0)))
        args.append(wsc)

    # Per-step VMEM working set (double-buffered streams + scratch), capped at
    # 48 MiB so the same plan fits v7x's 64 MiB as well as v5e/v6e's 128 MiB.
    bytes_in = n_phase * PH * PW * Cin * 2
    bytes_out = M * P * 4
    bytes_w = (9 * Cin * P + 9 * P * P
               + (Cin * P if has_down else 0)) * 2 + 6 * P * 4
    bytes_scr = (OH + 2) * (OW + 2) * P * 2 + CH * OW * 3 * Kmax * 2
    est = 2 * (bytes_in + bytes_out + bytes_w) + bytes_scr
    vmem_limit = int(min(48 << 20, max(16 << 20, 2 * est)))

    out = pl.pallas_call(
        functools.partial(_basic_block_kernel, stride=s, OH=OH, OW=OW, CH=CH,
                          has_down=has_down),
        out_shape=jax.ShapeDtypeStruct((B, M, P), jnp.float32),
        grid=(B,),
        in_specs=in_specs,
        out_specs=pl.BlockSpec((None, M, P), lambda b: (b, 0, 0)),
        scratch_shapes=[
            pltpu.VMEM((OH + 2, OW + 2, P), jnp.bfloat16),   # conv1 halo stage
            pltpu.VMEM((CH * OW, 3 * Kmax), jnp.bfloat16),   # merged-K LHS
        ],
        compiler_params=pltpu.CompilerParams(
            dimension_semantics=("parallel",),
            vmem_limit_bytes=vmem_limit),
    )(*args)
    return jnp.transpose(out.reshape(B, OH, OW, P), (0, 3, 1, 2))  # -> NCHW


# ----------------------------- parameters ------------------------------------

def _make_bn(key, c):
    k1, k2, k3, k4 = jax.random.split(key, 4)
    gamma = 1.0 + 0.1 * jax.random.normal(k1, (c,), jnp.float32)
    beta = 0.1 * jax.random.normal(k2, (c,), jnp.float32)
    mean = 0.1 * jax.random.normal(k3, (c,), jnp.float32)
    var = 1.0 + 0.2 * jax.random.uniform(k4, (c,), jnp.float32)
    return (gamma, beta, mean, var)


def _make_conv(key, cout, cin, kh, kw):
    fan = cin * kh * kw
    return (1.0 / jnp.sqrt(fan)) * jax.random.normal(
        key, (cout, cin, kh, kw), jnp.float32)


def init_block_params(key, in_planes, planes, stride):
    ks = jax.random.split(key, 6)
    p = {
        "conv1_w": _make_conv(ks[0], planes, in_planes, 3, 3),
        "bn1": _make_bn(ks[1], planes),
        "conv2_w": _make_conv(ks[2], planes, planes, 3, 3),
        "bn2": _make_bn(ks[3], planes),
    }
    if stride != 1 or in_planes != planes:        # BasicBlock.expansion == 1
        p["sc_conv_w"] = _make_conv(ks[4], planes, in_planes, 1, 1)
        p["sc_bn"] = _make_bn(ks[5], planes)
    return p


# --------------------------- pure-JAX reference -------------------------------

def reference_block(params, x_nchw, stride):
    def conv(x, w, s, p):
        return jax.lax.conv_general_dilated(
            x, w, window_strides=(s, s), padding=[(p, p), (p, p)],
            dimension_numbers=("NCHW", "OIHW", "NCHW"))

    def bn(x, pr):
        g, b, m, v = pr
        sc = g / jnp.sqrt(v + BN_EPS)
        return x * sc[None, :, None, None] + (b - m * sc)[None, :, None, None]

    out = jax.nn.relu(bn(conv(x_nchw, params["conv1_w"], stride, 1), params["bn1"]))
    out = bn(conv(out, params["conv2_w"], 1, 1), params["bn2"])
    if "sc_conv_w" in params:
        sc = bn(conv(x_nchw, params["sc_conv_w"], stride, 0), params["sc_bn"])
    else:
        sc = x_nchw
    return jax.nn.relu(out + sc)


def _rel_err(a, b):
    return float(jnp.max(jnp.abs(a - b)) / (jnp.max(jnp.abs(b)) + 1e-6))


# --------------------------------- main ---------------------------------------

if __name__ == "__main__":
    key = jax.random.PRNGKey(0)
    kx, kp_d, kp_i = jax.random.split(key, 3)
    x = jax.random.normal(kx, (2, 16, 16, 16), dtype=jnp.float32)   # NCHW

    # 1) Downsampling block: stride=2, 16 -> 32 planes (1x1 conv shortcut).
    params_d = init_block_params(kp_d, 16, 32, stride=2)
    fwd_d = jax.jit(functools.partial(basic_block_forward, stride=2))
    y_d = jax.block_until_ready(fwd_d(params_d, x))
    assert y_d.shape == (2, 32, 8, 8), y_d.shape
    e_d = _rel_err(y_d, reference_block(params_d, x, 2))
    assert e_d < 5e-2, f"downsample block mismatch: rel err {e_d}"

    # 2) Identity block: stride=1, in_planes == planes (identity shortcut).
    params_i = init_block_params(kp_i, 16, 16, stride=1)
    fwd_i = jax.jit(functools.partial(basic_block_forward, stride=1))
    y_i = jax.block_until_ready(fwd_i(params_i, x))
    assert y_i.shape == (2, 16, 16, 16), y_i.shape
    e_i = _rel_err(y_i, reference_block(params_i, x, 1))
    assert e_i < 5e-2, f"identity block mismatch: rel err {e_i}"

    print("KERNEL_OK")
</pallas_src>

<mosaic_0001>
module attributes {stable_mosaic.version = 11 : i64} {
  func.func @_basic_block_kernel(%arg0: i32, %arg1: memref<1x4x9x9x16xbf16, #tpu.memory_space<vmem>>, %arg2: memref<3x48x32xbf16, #tpu.memory_space<vmem>>, %arg3: memref<3x96x32xbf16, #tpu.memory_space<vmem>>, %arg4: memref<6x32xf32, #tpu.memory_space<vmem>>, %arg5: memref<16x32xbf16, #tpu.memory_space<vmem>>, %arg6: memref<1x64x32xf32, #tpu.memory_space<vmem>>, %arg7: memref<10x10x32xbf16, #tpu.memory_space<vmem>>, %arg8: memref<64x96xbf16, #tpu.memory_space<vmem>>) attributes {dimension_semantics = [#tpu.dimension_semantics<parallel>], iteration_bounds = array<i64: 2>, scalar_prefetch = 0 : i64, scratch_operands = 2 : i64, tpu.core_type = #tpu.core_type<tc>, window_params = [{transform_indices = @transform_0, window_bounds = array<i64: 1, 4, 9, 9, 16>}, {pipeline_mode = #tpu.pipeline_mode<synchronous>, transform_indices = @transform_1, window_bounds = array<i64: 3, 48, 32>}, {pipeline_mode = #tpu.pipeline_mode<synchronous>, transform_indices = @transform_2, window_bounds = array<i64: 3, 96, 32>}, {pipeline_mode = #tpu.pipeline_mode<synchronous>, transform_indices = @transform_3, window_bounds = array<i64: 6, 32>}, {pipeline_mode = #tpu.pipeline_mode<synchronous>, transform_indices = @transform_4, window_bounds = array<i64: 16, 32>}, {transform_indices = @transform_5, window_bounds = array<i64: 1, 64, 32>}]} {
    %c0 = arith.constant 0 : index
    %c0_0 = arith.constant 0 : index
    %0 = vector.load %arg4[%c0, %c0_0] : memref<6x32xf32, #tpu.memory_space<vmem>>, vector<6x32xf32>
    %cst = arith.constant 0.000000e+00 : bf16
    %1 = vector.broadcast %cst : bf16 to vector<1x10x32xbf16>
    %cst_1 = arith.constant 0.000000e+00 : bf16
    %2 = vector.broadcast %cst_1 : bf16 to vector<10x1x32xbf16>
    %c0_2 = arith.constant 0 : index
    %c0_3 = arith.constant 0 : index
    %c0_4 = arith.constant 0 : index
    %3 = vector.load %arg7[%c0_2, %c0_3, %c0_4] : memref<10x10x32xbf16, #tpu.memory_space<vmem>>, vector<1x10x32xbf16>
    tpu.vector_store %arg7[%c0_2, %c0_3, %c0_4], %1 {strides = array<i32>} : memref<10x10x32xbf16, #tpu.memory_space<vmem>>, vector<1x10x32xbf16>,
    %c9 = arith.constant 9 : index
    %c0_5 = arith.constant 0 : index
    %c0_6 = arith.constant 0 : index
    %4 = vector.load %arg7[%c9, %c0_5, %c0_6] : memref<10x10x32xbf16, #tpu.memory_space<vmem>>, vector<1x10x32xbf16>
    tpu.vector_store %arg7[%c9, %c0_5, %c0_6], %1 {strides = array<i32>} : memref<10x10x32xbf16, #tpu.memory_space<vmem>>, vector<1x10x32xbf16>,
    %c0_7 = arith.constant 0 : index
    %c0_8 = arith.constant 0 : index
    %c0_9 = arith.constant 0 : index
    %5 = vector.load %arg7[%c0_7, %c0_8, %c0_9] : memref<10x10x32xbf16, #tpu.memory_space<vmem>>, vector<10x1x32xbf16>
    tpu.vector_store %arg7[%c0_7, %c0_8, %c0_9], %2 {strides = array<i32>} : memref<10x10x32xbf16, #tpu.memory_space<vmem>>, vector<10x1x32xbf16>,
    %c0_10 = arith.constant 0 : index
    %c9_11 = arith.constant 9 : index
    %c0_12 = arith.constant 0 : index
    %6 = vector.load %arg7[%c0_10, %c9_11, %c0_12] : memref<10x10x32xbf16, #tpu.memory_space<vmem>>, vector<10x1x32xbf16>
    tpu.vector_store %arg7[%c0_10, %c9_11, %c0_12], %2 {strides = array<i32>} : memref<10x10x32xbf16, #tpu.memory_space<vmem>>, vector<10x1x32xbf16>,
    %cst_13 = arith.constant 0.000000e+00 : f32
    %7 = vector.broadcast %cst_13 : f32 to vector<64x32xf32>
    %c0_14 = arith.constant 0 : index
    %c0_15 = arith.constant 0 : index
    %c0_16 = arith.constant 0 : index
    %c0_17 = arith.constant 0 : index
    %c0_18 = arith.constant 0 : index
    %8 = vector.load %arg1[%c0_14, %c0_15, %c0_16, %c0_17, %c0_18] : memref<1x4x9x9x16xbf16, #tpu.memory_space<vmem>>, vector<1x1x8x8x16xbf16>
    %9 = vector.shape_cast %8 : vector<1x1x8x8x16xbf16> to vector<8x8x16xbf16>
    %10 = vector.shape_cast %9 : vector<8x8x16xbf16> to vector<64x16xbf16>
    %c0_19 = arith.constant 0 : index
    %c0_20 = arith.constant 0 : index
    %11 = vector.load %arg8[%c0_19, %c0_20] : memref<64x96xbf16, #tpu.memory_space<vmem>>, vector<64x16xbf16>
    tpu.vector_store %arg8[%c0_19, %c0_20], %10 {strides = array<i32>} : memref<64x96xbf16, #tpu.memory_space<vmem>>, vector<64x16xbf16>,
    %c0_21 = arith.constant 0 : index
    %c1 = arith.constant 1 : index
    %c0_22 = arith.constant 0 : index
    %c0_23 = arith.constant 0 : index
    %c0_24 = arith.constant 0 : index
    %12 = vector.load %arg1[%c0_21, %c1, %c0_22, %c0_23, %c0_24] : memref<1x4x9x9x16xbf16, #tpu.memory_space<vmem>>, vector<1x1x8x8x16xbf16>
    %13 = vector.shape_cast %12 : vector<1x1x8x8x16xbf16> to vector<8x8x16xbf16>
    %14 = vector.shape_cast %13 : vector<8x8x16xbf16> to vector<64x16xbf16>
    %c0_25 = arith.constant 0 : index
    %c16 = arith.constant 16 : index
    %15 = vector.load %arg8[%c0_25, %c16] : memref<64x96xbf16, #tpu.memory_space<vmem>>, vector<64x16xbf16>
    tpu.vector_store %arg8[%c0_25, %c16], %14 {strides = array<i32>} : memref<64x96xbf16, #tpu.memory_space<vmem>>, vector<64x16xbf16>,
    %c0_26 = arith.constant 0 : index
    %c0_27 = arith.constant 0 : index
    %c0_28 = arith.constant 0 : index
    %c1_29 = arith.constant 1 : index
    %c0_30 = arith.constant 0 : index
    %16 = vector.load %arg1[%c0_26, %c0_27, %c0_28, %c1_29, %c0_30] : memref<1x4x9x9x16xbf16, #tpu.memory_space<vmem>>, vector<1x1x8x8x16xbf16>
    %17 = vector.shape_cast %16 : vector<1x1x8x8x16xbf16> to vector<8x8x16xbf16>
    %18 = vector.shape_cast %17 : vector<8x8x16xbf16> to vector<64x16xbf16>
    %c0_31 = arith.constant 0 : index
    %c32 = arith.constant 32 : index
    %19 = vector.load %arg8[%c0_31, %c32] : memref<64x96xbf16, #tpu.memory_space<vmem>>, vector<64x16xbf16>
    tpu.vector_store %arg8[%c0_31, %c32], %18 {strides = array<i32>} : memref<64x96xbf16, #tpu.memory_space<vmem>>, vector<64x16xbf16>,
    %c0_32 = arith.constant 0 : index
    %c0_33 = arith.constant 0 : index
    %20 = vector.load %arg8[%c0_32, %c0_33] : memref<64x96xbf16, #tpu.memory_space<vmem>>, vector<64x48xbf16>
    %c0_34 = arith.constant 0 : index
    %c0_35 = arith.constant 0 : index
    %c0_36 = arith.constant 0 : index
    %21 = vector.load %arg2[%c0_34, %c0_35, %c0_36] : memref<3x48x32xbf16, #tpu.memory_space<vmem>>, vector<1x48x32xbf16>
    %22 = vector.shape_cast %21 : vector<1x48x32xbf16> to vector<48x32xbf16>
    %cst_37 = arith.constant dense<0.000000e+00> : vector<64x32xf32>
    %23 = tpu.matmul %20, %22, %cst_37 {dimension_numbers = #tpu.dot_dimension_numbers<[1], [0], [0], [1], [0, 0, 1, 1], [], []>} : vector<64x48xbf16>, vector<48x32xbf16>, vector<64x32xf32> -> vector<64x32xf32>
    %24 = arith.addf %7, %23 : vector<64x32xf32>
    %c0_38 = arith.constant 0 : index
    %c2 = arith.constant 2 : index
    %c0_39 = arith.constant 0 : index
    %c0_40 = arith.constant 0 : index
    %c0_41 = arith.constant 0 : index
    %25 = vector.load %arg1[%c0_38, %c2, %c0_39, %c0_40, %c0_41] : memref<1x4x9x9x16xbf16, #tpu.memory_space<vmem>>, vector<1x1x8x8x16xbf16>
    %26 = vector.shape_cast %25 : vector<1x1x8x8x16xbf16> to vector<8x8x16xbf16>
    %27 = vector.shape_cast %26 : vector<8x8x16xbf16> to vector<64x16xbf16>
    %c0_42 = arith.constant 0 : index
    %c0_43 = arith.constant 0 : index
    %28 = vector.load %arg8[%c0_42, %c0_43] : memref<64x96xbf16, #tpu.memory_space<vmem>>, vector<64x16xbf16>
    tpu.vector_store %arg8[%c0_42, %c0_43], %27 {strides = array<i32>} : memref<64x96xbf16, #tpu.memory_space<vmem>>, vector<64x16xbf16>,
    %c0_44 = arith.constant 0 : index
    %c3 = arith.constant 3 : index
    %c0_45 = arith.constant 0 : index
    %c0_46 = arith.constant 0 : index
    %c0_47 = arith.constant 0 : index
    %29 = vector.load %arg1[%c0_44, %c3, %c0_45, %c0_46, %c0_47] : memref<1x4x9x9x16xbf16, #tpu.memory_space<vmem>>, vector<1x1x8x8x16xbf16>
    %30 = vector.shape_cast %29 : vector<1x1x8x8x16xbf16> to vector<8x8x16xbf16>
    %31 = vector.shape_cast %30 : vector<8x8x16xbf16> to vector<64x16xbf16>
    %c0_48 = arith.constant 0 : index
    %c16_49 = arith.constant 16 : index
    %32 = vector.load %arg8[%c0_48, %c16_49] : memref<64x96xbf16, #tpu.memory_space<vmem>>, vector<64x16xbf16>
    tpu.vector_store %arg8[%c0_48, %c16_49], %31 {strides = array<i32>} : memref<64x96xbf16, #tpu.memory_space<vmem>>, vector<64x16xbf16>,
    %c0_50 = arith.constant 0 : index
    %c2_51 = arith.constant 2 : index
    %c0_52 = arith.constant 0 : index
    %c1_53 = arith.constant 1 : index
    %c0_54 = arith.constant 0 : index
    %33 = vector.load %arg1[%c0_50, %c2_51, %c0_52, %c1_53, %c0_54] : memref<1x4x9x9x16xbf16, #tpu.memory_space<vmem>>, vector<1x1x8x8x16xbf16>
    %34 = vector.shape_cast %33 : vector<1x1x8x8x16xbf16> to vector<8x8x16xbf16>
    %35 = vector.shape_cast %34 : vector<8x8x16xbf16> to vector<64x16xbf16>
    %c0_55 = arith.constant 0 : index
    %c32_56 = arith.constant 32 : index
    %36 = vector.load %arg8[%c0_55, %c32_56] : memref<64x96xbf16, #tpu.memory_space<vmem>>, vector<64x16xbf16>
    tpu.vector_store %arg8[%c0_55, %c32_56], %35 {strides = array<i32>} : memref<64x96xbf16, #tpu.memory_space<vmem>>, vector<64x16xbf16>,
    %c0_57 = arith.constant 0 : index
    %c0_58 = arith.constant 0 : index
    %37 = vector.load %arg8[%c0_57, %c0_58] : memref<64x96xbf16, #tpu.memory_space<vmem>>, vector<64x48xbf16>
    %c1_59 = arith.constant 1 : index
    %c0_60 = arith.constant 0 : index
    %c0_61 = arith.constant 0 : index
    %38 = vector.load %arg2[%c1_59, %c0_60, %c0_61] : memref<3x48x32xbf16, #tpu.memory_space<vmem>>, vector<1x48x32xbf16>
    %39 = vector.shape_cast %38 : vector<1x48x32xbf16> to vector<48x32xbf16>
    %cst_62 = arith.constant dense<0.000000e+00> : vector<64x32xf32>
    %40 = tpu.matmul %37, %39, %cst_62 {dimension_numbers = #tpu.dot_dimension_numbers<[1], [0], [0], [1], [0, 0, 1, 1], [], []>} : vector<64x48xbf16>, vector<48x32xbf16>, vector<64x32xf32> -> vector<64x32xf32>
    %41 = arith.addf %24, %40 : vector<64x32xf32>
    %c0_63 = arith.constant 0 : index
    %c0_64 = arith.constant 0 : index
    %c1_65 = arith.constant 1 : index
    %c0_66 = arith.constant 0 : index
    %c0_67 = arith.constant 0 : index
    %42 = vector.load %arg1[%c0_63, %c0_64, %c1_65, %c0_66, %c0_67] : memref<1x4x9x9x16xbf16, #tpu.memory_space<vmem>>, vector<1x1x8x8x16xbf16>
    %43 = vector.shape_cast %42 : vector<1x1x8x8x16xbf16> to vector<8x8x16xbf16>
    %44 = vector.shape_cast %43 : vector<8x8x16xbf16> to vector<64x16xbf16>
    %c0_68 = arith.constant 0 : index
    %c0_69 = arith.constant 0 : index
    %45 = vector.load %arg8[%c0_68, %c0_69] : memref<64x96xbf16, #tpu.memory_space<vmem>>, vector<64x16xbf16>
    tpu.vector_store %arg8[%c0_68, %c0_69], %44 {strides = array<i32>} : memref<64x96xbf16, #tpu.memory_space<vmem>>, vector<64x16xbf16>,
    %c0_70 = arith.constant 0 : index
    %c1_71 = arith.constant 1 : index
    %c1_72 = arith.constant 1 : index
    %c0_73 = arith.constant 0 : index
    %c0_74 = arith.constant 0 : index
    %46 = vector.load %arg1[%c0_70, %c1_71, %c1_72, %c0_73, %c0_74] : memref<1x4x9x9x16xbf16, #tpu.memory_space<vmem>>, vector<1x1x8x8x16xbf16>
    %47 = vector.shape_cast %46 : vector<1x1x8x8x16xbf16> to vector<8x8x16xbf16>
    %48 = vector.shape_cast %47 : vector<8x8x16xbf16> to vector<64x16xbf16>
    %c0_75 = arith.constant 0 : index
    %c16_76 = arith.constant 16 : index
    %49 = vector.load %arg8[%c0_75, %c16_76] : memref<64x96xbf16, #tpu.memory_space<vmem>>, vector<64x16xbf16>
    tpu.vector_store %arg8[%c0_75, %c16_76], %48 {strides = array<i32>} : memref<64x96xbf16, #tpu.memory_space<vmem>>, vector<64x16xbf16>,
    %c0_77 = arith.constant 0 : index
    %c0_78 = arith.constant 0 : index
    %c1_79 = arith.constant 1 : index
    %c1_80 = arith.constant 1 : index
    %c0_81 = arith.constant 0 : index
    %50 = vector.load %arg1[%c0_77, %c0_78, %c1_79, %c1_80, %c0_81] : memref<1x4x9x9x16xbf16, #tpu.memory_space<vmem>>, vector<1x1x8x8x16xbf16>
    %51 = vector.shape_cast %50 : vector<1x1x8x8x16xbf16> to vector<8x8x16xbf16>
    %52 = vector.shape_cast %51 : vector<8x8x16xbf16> to vector<64x16xbf16>
    %c0_82 = arith.constant 0 : index
    %c32_83 = arith.constant 32 : index
    %53 = vector.load %arg8[%c0_82, %c32_83] : memref<64x96xbf16, #tpu.memory_space<vmem>>, vector<64x16xbf16>
    tpu.vector_store %arg8[%c0_82, %c32_83], %52 {strides = array<i32>} : memref<64x96xbf16, #tpu.memory_space<vmem>>, vector<64x16xbf16>,
    %c0_84 = arith.constant 0 : index
    %c0_85 = arith.constant 0 : index
    %54 = vector.load %arg8[%c0_84, %c0_85] : memref<64x96xbf16, #tpu.memory_space<vmem>>, vector<64x48xbf16>
    %c2_86 = arith.constant 2 : index
    %c0_87 = arith.constant 0 : index
    %c0_88 = arith.constant 0 : index
    %55 = vector.load %arg2[%c2_86, %c0_87, %c0_88] : memref<3x48x32xbf16, #tpu.memory_space<vmem>>, vector<1x48x32xbf16>
    %56 = vector.shape_cast %55 : vector<1x48x32xbf16> to vector<48x32xbf16>
    %cst_89 = arith.constant dense<0.000000e+00> : vector<64x32xf32>
    %57 = tpu.matmul %54, %56, %cst_89 {dimension_numbers = #tpu.dot_dimension_numbers<[1], [0], [0], [1], [0, 0, 1, 1], [], []>} : vector<64x48xbf16>, vector<48x32xbf16>, vector<64x32xf32> -> vector<64x32xf32>
    %58 = arith.addf %41, %57 : vector<64x32xf32>
    %59 = vector.extract_strided_slice %0 {offsets = [0, 0], sizes = [1, 32], strides = [1, 1]} : vector<6x32xf32> to vector<1x32xf32>
    %60 = vector.broadcast %59 : vector<1x32xf32> to vector<64x32xf32>
    %61 = arith.mulf %58, %60 : vector<64x32xf32>
    %62 = vector.extract_strided_slice %0 {offsets = [1, 0], sizes = [1, 32], strides = [1, 1]} : vector<6x32xf32> to vector<1x32xf32>
    %63 = vector.broadcast %62 : vector<1x32xf32> to vector<64x32xf32>
    %64 = arith.addf %61, %63 : vector<64x32xf32>
    %cst_90 = arith.constant 0.000000e+00 : f32
    %65 = vector.broadcast %cst_90 : f32 to vector<64x32xf32>
    %66 = arith.maximumf %64, %65 : vector<64x32xf32>
    %67 = vector.shape_cast %66 : vector<64x32xf32> to vector<8x8x32xf32>
    %68 = arith.truncf %67 : vector<8x8x32xf32> to vector<8x8x32xbf16>
    %c1_91 = arith.constant 1 : index
    %c1_92 = arith.constant 1 : index
    %c0_93 = arith.constant 0 : index
    %69 = vector.load %arg7[%c1_91, %c1_92, %c0_93] : memref<10x10x32xbf16, #tpu.memory_space<vmem>>, vector<8x8x32xbf16>
    tpu.vector_store %arg7[%c1_91, %c1_92, %c0_93], %68 {strides = array<i32>} : memref<10x10x32xbf16, #tpu.memory_space<vmem>>, vector<8x8x32xbf16>,
    %cst_94 = arith.constant 0.000000e+00 : f32
    %70 = vector.broadcast %cst_94 : f32 to vector<64x32xf32>
    %c0_95 = arith.constant 0 : index
    %c0_96 = arith.constant 0 : index
    %c0_97 = arith.constant 0 : index
    %71 = vector.load %arg7[%c0_95, %c0_96, %c0_97] : memref<10x10x32xbf16, #tpu.memory_space<vmem>>, vector<8x8x32xbf16>
    %72 = vector.shape_cast %71 : vector<8x8x32xbf16> to vector<64x32xbf16>
    %c0_98 = arith.constant 0 : index
    %c0_99 = arith.constant 0 : index
    %73 = vector.load %arg8[%c0_98, %c0_99] : memref<64x96xbf16, #tpu.memory_space<vmem>>, vector<64x32xbf16>
    tpu.vector_store %arg8[%c0_98, %c0_99], %72 {strides = array<i32>} : memref<64x96xbf16, #tpu.memory_space<vmem>>, vector<64x32xbf16>,
    %c0_100 = arith.constant 0 : index
    %c1_101 = arith.constant 1 : index
    %c0_102 = arith.constant 0 : index
    %74 = vector.load %arg7[%c0_100, %c1_101, %c0_102] : memref<10x10x32xbf16, #tpu.memory_space<vmem>>, vector<8x8x32xbf16>
    %75 = vector.shape_cast %74 : vector<8x8x32xbf16> to vector<64x32xbf16>
    %c0_103 = arith.constant 0 : index
    %c32_104 = arith.constant 32 : index
    %76 = vector.load %arg8[%c0_103, %c32_104] : memref<64x96xbf16, #tpu.memory_space<vmem>>, vector<64x32xbf16>
    tpu.vector_store %arg8[%c0_103, %c32_104], %75 {strides = array<i32>} : memref<64x96xbf16, #tpu.memory_space<vmem>>, vector<64x32xbf16>,
    %c0_105 = arith.constant 0 : index
    %c2_106 = arith.constant 2 : index
    %c0_107 = arith.constant 0 : index
    %77 = vector.load %arg7[%c0_105, %c2_106, %c0_107] : memref<10x10x32xbf16, #tpu.memory_space<vmem>>, vector<8x8x32xbf16>
    %78 = vector.shape_cast %77 : vector<8x8x32xbf16> to vector<64x32xbf16>
    %c0_108 = arith.constant 0 : index
    %c64 = arith.constant 64 : index
    %79 = vector.load %arg8[%c0_108, %c64] : memref<64x96xbf16, #tpu.memory_space<vmem>>, vector<64x32xbf16>
    tpu.vector_store %arg8[%c0_108, %c64], %78 {strides = array<i32>} : memref<64x96xbf16, #tpu.memory_space<vmem>>, vector<64x32xbf16>,
    %c0_109 = arith.constant 0 : index
    %c0_110 = arith.constant 0 : index
    %80 = vector.load %arg8[%c0_109, %c0_110] : memref<64x96xbf16, #tpu.memory_space<vmem>>, vector<64x96xbf16>
    %c0_111 = arith.constant 0 : index
    %c0_112 = arith.constant 0 : index
    %c0_113 = arith.constant 0 : index
    %81 = vector.load %arg3[%c0_111, %c0_112, %c0_113] : memref<3x96x32xbf16, #tpu.memory_space<vmem>>, vector<1x96x32xbf16>
    %82 = vector.shape_cast %81 : vector<1x96x32xbf16> to vector<96x32xbf16>
    %cst_114 = arith.constant dense<0.000000e+00> : vector<64x32xf32>
    %83 = tpu.matmul %80, %82, %cst_114 {dimension_numbers = #tpu.dot_dimension_numbers<[1], [0], [0], [1], [0, 0, 1, 1], [], []>} : vector<64x96xbf16>, vector<96x32xbf16>, vector<64x32xf32> -> vector<64x32xf32>
    %84 = arith.addf %70, %83 : vector<64x32xf32>
    %c1_115 = arith.constant 1 : index
    %c0_116 = arith.constant 0 : index
    %c0_117 = arith.constant 0 : index
    %85 = vector.load %arg7[%c1_115, %c0_116, %c0_117] : memref<10x10x32xbf16, #tpu.memory_space<vmem>>, vector<8x8x32xbf16>
    %86 = vector.shape_cast %85 : vector<8x8x32xbf16> to vector<64x32xbf16>
    %c0_118 = arith.constant 0 : index
    %c0_119 = arith.constant 0 : index
    %87 = vector.load %arg8[%c0_118, %c0_119] : memref<64x96xbf16, #tpu.memory_space<vmem>>, vector<64x32xbf16>
    tpu.vector_store %arg8[%c0_118, %c0_119], %86 {strides = array<i32>} : memref<64x96xbf16, #tpu.memory_space<vmem>>, vector<64x32xbf16>,
    %c1_120 = arith.constant 1 : index
    %c1_121 = arith.constant 1 : index
    %c0_122 = arith.constant 0 : index
    %88 = vector.load %arg7[%c1_120, %c1_121, %c0_122] : memref<10x10x32xbf16, #tpu.memory_space<vmem>>, vector<8x8x32xbf16>
    %89 = vector.shape_cast %88 : vector<8x8x32xbf16> to vector<64x32xbf16>
    %c0_123 = arith.constant 0 : index
    %c32_124 = arith.constant 32 : index
    %90 = vector.load %arg8[%c0_123, %c32_124] : memref<64x96xbf16, #tpu.memory_space<vmem>>, vector<64x32xbf16>
    tpu.vector_store %arg8[%c0_123, %c32_124], %89 {strides = array<i32>} : memref<64x96xbf16, #tpu.memory_space<vmem>>, vector<64x32xbf16>,
    %c1_125 = arith.constant 1 : index
    %c2_126 = arith.constant 2 : index
    %c0_127 = arith.constant 0 : index
    %91 = vector.load %arg7[%c1_125, %c2_126, %c0_127] : memref<10x10x32xbf16, #tpu.memory_space<vmem>>, vector<8x8x32xbf16>
    %92 = vector.shape_cast %91 : vector<8x8x32xbf16> to vector<64x32xbf16>
    %c0_128 = arith.constant 0 : index
    %c64_129 = arith.constant 64 : index
    %93 = vector.load %arg8[%c0_128, %c64_129] : memref<64x96xbf16, #tpu.memory_space<vmem>>, vector<64x32xbf16>
    tpu.vector_store %arg8[%c0_128, %c64_129], %92 {strides = array<i32>} : memref<64x96xbf16, #tpu.memory_space<vmem>>, vector<64x32xbf16>,
    %c0_130 = arith.constant 0 : index
    %c0_131 = arith.constant 0 : index
    %94 = vector.load %arg8[%c0_130, %c0_131] : memref<64x96xbf16, #tpu.memory_space<vmem>>, vector<64x96xbf16>
    %c1_132 = arith.constant 1 : index
    %c0_133 = arith.constant 0 : index
    %c0_134 = arith.constant 0 : index
    %95 = vector.load %arg3[%c1_132, %c0_133, %c0_134] : memref<3x96x32xbf16, #tpu.memory_space<vmem>>, vector<1x96x32xbf16>
    %96 = vector.shape_cast %95 : vector<1x96x32xbf16> to vector<96x32xbf16>
    %cst_135 = arith.constant dense<0.000000e+00> : vector<64x32xf32>
    %97 = tpu.matmul %94, %96, %cst_135 {dimension_numbers = #tpu.dot_dimension_numbers<[1], [0], [0], [1], [0, 0, 1, 1], [], []>} : vector<64x96xbf16>, vector<96x32xbf16>, vector<64x32xf32> -> vector<64x32xf32>
    %98 = arith.addf %84, %97 : vector<64x32xf32>
    %c2_136 = arith.constant 2 : index
    %c0_137 = arith.constant 0 : index
    %c0_138 = arith.constant 0 : index
    %99 = vector.load %arg7[%c2_136, %c0_137, %c0_138] : memref<10x10x32xbf16, #tpu.memory_space<vmem>>, vector<8x8x32xbf16>
    %100 = vector.shape_cast %99 : vector<8x8x32xbf16> to vector<64x32xbf16>
    %c0_139 = arith.constant 0 : index
    %c0_140 = arith.constant 0 : index
    %101 = vector.load %arg8[%c0_139, %c0_140] : memref<64x96xbf16, #tpu.memory_space<vmem>>, vector<64x32xbf16>
    tpu.vector_store %arg8[%c0_139, %c0_140], %100 {strides = array<i32>} : memref<64x96xbf16, #tpu.memory_space<vmem>>, vector<64x32xbf16>,
    %c2_141 = arith.constant 2 : index
    %c1_142 = arith.constant 1 : index
    %c0_143 = arith.constant 0 : index
    %102 = vector.load %arg7[%c2_141, %c1_142, %c0_143] : memref<10x10x32xbf16, #tpu.memory_space<vmem>>, vector<8x8x32xbf16>
    %103 = vector.shape_cast %102 : vector<8x8x32xbf16> to vector<64x32xbf16>
    %c0_144 = arith.constant 0 : index
    %c32_145 = arith.constant 32 : index
    %104 = vector.load %arg8[%c0_144, %c32_145] : memref<64x96xbf16, #tpu.memory_space<vmem>>, vector<64x32xbf16>
    tpu.vector_store %arg8[%c0_144, %c32_145], %103 {strides = array<i32>} : memref<64x96xbf16, #tpu.memory_space<vmem>>, vector<64x32xbf16>,
    %c2_146 = arith.constant 2 : index
    %c2_147 = arith.constant 2 : index
    %c0_148 = arith.constant 0 : index
    %105 = vector.load %arg7[%c2_146, %c2_147, %c0_148] : memref<10x10x32xbf16, #tpu.memory_space<vmem>>, vector<8x8x32xbf16>
    %106 = vector.shape_cast %105 : vector<8x8x32xbf16> to vector<64x32xbf16>
    %c0_149 = arith.constant 0 : index
    %c64_150 = arith.constant 64 : index
    %107 = vector.load %arg8[%c0_149, %c64_150] : memref<64x96xbf16, #tpu.memory_space<vmem>>, vector<64x32xbf16>
    tpu.vector_store %arg8[%c0_149, %c64_150], %106 {strides = array<i32>} : memref<64x96xbf16, #tpu.memory_space<vmem>>, vector<64x32xbf16>,
    %c0_151 = arith.constant 0 : index
    %c0_152 = arith.constant 0 : index
    %108 = vector.load %arg8[%c0_151, %c0_152] : memref<64x96xbf16, #tpu.memory_space<vmem>>, vector<64x96xbf16>
    %c2_153 = arith.constant 2 : index
    %c0_154 = arith.constant 0 : index
    %c0_155 = arith.constant 0 : index
    %109 = vector.load %arg3[%c2_153, %c0_154, %c0_155] : memref<3x96x32xbf16, #tpu.memory_space<vmem>>, vector<1x96x32xbf16>
    %110 = vector.shape_cast %109 : vector<1x96x32xbf16> to vector<96x32xbf16>
    %cst_156 = arith.constant dense<0.000000e+00> : vector<64x32xf32>
    %111 = tpu.matmul %108, %110, %cst_156 {dimension_numbers = #tpu.dot_dimension_numbers<[1], [0], [0], [1], [0, 0, 1, 1], [], []>} : vector<64x96xbf16>, vector<96x32xbf16>, vector<64x32xf32> -> vector<64x32xf32>
    %112 = arith.addf %98, %111 : vector<64x32xf32>
    %113 = vector.extract_strided_slice %0 {offsets = [2, 0], sizes = [1, 32], strides = [1, 1]} : vector<6x32xf32> to vector<1x32xf32>
    %114 = vector.broadcast %113 : vector<1x32xf32> to vector<64x32xf32>
    %115 = arith.mulf %112, %114 : vector<64x32xf32>
    %116 = vector.extract_strided_slice %0 {offsets = [3, 0], sizes = [1, 32], strides = [1, 1]} : vector<6x32xf32> to vector<1x32xf32>
    %117 = vector.broadcast %116 : vector<1x32xf32> to vector<64x32xf32>
    %118 = arith.addf %115, %117 : vector<64x32xf32>
    %c0_157 = arith.constant 0 : index
    %c3_158 = arith.constant 3 : index
    %c0_159 = arith.constant 0 : index
    %c0_160 = arith.constant 0 : index
    %c0_161 = arith.constant 0 : index
    %119 = vector.load %arg1[%c0_157, %c3_158, %c0_159, %c0_160, %c0_161] : memref<1x4x9x9x16xbf16, #tpu.memory_space<vmem>>, vector<1x1x8x8x16xbf16>
    %120 = vector.shape_cast %119 : vector<1x1x8x8x16xbf16> to vector<8x8x16xbf16>
    %121 = vector.shape_cast %120 : vector<8x8x16xbf16> to vector<64x16xbf16>
    %c0_162 = arith.constant 0 : index
    %c0_163 = arith.constant 0 : index
    %122 = vector.load %arg5[%c0_162, %c0_163] : memref<16x32xbf16, #tpu.memory_space<vmem>>, vector<16x32xbf16>
    %cst_164 = arith.constant dense<0.000000e+00> : vector<64x32xf32>
    %123 = tpu.matmul %121, %122, %cst_164 {dimension_numbers = #tpu.dot_dimension_numbers<[1], [0], [0], [1], [0, 0, 1, 1], [], []>} : vector<64x16xbf16>, vector<16x32xbf16>, vector<64x32xf32> -> vector<64x32xf32>
    %124 = vector.extract_strided_slice %0 {offsets = [4, 0], sizes = [1, 32], strides = [1, 1]} : vector<6x32xf32> to vector<1x32xf32>
    %125 = vector.broadcast %124 : vector<1x32xf32> to vector<64x32xf32>
    %126 = arith.mulf %123, %125 : vector<64x32xf32>
    %127 = vector.extract_strided_slice %0 {offsets = [5, 0], sizes = [1, 32], strides = [1, 1]} : vector<6x32xf32> to vector<1x32xf32>
    %128 = vector.broadcast %127 : vector<1x32xf32> to vector<64x32xf32>
    %129 = arith.addf %126, %128 : vector<64x32xf32>
    %130 = arith.addf %118, %129 : vector<64x32xf32>
    %cst_165 = arith.constant 0.000000e+00 : f32
    %131 = vector.broadcast %cst_165 : f32 to vector<64x32xf32>
    %132 = arith.maximumf %130, %131 : vector<64x32xf32>
    %c0_166 = arith.constant 0 : index
    %c0_167 = arith.constant 0 : index
    %c0_168 = arith.constant 0 : index
    %133 = vector.load %arg6[%c0_166, %c0_167, %c0_168] : memref<1x64x32xf32, #tpu.memory_space<vmem>>, vector<1x64x32xf32>
    %134 = vector.shape_cast %133 : vector<1x64x32xf32> to vector<64x32xf32>
    %135 = vector.shape_cast %132 : vector<64x32xf32> to vector<1x64x32xf32>
    tpu.vector_store %arg6[%c0_166, %c0_167, %c0_168], %135 {strides = array<i32>} : memref<1x64x32xf32, #tpu.memory_space<vmem>>, vector<1x64x32xf32>,
    return
  }
  func.func @transform_0(%arg0: i32) -> (i32, i32, i32, i32, i32) {
    %c0_i32 = arith.constant 0 : i32
    %c0_i32_0 = arith.constant 0 : i32
    %c0_i32_1 = arith.constant 0 : i32
    %c0_i32_2 = arith.constant 0 : i32
    %c0_i32_3 = arith.constant 0 : i32
    return %arg0, %c0_i32, %c0_i32_0, %c0_i32_1, %c0_i32_2 : i32, i32, i32, i32, i32
  }
  func.func @transform_1(%arg0: i32) -> (i32, i32, i32) {
    %c0_i32 = arith.constant 0 : i32
    %c0_i32_0 = arith.constant 0 : i32
    %c0_i32_1 = arith.constant 0 : i32
    %c0_i32_2 = arith.constant 0 : i32
    return %c0_i32, %c0_i32_0, %c0_i32_1 : i32, i32, i32
  }
  func.func @transform_2(%arg0: i32) -> (i32, i32, i32) {
    %c0_i32 = arith.constant 0 : i32
    %c0_i32_0 = arith.constant 0 : i32
    %c0_i32_1 = arith.constant 0 : i32
    %c0_i32_2 = arith.constant 0 : i32
    return %c0_i32, %c0_i32_0, %c0_i32_1 : i32, i32, i32
  }
  func.func @transform_3(%arg0: i32) -> (i32, i32) {
    %c0_i32 = arith.constant 0 : i32
    %c0_i32_0 = arith.constant 0 : i32
    %c0_i32_1 = arith.constant 0 : i32
    return %c0_i32, %c0_i32_0 : i32, i32
  }
  func.func @transform_4(%arg0: i32) -> (i32, i32) {
    %c0_i32 = arith.constant 0 : i32
    %c0_i32_0 = arith.constant 0 : i32
    %c0_i32_1 = arith.constant 0 : i32
    return %c0_i32, %c0_i32_0 : i32, i32
  }
  func.func @transform_5(%arg0: i32) -> (i32, i32, i32) {
    %c0_i32 = arith.constant 0 : i32
    %c0_i32_0 = arith.constant 0 : i32
    %c0_i32_1 = arith.constant 0 : i32
    return %arg0, %c0_i32, %c0_i32_0 : i32, i32, i32
  }
}

</mosaic_0001>

<llo_original>
// kernel: basic_block_forward.1
$region0: #{basic_block_forward.1}
  #allocation0 [shape = 'u32[]', space=smem, size = 0x4, offset = 0x4, fixed_abs, tag = 'smem constant byte address 0x4 - core index']
  #allocation1 [shape = 'u32[144,128]{1,0:T(1,128)}', space=vmem, size = 0x12000, scoped, tag = 'internal scratch']
  #allocation2 [shape = 'bf16[10,10,32]{2,1,0:T(8,128)(2,1)}', space=vmem, size = 0xa000, scoped, tag = 'scratch operand']
  #allocation3 [shape = 'bf16[64,96]{1,0:T(8,128)(2,1)}', space=vmem, size = 0x4000, scoped, tag = 'scratch operand']
  %s0 = inlined_call_operand.vmem [shape: bf16[2,4,9,9,16], index: 0, kind: input, shape index: {}]
  %s1 = inlined_call_operand.vmem [shape: bf16[3,48,32], index: 1, kind: input, shape index: {}]
  %s2 = inlined_call_operand.vmem [shape: bf16[3,96,32], index: 2, kind: input, shape index: {}]
  %s3 = inlined_call_operand.vmem [shape: f32[6,32], index: 3, kind: input, shape index: {}]
  %s4 = inlined_call_operand.vmem [shape: bf16[16,32], index: 4, kind: input, shape index: {}]
  %s5 = inlined_call_operand.hbm [shape: f32[2,64,32], index: 5, kind: output, shape index: {}]
  %s6 = sld [smem:[#allocation0]]
  $region53: #{basic_block_forward.1} parent=0
    _
  %s8 = ssub.s32 1, %s6
  %s9 = scalar_select 0, %s8, %s6
  $region1: #{basic_block_forward.1} parent=0
    #allocation4 [shape = 'u8[65536]{0}', space=vmem, size = 0x10000, scoped, tag = 'output window, operand 0']
    #allocation5 [shape = 's32[2]{0}', space=sflag, size = 0x8, scoped, tag = 'scoped memory for basic_block_forward.1']
    %10 = vsyncpa [#allocation5], 0
    %s11 = scalar_lea.sflag [#allocation5], 1
    %12 = vsyncpa %s11, 0
    loop: start=0, step=1, limit=4
    $region2: #{basic_block_forward.1} parent=1 // loop_pre_header
      _
    $region3: #{basic_block_forward.1} parent=1 // loop_header
      %s14 = sphi 0, %s18
      %p15 = scmp.ge.s32.totalorder %s14, 4
      %s24 = sphi 0, %s26
      %s27 = sphi 0, %s24
      %s28 = sphi 0, %s27
      %s44 = sphi 0, %s28
      %s48 = sphi 0, %s48
      %s50 = sphi 0, %s48
      %s51 = sphi 0, %s50
      %s65 = sphi 0, %s51
      %s69 = sphi 0, %s69
      %s71 = sphi 0, %s69
      %s72 = sphi 0, %s71
      %s86 = sphi 0, %s72
      %s90 = sphi 0, %s90
      %s92 = sphi 0, %s90
      %s93 = sphi 0, %s92
      %s107 = sphi 0, %s93
      %s111 = sphi 0, %s111
      %s113 = sphi 0, %s111
      %s114 = sphi 0, %s113
      %s128 = sphi 0, %s114
      %s134 = sphi 0, %s136
      %s137 = sphi 0, %s134
      %s138 = sphi 0, %s137
      %s154 = sphi 0, %s138
    $region4: #{basic_block_forward.1} parent=1 // loop_header_branch
      %17 = sbr.rel (%p15) target = $region8
    $region5: #{basic_block_forward.1} parent=1 // loop_body
      %s19 = ssub.s32 %s14, 1
      %s20 = ssub.s32 %s14, 2
      %s21 = sadd.s32 %s14, 1
      %s22 = ssub.s32 %s14, %s21
      %p23 = scmp.eq.s32.totalorder %s22, 0
      %s25 = sadd.s32 %s24, 1
      %s26 = scalar_select %p23, %s24, %s25
      %p29 = pneg %p23
      %p30 = scmp.eq.s32.totalorder %s14, 1
      %p31 = por %p29, %p30
      %p32 = scmp.ne.s32.totalorder %s24, %s27
      %p33 = scmp.eq.s32.totalorder %s14, 0
      %p34 = por %p32, %p33
      %p35 = scmp.ne.s32.totalorder %s24, %s27
      %p36 = scmp.eq.s32.totalorder %s19, 1
      %p37 = por %p35, %p36
      %p38 = scmp.ne.s32.totalorder %s27, %s28
      %p39 = scmp.eq.s32.totalorder %s19, 0
      %p40 = por %p38, %p39
      %p41 = scmp.ne.s32.totalorder %s27, %s28
      %p42 = scmp.eq.s32.totalorder %s20, 1
      %p43 = por %p41, %p42
      %p45 = scmp.ne.s32.totalorder %s28, %s44
      %p46 = scmp.eq.s32.totalorder %s20, 0
      %p47 = por %p45, %p46
      %s49 = sadd.s32 %s48, 1
      %p52 = scmp.eq.s32.totalorder %s14, 1
      %p53 = scmp.ne.s32.totalorder %s48, %s50
      %p54 = scmp.eq.s32.totalorder %s14, 0
      %p55 = por %p53, %p54
      %p56 = scmp.ne.s32.totalorder %s48, %s50
      %p57 = scmp.eq.s32.totalorder %s19, 1
      %p58 = por %p56, %p57
      %p59 = scmp.ne.s32.totalorder %s50, %s51
      %p60 = scmp.eq.s32.totalorder %s19, 0
      %p61 = por %p59, %p60
      %p62 = scmp.ne.s32.totalorder %s50, %s51
      %p63 = scmp.eq.s32.totalorder %s20, 1
      %p64 = por %p62, %p63
      %p66 = scmp.ne.s32.totalorder %s51, %s65
      %p67 = scmp.eq.s32.totalorder %s20, 0
      %p68 = por %p66, %p67
      %s70 = sadd.s32 %s69, 1
      %p73 = scmp.eq.s32.totalorder %s14, 1
      %p74 = scmp.ne.s32.totalorder %s69, %s71
      %p75 = scmp.eq.s32.totalorder %s14, 0
      %p76 = por %p74, %p75
      %p77 = scmp.ne.s32.totalorder %s69, %s71
      %p78 = scmp.eq.s32.totalorder %s19, 1
      %p79 = por %p77, %p78
      %p80 = scmp.ne.s32.totalorder %s71, %s72
      %p81 = scmp.eq.s32.totalorder %s19, 0
      %p82 = por %p80, %p81
      %p83 = scmp.ne.s32.totalorder %s71, %s72
      %p84 = scmp.eq.s32.totalorder %s20, 1
      %p85 = por %p83, %p84
      %p87 = scmp.ne.s32.totalorder %s72, %s86
      %p88 = scmp.eq.s32.totalorder %s20, 0
      %p89 = por %p87, %p88
      %s91 = sadd.s32 %s90, 1
      %p94 = scmp.eq.s32.totalorder %s14, 1
      %p95 = scmp.ne.s32.totalorder %s90, %s92
      %p96 = scmp.eq.s32.totalorder %s14, 0
      %p97 = por %p95, %p96
      %p98 = scmp.ne.s32.totalorder %s90, %s92
      %p99 = scmp.eq.s32.totalorder %s19, 1
      %p100 = por %p98, %p99
      %p101 = scmp.ne.s32.totalorder %s92, %s93
      %p102 = scmp.eq.s32.totalorder %s19, 0
      %p103 = por %p101, %p102
      %p104 = scmp.ne.s32.totalorder %s92, %s93
      %p105 = scmp.eq.s32.totalorder %s20, 1
      %p106 = por %p104, %p105
      %p108 = scmp.ne.s32.totalorder %s93, %s107
      %p109 = scmp.eq.s32.totalorder %s20, 0
      %p110 = por %p108, %p109
      %s112 = sadd.s32 %s111, 1
      %p115 = scmp.eq.s32.totalorder %s14, 1
      %p116 = scmp.ne.s32.totalorder %s111, %s113
      %p117 = scmp.eq.s32.totalorder %s14, 0
      %p118 = por %p116, %p117
      %p119 = scmp.ne.s32.totalorder %s111, %s113
      %p120 = scmp.eq.s32.totalorder %s19, 1
      %p121 = por %p119, %p120
      %p122 = scmp.ne.s32.totalorder %s113, %s114
      %p123 = scmp.eq.s32.totalorder %s19, 0
      %p124 = por %p122, %p123
      %p125 = scmp.ne.s32.totalorder %s113, %s114
      %p126 = scmp.eq.s32.totalorder %s20, 1
      %p127 = por %p125, %p126
      %p129 = scmp.ne.s32.totalorder %s114, %s128
      %p130 = scmp.eq.s32.totalorder %s20, 0
      %p131 = por %p129, %p130
      %s132 = ssub.s32 %s14, %s21
      %p133 = scmp.eq.s32.totalorder %s132, 0
      %s135 = sadd.s32 %s134, 1
      %s136 = scalar_select %p133, %s134, %s135
      %p139 = pneg %p133
      %p140 = scmp.eq.s32.totalorder %s14, 1
      %p141 = por %p139, %p140
      %p142 = scmp.ne.s32.totalorder %s134, %s137
      %p143 = scmp.eq.s32.totalorder %s14, 0
      %p144 = por %p142, %p143
      %p145 = scmp.ne.s32.totalorder %s134, %s137
      %p146 = scmp.eq.s32.totalorder %s19, 1
      %p147 = por %p145, %p146
      %p148 = scmp.ne.s32.totalorder %s137, %s138
      %p149 = scmp.eq.s32.totalorder %s19, 0
      %p150 = por %p148, %p149
      %p151 = scmp.ne.s32.totalorder %s137, %s138
      %p152 = scmp.eq.s32.totalorder %s20, 1
      %p153 = por %p151, %p152
      %p155 = scmp.ne.s32.totalorder %s138, %s154
      %p156 = scmp.eq.s32.totalorder %s20, 0
      %p157 = por %p155, %p156
      %p158 = scmp.le.s32.totalorder 1, %s14
      %p159 = scmp.lt.s32.totalorder %s14, 3
      %p160 = pnand %p158, %p159
      %p161 = pneg %p160
      // Predicated region
      $region9: #{basic_block_forward.1} parent=5 // pred_check
        _
      $region10: #{basic_block_forward.1} parent=5 // pred_check_branch
        %163 = sbr.rel (%p160) target = $region12
      $region11: #{basic_block_forward.1} parent=5 // pred_region
        %s164 = ssub.s32 %s14, 1
        // Predicated region
        $region13: #{basic_block_forward.1} parent=11 // pred_check
          %p165 = pneg %p61
        $region14: #{basic_block_forward.1} parent=11 // pred_check_branch
          %167 = sbr.rel (%p165) target = $region16
        $region15: #{basic_block_forward.1} parent=11 // pred_region
          _
        $region16: #{basic_block_forward.1} parent=11 // pred_fallthru
          _
        // Predicated region
        $region17: #{basic_block_forward.1} parent=11 // pred_check
          %p168 = pneg %p82
        $region18: #{basic_block_forward.1} parent=11 // pred_check_branch
          %170 = sbr.rel (%p168) target = $region20
        $region19: #{basic_block_forward.1} parent=11 // pred_region
          _
        $region20: #{basic_block_forward.1} parent=11 // pred_fallthru
          _
        // Predicated region
        $region21: #{basic_block_forward.1} parent=11 // pred_check
          %p171 = pneg %p103
        $region22: #{basic_block_forward.1} parent=11 // pred_check_branch
          %173 = sbr.rel (%p171) target = $region24
        $region23: #{basic_block_forward.1} parent=11 // pred_region
          _
        $region24: #{basic_block_forward.1} parent=11 // pred_fallthru
          _
        // Predicated region
        $region25: #{basic_block_forward.1} parent=11 // pred_check
          %p174 = pneg %p124
        $region26: #{basic_block_forward.1} parent=11 // pred_check_branch
          %176 = sbr.rel (%p174) target = $region28
        $region27: #{basic_block_forward.1} parent=11 // pred_region
          _
        $region28: #{basic_block_forward.1} parent=11 // pred_fallthru
          _
      $region12: #{basic_block_forward.1} parent=5 // pred_fallthru
        _
      %p177 = scmp.lt.s32.totalorder %s14, 2
      // Predicated region
      $region29: #{basic_block_forward.1} parent=5 // pred_check
        %p178 = pneg %p177
      $region30: #{basic_block_forward.1} parent=5 // pred_check_branch
        %180 = sbr.rel (%p178) target = $region32
      $region31: #{basic_block_forward.1} parent=5 // pred_region
        // Predicated region
        $region33: #{basic_block_forward.1} parent=31 // pred_check
          %p181 = pneg %p34
        $region34: #{basic_block_forward.1} parent=31 // pred_check_branch
          %183 = sbr.rel (%p181) target = $region36
        $region35: #{basic_block_forward.1} parent=31 // pred_region
          %p184 = scmp.lt.s32.totalorder %s14, 1
          %s185 = scalar_select %p184, %s14, 1
          %s186 = smul.addr %s185, 72
          %s187 = smul.addr %s186, 4
          %s188 = scalar_lea.vmem %s0, %s187
        $region36: #{basic_block_forward.1} parent=31 // pred_fallthru
          _
      $region32: #{basic_block_forward.1} parent=5 // pred_fallthru
        _
      %p189 = scmp.le.s32.totalorder 1, %s14
      %p190 = scmp.lt.s32.totalorder %s14, 3
      %p191 = pnand %p189, %p190
      %p192 = pneg %p191
      // Predicated region
      $region37: #{basic_block_forward.1} parent=5 // pred_check
        _
      $region38: #{basic_block_forward.1} parent=5 // pred_check_branch
        %194 = sbr.rel (%p191) target = $region40
      $region39: #{basic_block_forward.1} parent=5 // pred_region
        %s195 = ssub.s32 %s14, 1
        %p196 = scmp.lt.s32.totalorder %s19, 1
        %s197 = scalar_select %p196, %s19, 1
        %s198 = smul.addr %s197, 72
        %s199 = smul.addr %s198, 4
        %s200 = scalar_lea.vmem %s0, %s199
        %p201 = pneg %p40
        %p202 = pneg %p37
        %p203 = pneg %p61
        %p204 = pneg %p58
        %p205 = pneg %p82
        %p206 = pneg %p79
        %p207 = pneg %p103
        %p208 = pneg %p100
        %p209 = pneg %p124
        %p210 = pneg %p121
        %p211 = pneg %p150
        %p212 = pneg %p147
        %s213 = sand.u32 %s137, 1
        %s214 = scalar_lea.sflag [#allocation5], %s213
        %s215 = sand.u32 %s137, 1
        %s216 = smul.addr %s215, 64
        %s217 = scalar_lea.vmem [#allocation4], %s216
        %p218 = scmp.lt.s32.totalorder %s19, 1
        %s219 = scalar_select %p218, %s19, 1
        %s220 = smul.addr %s219, 72
        %s221 = smul.addr %s220, 4
        %s222 = scalar_lea.vmem %s0, %s221
        %v224 = vld [vmem:[%s3] sm:$0x3f]
        %vm225 = vcmask 257024
        %226 = vst.msk [vmem:[#allocation2] sm:$0xf] %vm225, 0
        %vm227 = vcmask 253952
        %228 = vst.msk [vmem:[#allocation2 + $0x4] sm:$0x1] %vm227, 0
        %s229 = scalar_lea.vmem [#allocation2], 72
        %230 = vst.msk [vmem:[%s229] sm:$0xf] %vm225, 0
        %231 = vst.msk [vmem:[%s229 + $0x4] sm:$0x1] %vm227, 0
        %vm232 = vcmask 253952
        %vm233 = vsmask.f32 256
        %vm234 = vmand %vm232, %vm233
        %v235 = vld [vmem:[#allocation2] sm:$0x1]
        %v236 = vsel %vm234, 0, %v235
        %237 = vst [vmem:[#allocation2] sm:$0x1] %v236
        %v238 = vld [vmem:[#allocation2 + $0x8] sm:$0x1]
        %v239 = vsel %vm234, 0, %v238
        %240 = vst [vmem:[#allocation2 + $0x8] sm:$0x1] %v239
        %v241 = vld [vmem:[#allocation2 + $0x10] sm:$0x1]
        %v242 = vsel %vm234, 0, %v241
        %243 = vst [vmem:[#allocation2 + $0x10] sm:$0x1] %v242
        %v244 = vld [vmem:[#allocation2 + $0x18] sm:$0x1]
        %v245 = vsel %vm234, 0, %v244
        %246 = vst [vmem:[#allocation2 + $0x18] sm:$0x1] %v245
        %v247 = vld [vmem:[#allocation2 + $0x20] sm:$0x1]
        %v248 = vsel %vm234, 0, %v247
        %249 = vst [vmem:[#allocation2 + $0x20] sm:$0x1] %v248
        %v250 = vld [vmem:[#allocation2 + $0x28] sm:$0x1]
        %v251 = vsel %vm234, 0, %v250
        %252 = vst [vmem:[#allocation2 + $0x28] sm:$0x1] %v251
        %v253 = vld [vmem:[#allocation2 + $0x30] sm:$0x1]
        %v254 = vsel %vm234, 0, %v253
        %255 = vst [vmem:[#allocation2 + $0x30] sm:$0x1] %v254
        %v256 = vld [vmem:[#allocation2 + $0x38] sm:$0x1]
        %v257 = vsel %vm234, 0, %v256
        %258 = vst [vmem:[#allocation2 + $0x38] sm:$0x1] %v257
        %v259 = vld [vmem:[#allocation2 + $0x40] sm:$0x1]
        %v260 = vsel %vm234, 0, %v259
        %261 = vst [vmem:[#allocation2 + $0x40] sm:$0x1] %v260
        %v262 = vld [vmem:[#allocation2 + $0x48] sm:$0x1]
        %v263 = vsel %vm234, 0, %v262
        %264 = vst [vmem:[#allocation2 + $0x48] sm:$0x1] %v263
        %vm265 = vsmask.f32 7938
        %vm266 = vmand %vm232, %vm265
        %v267 = vld [vmem:[#allocation2 + $0x4] sm:$0x1]
        %v268 = vsel %vm266, 0, %v267
        %269 = vst [vmem:[#allocation2 + $0x4] sm:$0x1] %v268
        %v270 = vld [vmem:[#allocation2 + $0xc] sm:$0x1]
        %v271 = vsel %vm266, 0, %v270
        %272 = vst [vmem:[#allocation2 + $0xc] sm:$0x1] %v271
        %v273 = vld [vmem:[#allocation2 + $0x14] sm:$0x1]
        %v274 = vsel %vm266, 0, %v273
        %275 = vst [vmem:[#allocation2 + $0x14] sm:$0x1] %v274
        %v276 = vld [vmem:[#allocation2 + $0x1c] sm:$0x1]
        %v277 = vsel %vm266, 0, %v276
        %278 = vst [vmem:[#allocation2 + $0x1c] sm:$0x1] %v277
        %v279 = vld [vmem:[#allocation2 + $0x24] sm:$0x1]
        %v280 = vsel %vm266, 0, %v279
        %281 = vst [vmem:[#allocation2 + $0x24] sm:$0x1] %v280
        %v282 = vld [vmem:[#allocation2 + $0x2c] sm:$0x1]
        %v283 = vsel %vm266, 0, %v282
        %284 = vst [vmem:[#allocation2 + $0x2c] sm:$0x1] %v283
        %v285 = vld [vmem:[#allocation2 + $0x34] sm:$0x1]
        %v286 = vsel %vm266, 0, %v285
        %287 = vst [vmem:[#allocation2 + $0x34] sm:$0x1] %v286
        %v288 = vld [vmem:[#allocation2 + $0x3c] sm:$0x1]
        %v289 = vsel %vm266, 0, %v288
        %290 = vst [vmem:[#allocation2 + $0x3c] sm:$0x1] %v289
        %v291 = vld [vmem:[#allocation2 + $0x44] sm:$0x1]
        %v292 = vsel %vm266, 0, %v291
        %293 = vst [vmem:[#allocation2 + $0x44] sm:$0x1] %v292
        %v294 = vld [vmem:[#allocation2 + $0x4c] sm:$0x1]
        %v295 = vsel %vm266, 0, %v294
        %296 = vst [vmem:[#allocation2 + $0x4c] sm:$0x1] %v295
        %v297 = vld [vmem:[%s222] sm:$0xf]
        %v298 = vld [vmem:[%s222 + $0x8] sm:$0xf]
        %v299 = vld [vmem:[%s222 + $0x10] sm:$0xf]
        %v300 = vld [vmem:[%s222 + $0x18] sm:$0xf]
        %v301 = vld [vmem:[%s222 + $0x20] sm:$0xf]
        %v302 = vld [vmem:[%s222 + $0x28] sm:$0xf]
        %v303 = vld [vmem:[%s222 + $0x30] sm:$0xf]
        %v304 = vld [vmem:[%s222 + $0x38] sm:$0xf]
        %vm305 = vcmask 125952
        %306 = vst.msk [vmem:[#allocation3] sm:$0xf] %vm305, %v297
        %307 = vst.msk [vmem:[#allocation3 + $0x4] sm:$0xf] %vm305, %v298
        %308 = vst.msk [vmem:[#allocation3 + $0x8] sm:$0xf] %vm305, %v299
        %309 = vst.msk [vmem:[#allocation3 + $0xc] sm:$0xf] %vm305, %v300
        %310 = vst.msk [vmem:[#allocation3 + $0x10] sm:$0xf] %vm305, %v301
        %311 = vst.msk [vmem:[#allocation3 + $0x14] sm:$0xf] %vm305, %v302
        %312 = vst.msk [vmem:[#allocation3 + $0x18] sm:$0xf] %vm305, %v303
        %313 = vst.msk [vmem:[#allocation3 + $0x1c] sm:$0xf] %vm305, %v304
        %s314 = scalar_lea.vmem %s222, 72
        %v315 = vld [vmem:[%s314] sm:$0xf]
        %v316 = vld [vmem:[%s314 + $0x8] sm:$0xf]
        %v317 = vld [vmem:[%s314 + $0x10] sm:$0xf]
        %v318 = vld [vmem:[%s314 + $0x18] sm:$0xf]
        %v319 = vld [vmem:[%s314 + $0x20] sm:$0xf]
        %v320 = vld [vmem:[%s314 + $0x28] sm:$0xf]
        %v321 = vld [vmem:[%s314 + $0x30] sm:$0xf]
        %v322 = vld [vmem:[%s314 + $0x38] sm:$0xf]
        %331 = vrot.lane.b32.xlu0 %v315, 16
        %v332 = vpop.permute.xlu0 %331
        %333 = vrot.lane.b32.xlu0 %v316, 16
        %v334 = vpop.permute.xlu0 %333
        %335 = vrot.lane.b32.xlu0 %v317, 16
        %v336 = vpop.permute.xlu0 %335
        %337 = vrot.lane.b32.xlu0 %v318, 16
        %v338 = vpop.permute.xlu0 %337
        %339 = vrot.lane.b32.xlu0 %v319, 16
        %v340 = vpop.permute.xlu0 %339
        %341 = vrot.lane.b32.xlu0 %v320, 16
        %v342 = vpop.permute.xlu0 %341
        %343 = vrot.lane.b32.xlu0 %v321, 16
        %v344 = vpop.permute.xlu0 %343
        %345 = vrot.lane.b32.xlu0 %v322, 16
        %v346 = vpop.permute.xlu0 %345
        %vm355 = vcmask 257152
        %356 = vst.msk [vmem:[#allocation3] sm:$0xf] %vm355, %v332
        %357 = vst.msk [vmem:[#allocation3 + $0x4] sm:$0xf] %vm355, %v334
        %358 = vst.msk [vmem:[#allocation3 + $0x8] sm:$0xf] %vm355, %v336
        %359 = vst.msk [vmem:[#allocation3 + $0xc] sm:$0xf] %vm355, %v338
        %360 = vst.msk [vmem:[#allocation3 + $0x10] sm:$0xf] %vm355, %v340
        %361 = vst.msk [vmem:[#allocation3 + $0x14] sm:$0xf] %vm355, %v342
        %362 = vst.msk [vmem:[#allocation3 + $0x18] sm:$0xf] %vm355, %v344
        %363 = vst.msk [vmem:[#allocation3 + $0x1c] sm:$0xf] %vm355, %v346
        %v364 = vld [vmem:[%s222] sm:$0xf]
        %v365 = vld [vmem:[%s222 + $0x4] sm:$0x1]
        %v366 = vld [vmem:[%s222 + $0x8] sm:$0xf]
        %v367 = vld [vmem:[%s222 + $0xc] sm:$0x1]
        %v368 = vld [vmem:[%s222 + $0x10] sm:$0xf]
        %v369 = vld [vmem:[%s222 + $0x14] sm:$0x1]
        %v370 = vld [vmem:[%s222 + $0x18] sm:$0xf]
        %v371 = vld [vmem:[%s222 + $0x1c] sm:$0x1]
        %v372 = vld [vmem:[%s222 + $0x20] sm:$0xf]
        %v373 = vld [vmem:[%s222 + $0x24] sm:$0x1]
        %v374 = vld [vmem:[%s222 + $0x28] sm:$0xf]
        %v375 = vld [vmem:[%s222 + $0x2c] sm:$0x1]
        %v376 = vld [vmem:[%s222 + $0x30] sm:$0xf]
        %v377 = vld [vmem:[%s222 + $0x34] sm:$0x1]
        %v378 = vld [vmem:[%s222 + $0x38] sm:$0xf]
        %v379 = vld [vmem:[%s222 + $0x3c] sm:$0x1]
        %vm380 = vsmask.f32 3328
        %vm381 = vsmask.f32 7440
        %vm382 = vmor %vm380, %vm381
        %v384 = vshrl.u32 %v364, 16
        %v386 = vrot.slane %v384, 4
        %v387 = vshll.u32 %v364, 16
        %v389 = vrot.slane %v387, 5
        %v390 = vor.u32 %v386, %v389
        %v391 = vrot.slane %v390, 4
        %v393 = vshll.u32 %v365, 16
        %v395 = vrot.slane %v393, 5
        %v396 = vsel %vm382, %v391, %v395
        %v398 = vshrl.u32 %v366, 16
        %v400 = vrot.slane %v398, 4
        %v401 = vshll.u32 %v366, 16
        %v403 = vrot.slane %v401, 5
        %v404 = vor.u32 %v400, %v403
        %v405 = vrot.slane %v404, 4
        %v407 = vshll.u32 %v367, 16
        %v409 = vrot.slane %v407, 5
        %v410 = vsel %vm382, %v405, %v409
        %v412 = vshrl.u32 %v368, 16
        %v414 = vrot.slane %v412, 4
        %v415 = vshll.u32 %v368, 16
        %v417 = vrot.slane %v415, 5
        %v418 = vor.u32 %v414, %v417
        %v419 = vrot.slane %v418, 4
        %v421 = vshll.u32 %v369, 16
        %v423 = vrot.slane %v421, 5
        %v424 = vsel %vm382, %v419, %v423
        %v426 = vshrl.u32 %v370, 16
        %v428 = vrot.slane %v426, 4
        %v429 = vshll.u32 %v370, 16
        %v431 = vrot.slane %v429, 5
        %v432 = vor.u32 %v428, %v431
        %v433 = vrot.slane %v432, 4
        %v435 = vshll.u32 %v371, 16
        %v437 = vrot.slane %v435, 5
        %v438 = vsel %vm382, %v433, %v437
        %v440 = vshrl.u32 %v372, 16
        %v442 = vrot.slane %v440, 4
        %v443 = vshll.u32 %v372, 16
        %v445 = vrot.slane %v443, 5
        %v446 = vor.u32 %v442, %v445
        %v447 = vrot.slane %v446, 4
        %v449 = vshll.u32 %v373, 16
        %v451 = vrot.slane %v449, 5
        %v452 = vsel %vm382, %v447, %v451
        %v454 = vshrl.u32 %v374, 16
        %v456 = vrot.slane %v454, 4
        %v457 = vshll.u32 %v374, 16
        %v459 = vrot.slane %v457, 5
        %v460 = vor.u32 %v456, %v459
        %v461 = vrot.slane %v460, 4
        %v463 = vshll.u32 %v375, 16
        %v465 = vrot.slane %v463, 5
        %v466 = vsel %vm382, %v461, %v465
        %v468 = vshrl.u32 %v376, 16
        %v470 = vrot.slane %v468, 4
        %v471 = vshll.u32 %v376, 16
        %v473 = vrot.slane %v471, 5
        %v474 = vor.u32 %v470, %v473
        %v475 = vrot.slane %v474, 4
        %v477 = vshll.u32 %v377, 16
        %v479 = vrot.slane %v477, 5
        %v480 = vsel %vm382, %v475, %v479
        %v482 = vshrl.u32 %v378, 16
        %v484 = vrot.slane %v482, 4
        %v485 = vshll.u32 %v378, 16
        %v487 = vrot.slane %v485, 5
        %v488 = vor.u32 %v484, %v487
        %v489 = vrot.slane %v488, 4
        %v491 = vshll.u32 %v379, 16
        %v493 = vrot.slane %v491, 5
        %v494 = vsel %vm382, %v489, %v493
        %495 = vrot.lane.b32.xlu0 %v396, 32
        %v496 = vpop.permute.xlu0 %495
        %497 = vrot.lane.b32.xlu0 %v410, 32
        %v498 = vpop.permute.xlu0 %497
        %499 = vrot.lane.b32.xlu0 %v424, 32
        %v500 = vpop.permute.xlu0 %499
        %501 = vrot.lane.b32.xlu0 %v438, 32
        %v502 = vpop.permute.xlu0 %501
        %503 = vrot.lane.b32.xlu0 %v452, 32
        %v504 = vpop.permute.xlu0 %503
        %505 = vrot.lane.b32.xlu0 %v466, 32
        %v506 = vpop.permute.xlu0 %505
        %507 = vrot.lane.b32.xlu0 %v480, 32
        %v508 = vpop.permute.xlu0 %507
        %509 = vrot.lane.b32.xlu0 %v494, 32
        %v510 = vpop.permute.xlu0 %509
        %vm519 = vcmask 388352
        %520 = vst.msk [vmem:[#allocation3] sm:$0xf] %vm519, %v496
        %521 = vst.msk [vmem:[#allocation3 + $0x4] sm:$0xf] %vm519, %v498
        %522 = vst.msk [vmem:[#allocation3 + $0x8] sm:$0xf] %vm519, %v500
        %523 = vst.msk [vmem:[#allocation3 + $0xc] sm:$0xf] %vm519, %v502
        %524 = vst.msk [vmem:[#allocation3 + $0x10] sm:$0xf] %vm519, %v504
        %525 = vst.msk [vmem:[#allocation3 + $0x14] sm:$0xf] %vm519, %v506
        %526 = vst.msk [vmem:[#allocation3 + $0x18] sm:$0xf] %vm519, %v508
        %527 = vst.msk [vmem:[#allocation3 + $0x1c] sm:$0xf] %vm519, %v510
        %v528 = vld [vmem:[#allocation3] sm:$0xf]
        %v529 = vld [vmem:[#allocation3 + $0x4] sm:$0xf]
        %v530 = vld [vmem:[#allocation3 + $0x8] sm:$0xf]
        %v531 = vld [vmem:[#allocation3 + $0xc] sm:$0xf]
        %v532 = vld [vmem:[#allocation3 + $0x10] sm:$0xf]
        %v533 = vld [vmem:[#allocation3 + $0x14] sm:$0xf]
        %v534 = vld [vmem:[#allocation3 + $0x18] sm:$0xf]
        %v535 = vld [vmem:[#allocation3 + $0x1c] sm:$0xf]
        %v536 = vld [vmem:[%s1] sm:$0xf]
        %v537 = vld [vmem:[%s1 + $0x4] sm:$0xf]
        %v538 = vld [vmem:[%s1 + $0x8] sm:$0xf]
        %v539 = vld [vmem:[%s1 + $0xc] sm:$0xf]
        %v540 = vld [vmem:[%s1 + $0x10] sm:$0xf]
        %v541 = vld [vmem:[%s1 + $0x14] sm:$0xf]
        %s542 = scalar_lea.vmem %s222, 144
        %v543 = vld [vmem:[%s542] sm:$0xf]
        %v544 = vld [vmem:[%s542 + $0x8] sm:$0xf]
        %v545 = vld [vmem:[%s542 + $0x10] sm:$0xf]
        %v546 = vld [vmem:[%s542 + $0x18] sm:$0xf]
        %v547 = vld [vmem:[%s542 + $0x20] sm:$0xf]
        %v548 = vld [vmem:[%s542 + $0x28] sm:$0xf]
        %v549 = vld [vmem:[%s542 + $0x30] sm:$0xf]
        %v550 = vld [vmem:[%s542 + $0x38] sm:$0xf]
        %551 = vst.msk [vmem:[#allocation3] sm:$0xf] %vm305, %v543
        %552 = vst.msk [vmem:[#allocation3 + $0x4] sm:$0xf] %vm305, %v544
        %553 = vst.msk [vmem:[#allocation3 + $0x8] sm:$0xf] %vm305, %v545
        %554 = vst.msk [vmem:[#allocation3 + $0xc] sm:$0xf] %vm305, %v546
        %555 = vst.msk [vmem:[#allocation3 + $0x10] sm:$0xf] %vm305, %v547
        %556 = vst.msk [vmem:[#allocation3 + $0x14] sm:$0xf] %vm305, %v548
        %557 = vst.msk [vmem:[#allocation3 + $0x18] sm:$0xf] %vm305, %v549
        %558 = vst.msk [vmem:[#allocation3 + $0x1c] sm:$0xf] %vm305, %v550
        %s559 = scalar_lea.vmem %s222, 216
        %v560 = vld [vmem:[%s559] sm:$0xf]
        %v561 = vld [vmem:[%s559 + $0x8] sm:$0xf]
        %v562 = vld [vmem:[%s559 + $0x10] sm:$0xf]
        %v563 = vld [vmem:[%s559 + $0x18] sm:$0xf]
        %v564 = vld [vmem:[%s559 + $0x20] sm:$0xf]
        %v565 = vld [vmem:[%s559 + $0x28] sm:$0xf]
        %v566 = vld [vmem:[%s559 + $0x30] sm:$0xf]
        %v567 = vld [vmem:[%s559 + $0x38] sm:$0xf]
        %576 = vrot.lane.b32.xlu0 %v560, 16
        %v577 = vpop.permute.xlu0 %576
        %578 = vrot.lane.b32.xlu0 %v561, 16
        %v579 = vpop.permute.xlu0 %578
        %580 = vrot.lane.b32.xlu0 %v562, 16
        %v581 = vpop.permute.xlu0 %580
        %582 = vrot.lane.b32.xlu0 %v563, 16
        %v583 = vpop.permute.xlu0 %582
        %584 = vrot.lane.b32.xlu0 %v564, 16
        %v585 = vpop.permute.xlu0 %584
        %586 = vrot.lane.b32.xlu0 %v565, 16
        %v587 = vpop.permute.xlu0 %586
        %588 = vrot.lane.b32.xlu0 %v566, 16
        %v589 = vpop.permute.xlu0 %588
        %590 = vrot.lane.b32.xlu0 %v567, 16
        %v591 = vpop.permute.xlu0 %590
        %600 = vst.msk [vmem:[#allocation3] sm:$0xf] %vm355, %v577
        %601 = vst.msk [vmem:[#allocation3 + $0x4] sm:$0xf] %vm355, %v579
        %602 = vst.msk [vmem:[#allocation3 + $0x8] sm:$0xf] %vm355, %v581
        %603 = vst.msk [vmem:[#allocation3 + $0xc] sm:$0xf] %vm355, %v583
        %604 = vst.msk [vmem:[#allocation3 + $0x10] sm:$0xf] %vm355, %v585
        %605 = vst.msk [vmem:[#allocation3 + $0x14] sm:$0xf] %vm355, %v587
        %606 = vst.msk [vmem:[#allocation3 + $0x18] sm:$0xf] %vm355, %v589
        %607 = vst.msk [vmem:[#allocation3 + $0x1c] sm:$0xf] %vm355, %v591
        %v608 = vld [vmem:[%s542] sm:$0xf]
        %v609 = vld [vmem:[%s542 + $0x4] sm:$0x1]
        %v610 = vld [vmem:[%s542 + $0x8] sm:$0xf]
        %v611 = vld [vmem:[%s542 + $0xc] sm:$0x1]
        %v612 = vld [vmem:[%s542 + $0x10] sm:$0xf]
        %v613 = vld [vmem:[%s542 + $0x14] sm:$0x1]
        %v614 = vld [vmem:[%s542 + $0x18] sm:$0xf]
        %v615 = vld [vmem:[%s542 + $0x1c] sm:$0x1]
        %v616 = vld [vmem:[%s542 + $0x20] sm:$0xf]
        %v617 = vld [vmem:[%s542 + $0x24] sm:$0x1]
        %v618 = vld [vmem:[%s542 + $0x28] sm:$0xf]
        %v619 = vld [vmem:[%s542 + $0x2c] sm:$0x1]
        %v620 = vld [vmem:[%s542 + $0x30] sm:$0xf]
        %v621 = vld [vmem:[%s542 + $0x34] sm:$0x1]
        %v622 = vld [vmem:[%s542 + $0x38] sm:$0xf]
        %v623 = vld [vmem:[%s542 + $0x3c] sm:$0x1]
        %v625 = vshrl.u32 %v608, 16
        %v627 = vrot.slane %v625, 4
        %v628 = vshll.u32 %v608, 16
        %v630 = vrot.slane %v628, 5
        %v631 = vor.u32 %v627, %v630
        %v632 = vrot.slane %v631, 4
        %v634 = vshll.u32 %v609, 16
        %v636 = vrot.slane %v634, 5
        %v637 = vsel %vm382, %v632, %v636
        %v639 = vshrl.u32 %v610, 16
        %v641 = vrot.slane %v639, 4
        %v642 = vshll.u32 %v610, 16
        %v644 = vrot.slane %v642, 5
        %v645 = vor.u32 %v641, %v644
        %v646 = vrot.slane %v645, 4
        %v648 = vshll.u32 %v611, 16
        %v650 = vrot.slane %v648, 5
        %v651 = vsel %vm382, %v646, %v650
        %v653 = vshrl.u32 %v612, 16
        %v655 = vrot.slane %v653, 4
        %v656 = vshll.u32 %v612, 16
        %v658 = vrot.slane %v656, 5
        %v659 = vor.u32 %v655, %v658
        %v660 = vrot.slane %v659, 4
        %v662 = vshll.u32 %v613, 16
        %v664 = vrot.slane %v662, 5
        %v665 = vsel %vm382, %v660, %v664
        %v667 = vshrl.u32 %v614, 16
        %v669 = vrot.slane %v667, 4
        %v670 = vshll.u32 %v614, 16
        %v672 = vrot.slane %v670, 5
        %v673 = vor.u32 %v669, %v672
        %v674 = vrot.slane %v673, 4
        %v676 = vshll.u32 %v615, 16
        %v678 = vrot.slane %v676, 5
        %v679 = vsel %vm382, %v674, %v678
        %v681 = vshrl.u32 %v616, 16
        %v683 = vrot.slane %v681, 4
        %v684 = vshll.u32 %v616, 16
        %v686 = vrot.slane %v684, 5
        %v687 = vor.u32 %v683, %v686
        %v688 = vrot.slane %v687, 4
        %v690 = vshll.u32 %v617, 16
        %v692 = vrot.slane %v690, 5
        %v693 = vsel %vm382, %v688, %v692
        %v695 = vshrl.u32 %v618, 16
        %v697 = vrot.slane %v695, 4
        %v698 = vshll.u32 %v618, 16
        %v700 = vrot.slane %v698, 5
        %v701 = vor.u32 %v697, %v700
        %v702 = vrot.slane %v701, 4
        %v704 = vshll.u32 %v619, 16
        %v706 = vrot.slane %v704, 5
        %v707 = vsel %vm382, %v702, %v706
        %v709 = vshrl.u32 %v620, 16
        %v711 = vrot.slane %v709, 4
        %v712 = vshll.u32 %v620, 16
        %v714 = vrot.slane %v712, 5
        %v715 = vor.u32 %v711, %v714
        %v716 = vrot.slane %v715, 4
        %v718 = vshll.u32 %v621, 16
        %v720 = vrot.slane %v718, 5
        %v721 = vsel %vm382, %v716, %v720
        %v723 = vshrl.u32 %v622, 16
        %v725 = vrot.slane %v723, 4
        %v726 = vshll.u32 %v622, 16
        %v728 = vrot.slane %v726, 5
        %v729 = vor.u32 %v725, %v728
        %v730 = vrot.slane %v729, 4
        %v732 = vshll.u32 %v623, 16
        %v734 = vrot.slane %v732, 5
        %v735 = vsel %vm382, %v730, %v734
        %736 = vrot.lane.b32.xlu0 %v637, 32
        %v737 = vpop.permute.xlu0 %736
        %738 = vrot.lane.b32.xlu0 %v651, 32
        %v739 = vpop.permute.xlu0 %738
        %740 = vrot.lane.b32.xlu0 %v665, 32
        %v741 = vpop.permute.xlu0 %740
        %742 = vrot.lane.b32.xlu0 %v679, 32
        %v743 = vpop.permute.xlu0 %742
        %744 = vrot.lane.b32.xlu0 %v693, 32
        %v745 = vpop.permute.xlu0 %744
        %746 = vrot.lane.b32.xlu0 %v707, 32
        %v747 = vpop.permute.xlu0 %746
        %748 = vrot.lane.b32.xlu0 %v721, 32
        %v749 = vpop.permute.xlu0 %748
        %750 = vrot.lane.b32.xlu0 %v735, 32
        %v751 = vpop.permute.xlu0 %750
        %760 = vst.msk [vmem:[#allocation3] sm:$0xf] %vm519, %v737
        %761 = vst.msk [vmem:[#allocation3 + $0x4] sm:$0xf] %vm519, %v739
        %762 = vst.msk [vmem:[#allocation3 + $0x8] sm:$0xf] %vm519, %v741
        %763 = vst.msk [vmem:[#allocation3 + $0xc] sm:$0xf] %vm519, %v743
        %764 = vst.msk [vmem:[#allocation3 + $0x10] sm:$0xf] %vm519, %v745
        %765 = vst.msk [vmem:[#allocation3 + $0x14] sm:$0xf] %vm519, %v747
        %766 = vst.msk [vmem:[#allocation3 + $0x18] sm:$0xf] %vm519, %v749
        %767 = vst.msk [vmem:[#allocation3 + $0x1c] sm:$0xf] %vm519, %v751
        %v768 = vld [vmem:[#allocation3] sm:$0xf]
        %v769 = vld [vmem:[#allocation3 + $0x4] sm:$0xf]
        %v770 = vld [vmem:[#allocation3 + $0x8] sm:$0xf]
        %v771 = vld [vmem:[#allocation3 + $0xc] sm:$0xf]
        %v772 = vld [vmem:[#allocation3 + $0x10] sm:$0xf]
        %v773 = vld [vmem:[#allocation3 + $0x14] sm:$0xf]
        %v774 = vld [vmem:[#allocation3 + $0x18] sm:$0xf]
        %v775 = vld [vmem:[#allocation3 + $0x1c] sm:$0xf]
        %s776 = scalar_lea.vmem %s1, 24
        %v777 = vld [vmem:[%s776] sm:$0xf]
        %v778 = vld [vmem:[%s776 + $0x4] sm:$0xf]
        %v779 = vld [vmem:[%s776 + $0x8] sm:$0xf]
        %v780 = vld [vmem:[%s776 + $0xc] sm:$0xf]
        %v781 = vld [vmem:[%s776 + $0x10] sm:$0xf]
        %v782 = vld [vmem:[%s776 + $0x14] sm:$0xf]
        %v791 = vunpack.c.l.b16 %v768
        %v792 = vunpack.c.l.b16 %v769
        %v793 = vunpack.c.l.b16 %v770
        %v794 = vunpack.c.l.b16 %v771
        %v795 = vunpack.c.l.b16 %v772
        %v796 = vunpack.c.l.b16 %v773
        %v797 = vunpack.c.l.b16 %v774
        %v798 = vunpack.c.l.b16 %v775
        %v799 = vpack.c.b16 %v792, %v791
        %v800 = vpack.c.b16 %v794, %v793
        %v801 = vpack.c.b16 %v796, %v795
        %v802 = vpack.c.b16 %v798, %v797
        %v809 = vunpack.c.l.b16 %v777
        %v810 = vunpack.c.l.b16 %v778
        %v811 = vunpack.c.l.b16 %v779
        %v812 = vunpack.c.l.b16 %v780
        %v813 = vunpack.c.l.b16 %v781
        %v814 = vunpack.c.l.b16 %v782
        %v815 = vpack.c.b16 %v810, %v809
        %v816 = vpack.c.b16 %v812, %v811
        %v817 = vpack.c.b16 %v814, %v813
        %vm821 = vcmask 392192
        %v823 = vsel %vm821, %v799, 0
        %v826 = vsel %vm821, %v800, 0
        %v829 = vsel %vm821, %v801, 0
        %v832 = vsel %vm821, %v802, 0
        %834 = vmatprep.subr.bf16.mxu0 0
        %835 = vmatpush1.bf16.msra.mxu0 0
        %836 = vmatprep.subr.bf16.mxu0 0
        %837 = vmatpush1.bf16.msra.mxu0 0
        %838 = vmatprep.subr.bf16.mxu0 0
        %839 = vmatpush1.bf16.msra.mxu0 0
        %840 = vmatprep.subr.bf16.mxu0 0
        %841 = vmatpush1.bf16.msra.mxu0 0
        %842 = vmatprep.subr.bf16.mxu0 0
        %843 = vmatpush1.bf16.msra.mxu0 0
        %844 = vmatprep.subr.bf16.mxu0 0
        %845 = vmatpush1.bf16.msra.mxu0 %v817
        %846 = vmatprep.subr.bf16.mxu0 0
        %847 = vmatpush1.bf16.msra.mxu0 %v816
        %848 = vmatprep.subr.bf16.mxu0 0
        %849 = vmatpush1.bf16.msra.mxu0 %v815
        %850 = vmatprep.subr.bf16.mxu0 0
        %851 = vmatpush2.bf16.msra.mxu0 0
        %852 = vmatprep.subr.bf16.mxu0 0
        %853 = vmatpush2.bf16.msra.mxu0 0
        %854 = vmatprep.subr.bf16.mxu0 0
        %855 = vmatpush2.bf16.msra.mxu0 0
        %856 = vmatprep.subr.bf16.mxu0 0
        %857 = vmatpush2.bf16.msra.mxu0 0
        %858 = vmatprep.subr.bf16.mxu0 0
        %859 = vmatpush2.bf16.msra.mxu0 0
        %860 = vmatprep.subr.bf16.mxu0 0
        %861 = vmatpush2.bf16.msra.mxu0 0
        %862 = vmatprep.subr.bf16.mxu0 0
        %863 = vmatpush2.bf16.msra.mxu0 0
        %864 = vmatprep.subr.bf16.mxu0 0
        %865 = vmatpush2.bf16.msra.mxu0 0
        %866 = vmatprep.mubr.bf16.mxu0 0
        %867 = vmatmul.mubr.bf16.gmra.mxu0 %v823
        %v868 = vpop.f32.mrf.mxu0
        %v869 = vadd.f32 0.0, %v868
        %v870 = vpop.f32.mrf.mxu0
        %v871 = vpop.f32.mrf.mxu0
        %v872 = vadd.f32 0.0, %v871
        %v873 = vpop.f32.mrf.mxu0
        %874 = vmatprep.mubr.bf16.mxu0 0
        %875 = vmatmul.mubr.bf16.gmra.mxu0 %v826
        %v876 = vpop.f32.mrf.mxu0
        %v877 = vadd.f32 0.0, %v876
        %v878 = vpop.f32.mrf.mxu0
        %v879 = vpop.f32.mrf.mxu0
        %v880 = vadd.f32 0.0, %v879
        %v881 = vpop.f32.mrf.mxu0
        %882 = vmatprep.mubr.bf16.mxu0 0
        %883 = vmatmul.mubr.bf16.gmra.mxu0 %v829
        %v884 = vpop.f32.mrf.mxu0
        %v885 = vadd.f32 0.0, %v884
        %v886 = vpop.f32.mrf.mxu0
        %v887 = vpop.f32.mrf.mxu0
        %v888 = vadd.f32 0.0, %v887
        %v889 = vpop.f32.mrf.mxu0
        %890 = vmatprep.mubr.bf16.mxu0 0
        %891 = vmatmul.mubr.bf16.gmra.mxu0 %v832
        %v892 = vpop.f32.mrf.mxu0
        %v893 = vadd.f32 0.0, %v892
        %v894 = vpop.f32.mrf.mxu0
        %v895 = vpop.f32.mrf.mxu0
        %v896 = vadd.f32 0.0, %v895
        %v897 = vpop.f32.mrf.mxu0
        %898 = vdwg.mxu0
        %v907 = vunpack.c.l.b16 %v528
        %v908 = vunpack.c.l.b16 %v529
        %v909 = vunpack.c.l.b16 %v530
        %v910 = vunpack.c.l.b16 %v531
        %v911 = vunpack.c.l.b16 %v532
        %v912 = vunpack.c.l.b16 %v533
        %v913 = vunpack.c.l.b16 %v534
        %v914 = vunpack.c.l.b16 %v535
        %v915 = vpack.c.b16 %v908, %v907
        %v916 = vpack.c.b16 %v910, %v909
        %v917 = vpack.c.b16 %v912, %v911
        %v918 = vpack.c.b16 %v914, %v913
        %v925 = vunpack.c.l.b16 %v536
        %v926 = vunpack.c.l.b16 %v537
        %v927 = vunpack.c.l.b16 %v538
        %v928 = vunpack.c.l.b16 %v539
        %v929 = vunpack.c.l.b16 %v540
        %v930 = vunpack.c.l.b16 %v541
        %v931 = vpack.c.b16 %v926, %v925
        %v932 = vpack.c.b16 %v928, %v927
        %v933 = vpack.c.b16 %v930, %v929
        %v938 = vsel %vm821, %v915, 0
        %v941 = vsel %vm821, %v916, 0
        %v944 = vsel %vm821, %v917, 0
        %v947 = vsel %vm821, %v918, 0
        %949 = vmatprep.subr.bf16.mxu0 0
        %950 = vmatpush1.bf16.msra.mxu0 0
        %951 = vmatprep.subr.bf16.mxu0 0
        %952 = vmatpush1.bf16.msra.mxu0 0
        %953 = vmatprep.subr.bf16.mxu0 0
        %954 = vmatpush1.bf16.msra.mxu0 0
        %955 = vmatprep.subr.bf16.mxu0 0
        %956 = vmatpush1.bf16.msra.mxu0 0
        %957 = vmatprep.subr.bf16.mxu0 0
        %958 = vmatpush1.bf16.msra.mxu0 0
        %959 = vmatprep.subr.bf16.mxu0 0
        %960 = vmatpush1.bf16.msra.mxu0 %v933
        %961 = vmatprep.subr.bf16.mxu0 0
        %962 = vmatpush1.bf16.msra.mxu0 %v932
        %963 = vmatprep.subr.bf16.mxu0 0
        %964 = vmatpush1.bf16.msra.mxu0 %v931
        %965 = vmatprep.subr.bf16.mxu0 0
        %966 = vmatpush2.bf16.msra.mxu0 0
        %967 = vmatprep.subr.bf16.mxu0 0
        %968 = vmatpush2.bf16.msra.mxu0 0
        %969 = vmatprep.subr.bf16.mxu0 0
        %970 = vmatpush2.bf16.msra.mxu0 0
        %971 = vmatprep.subr.bf16.mxu0 0
        %972 = vmatpush2.bf16.msra.mxu0 0
        %973 = vmatprep.subr.bf16.mxu0 0
        %974 = vmatpush2.bf16.msra.mxu0 0
        %975 = vmatprep.subr.bf16.mxu0 0
        %976 = vmatpush2.bf16.msra.mxu0 0
        %977 = vmatprep.subr.bf16.mxu0 0
        %978 = vmatpush2.bf16.msra.mxu0 0
        %979 = vmatprep.subr.bf16.mxu0 0
        %980 = vmatpush2.bf16.msra.mxu0 0
        %981 = vmatprep.mubr.bf16.mxu0 0
        %982 = vmatmul.mubr.bf16.gmra.mxu0 %v938
        %v983 = vpop.f32.mrf.mxu0
        %v984 = vadd.f32 %v869, %v983
        %v985 = vpop.f32.mrf.mxu0
        %v986 = vpop.f32.mrf.mxu0
        %v987 = vadd.f32 %v872, %v986
        %v988 = vpop.f32.mrf.mxu0
        %989 = vmatprep.mubr.bf16.mxu0 0
        %990 = vmatmul.mubr.bf16.gmra.mxu0 %v941
        %v991 = vpop.f32.mrf.mxu0
        %v992 = vadd.f32 %v877, %v991
        %v993 = vpop.f32.mrf.mxu0
        %v994 = vpop.f32.mrf.mxu0
        %v995 = vadd.f32 %v880, %v994
        %v996 = vpop.f32.mrf.mxu0
        %997 = vmatprep.mubr.bf16.mxu0 0
        %998 = vmatmul.mubr.bf16.gmra.mxu0 %v944
        %v999 = vpop.f32.mrf.mxu0
        %v1000 = vadd.f32 %v885, %v999
        %v1001 = vpop.f32.mrf.mxu0
        %v1002 = vpop.f32.mrf.mxu0
        %v1003 = vadd.f32 %v888, %v1002
        %v1004 = vpop.f32.mrf.mxu0
        %1005 = vmatprep.mubr.bf16.mxu0 0
        %1006 = vmatmul.mubr.bf16.gmra.mxu0 %v947
        %v1007 = vpop.f32.mrf.mxu0
        %v1008 = vadd.f32 %v893, %v1007
        %v1009 = vpop.f32.mrf.mxu0
        %v1010 = vpop.f32.mrf.mxu0
        %v1011 = vadd.f32 %v896, %v1010
        %v1012 = vpop.f32.mrf.mxu0
        %1013 = vdwg.mxu0
        %s1014 = scalar_lea.vmem %s222, 8
        %v1015 = vld [vmem:[%s1014] sm:$0xf]
        %v1016 = vld [vmem:[%s1014 + $0x8] sm:$0xf]
        %v1017 = vld [vmem:[%s1014 + $0x10] sm:$0xf]
        %v1018 = vld [vmem:[%s1014 + $0x18] sm:$0xf]
        %v1019 = vld [vmem:[%s1014 + $0x20] sm:$0xf]
        %v1020 = vld [vmem:[%s1014 + $0x28] sm:$0xf]
        %v1021 = vld [vmem:[%s1014 + $0x30] sm:$0xf]
        %v1022 = vld [vmem:[%s1014 + $0x38] sm:$0xf]
        %1023 = vst.msk [vmem:[#allocation3] sm:$0xf] %vm305, %v1015
        %1024 = vst.msk [vmem:[#allocation3 + $0x4] sm:$0xf] %vm305, %v1016
        %1025 = vst.msk [vmem:[#allocation3 + $0x8] sm:$0xf] %vm305, %v1017
        %1026 = vst.msk [vmem:[#allocation3 + $0xc] sm:$0xf] %vm305, %v1018
        %1027 = vst.msk [vmem:[#allocation3 + $0x10] sm:$0xf] %vm305, %v1019
        %1028 = vst.msk [vmem:[#allocation3 + $0x14] sm:$0xf] %vm305, %v1020
        %1029 = vst.msk [vmem:[#allocation3 + $0x18] sm:$0xf] %vm305, %v1021
        %1030 = vst.msk [vmem:[#allocation3 + $0x1c] sm:$0xf] %vm305, %v1022
        %s1031 = scalar_lea.vmem %s222, 80
        %v1032 = vld [vmem:[%s1031] sm:$0xf]
        %v1033 = vld [vmem:[%s1031 + $0x8] sm:$0xf]
        %v1034 = vld [vmem:[%s1031 + $0x10] sm:$0xf]
        %v1035 = vld [vmem:[%s1031 + $0x18] sm:$0xf]
        %v1036 = vld [vmem:[%s1031 + $0x20] sm:$0xf]
        %v1037 = vld [vmem:[%s1031 + $0x28] sm:$0xf]
        %v1038 = vld [vmem:[%s1031 + $0x30] sm:$0xf]
        %v1039 = vld [vmem:[%s1031 + $0x38] sm:$0xf]
        %1048 = vrot.lane.b32.xlu0 %v1032, 16
        %v1049 = vpop.permute.xlu0 %1048
        %1050 = vrot.lane.b32.xlu0 %v1033, 16
        %v1051 = vpop.permute.xlu0 %1050
        %1052 = vrot.lane.b32.xlu0 %v1034, 16
        %v1053 = vpop.permute.xlu0 %1052
        %1054 = vrot.lane.b32.xlu0 %v1035, 16
        %v1055 = vpop.permute.xlu0 %1054
        %1056 = vrot.lane.b32.xlu0 %v1036, 16
        %v1057 = vpop.permute.xlu0 %1056
        %1058 = vrot.lane.b32.xlu0 %v1037, 16
        %v1059 = vpop.permute.xlu0 %1058
        %1060 = vrot.lane.b32.xlu0 %v1038, 16
        %v1061 = vpop.permute.xlu0 %1060
        %1062 = vrot.lane.b32.xlu0 %v1039, 16
        %v1063 = vpop.permute.xlu0 %1062
        %1072 = vst.msk [vmem:[#allocation3] sm:$0xf] %vm355, %v1049
        %1073 = vst.msk [vmem:[#allocation3 + $0x4] sm:$0xf] %vm355, %v1051
        %1074 = vst.msk [vmem:[#allocation3 + $0x8] sm:$0xf] %vm355, %v1053
        %1075 = vst.msk [vmem:[#allocation3 + $0xc] sm:$0xf] %vm355, %v1055
        %1076 = vst.msk [vmem:[#allocation3 + $0x10] sm:$0xf] %vm355, %v1057
        %1077 = vst.msk [vmem:[#allocation3 + $0x14] sm:$0xf] %vm355, %v1059
        %1078 = vst.msk [vmem:[#allocation3 + $0x18] sm:$0xf] %vm355, %v1061
        %1079 = vst.msk [vmem:[#allocation3 + $0x1c] sm:$0xf] %vm355, %v1063
        %v1080 = vld [vmem:[%s1014] sm:$0xf]
        %v1081 = vld [vmem:[%s1014 + $0x4] sm:$0x1]
        %v1082 = vld [vmem:[%s1014 + $0x8] sm:$0xf]
        %v1083 = vld [vmem:[%s1014 + $0xc] sm:$0x1]
        %v1084 = vld [vmem:[%s1014 + $0x10] sm:$0xf]
        %v1085 = vld [vmem:[%s1014 + $0x14] sm:$0x1]
        %v1086 = vld [vmem:[%s1014 + $0x18] sm:$0xf]
        %v1087 = vld [vmem:[%s1014 + $0x1c] sm:$0x1]
        %v1088 = vld [vmem:[%s1014 + $0x20] sm:$0xf]
        %v1089 = vld [vmem:[%s1014 + $0x24] sm:$0x1]
        %v1090 = vld [vmem:[%s1014 + $0x28] sm:$0xf]
        %v1091 = vld [vmem:[%s1014 + $0x2c] sm:$0x1]
        %v1092 = vld [vmem:[%s1014 + $0x30] sm:$0xf]
        %v1093 = vld [vmem:[%s1014 + $0x34] sm:$0x1]
        %v1094 = vld [vmem:[%s1014 + $0x38] sm:$0xf]
        %v1095 = vld [vmem:[%s1014 + $0x3c] sm:$0x1]
        %v1097 = vshrl.u32 %v1080, 16
        %v1099 = vrot.slane %v1097, 4
        %v1100 = vshll.u32 %v1080, 16
        %v1102 = vrot.slane %v1100, 5
        %v1103 = vor.u32 %v1099, %v1102
        %v1104 = vrot.slane %v1103, 4
        %v1106 = vshll.u32 %v1081, 16
        %v1108 = vrot.slane %v1106, 5
        %v1109 = vsel %vm382, %v1104, %v1108
        %v1111 = vshrl.u32 %v1082, 16
        %v1113 = vrot.slane %v1111, 4
        %v1114 = vshll.u32 %v1082, 16
        %v1116 = vrot.slane %v1114, 5
        %v1117 = vor.u32 %v1113, %v1116
        %v1118 = vrot.slane %v1117, 4
        %v1120 = vshll.u32 %v1083, 16
        %v1122 = vrot.slane %v1120, 5
        %v1123 = vsel %vm382, %v1118, %v1122
        %v1125 = vshrl.u32 %v1084, 16
        %v1127 = vrot.slane %v1125, 4
        %v1128 = vshll.u32 %v1084, 16
        %v1130 = vrot.slane %v1128, 5
        %v1131 = vor.u32 %v1127, %v1130
        %v1132 = vrot.slane %v1131, 4
        %v1134 = vshll.u32 %v1085, 16
        %v1136 = vrot.slane %v1134, 5
        %v1137 = vsel %vm382, %v1132, %v1136
        %v1139 = vshrl.u32 %v1086, 16
        %v1141 = vrot.slane %v1139, 4
        %v1142 = vshll.u32 %v1086, 16
        %v1144 = vrot.slane %v1142, 5
        %v1145 = vor.u32 %v1141, %v1144
        %v1146 = vrot.slane %v1145, 4
        %v1148 = vshll.u32 %v1087, 16
        %v1150 = vrot.slane %v1148, 5
        %v1151 = vsel %vm382, %v1146, %v1150
        %v1153 = vshrl.u32 %v1088, 16
        %v1155 = vrot.slane %v1153, 4
        %v1156 = vshll.u32 %v1088, 16
        %v1158 = vrot.slane %v1156, 5
        %v1159 = vor.u32 %v1155, %v1158
        %v1160 = vrot.slane %v1159, 4
        %v1162 = vshll.u32 %v1089, 16
        %v1164 = vrot.slane %v1162, 5
        %v1165 = vsel %vm382, %v1160, %v1164
        %v1167 = vshrl.u32 %v1090, 16
        %v1169 = vrot.slane %v1167, 4
        %v1170 = vshll.u32 %v1090, 16
        %v1172 = vrot.slane %v1170, 5
        %v1173 = vor.u32 %v1169, %v1172
        %v1174 = vrot.slane %v1173, 4
        %v1176 = vshll.u32 %v1091, 16
        %v1178 = vrot.slane %v1176, 5
        %v1179 = vsel %vm382, %v1174, %v1178
        %v1181 = vshrl.u32 %v1092, 16
        %v1183 = vrot.slane %v1181, 4
        %v1184 = vshll.u32 %v1092, 16
        %v1186 = vrot.slane %v1184, 5
        %v1187 = vor.u32 %v1183, %v1186
        %v1188 = vrot.slane %v1187, 4
        %v1190 = vshll.u32 %v1093, 16
        %v1192 = vrot.slane %v1190, 5
        %v1193 = vsel %vm382, %v1188, %v1192
        %v1195 = vshrl.u32 %v1094, 16
        %v1197 = vrot.slane %v1195, 4
        %v1198 = vshll.u32 %v1094, 16
        %v1200 = vrot.slane %v1198, 5
        %v1201 = vor.u32 %v1197, %v1200
        %v1202 = vrot.slane %v1201, 4
        %v1204 = vshll.u32 %v1095, 16
        %v1206 = vrot.slane %v1204, 5
        %v1207 = vsel %vm382, %v1202, %v1206
        %1208 = vrot.lane.b32.xlu0 %v1109, 32
        %v1209 = vpop.permute.xlu0 %1208
        %1210 = vrot.lane.b32.xlu0 %v1123, 32
        %v1211 = vpop.permute.xlu0 %1210
        %1212 = vrot.lane.b32.xlu0 %v1137, 32
        %v1213 = vpop.permute.xlu0 %1212
        %1214 = vrot.lane.b32.xlu0 %v1151, 32
        %v1215 = vpop.permute.xlu0 %1214
        %1216 = vrot.lane.b32.xlu0 %v1165, 32
        %v1217 = vpop.permute.xlu0 %1216
        %1218 = vrot.lane.b32.xlu0 %v1179, 32
        %v1219 = vpop.permute.xlu0 %1218
        %1220 = vrot.lane.b32.xlu0 %v1193, 32
        %v1221 = vpop.permute.xlu0 %1220
        %1222 = vrot.lane.b32.xlu0 %v1207, 32
        %v1223 = vpop.permute.xlu0 %1222
        %1232 = vst.msk [vmem:[#allocation3] sm:$0xf] %vm519, %v1209
        %1233 = vst.msk [vmem:[#allocation3 + $0x4] sm:$0xf] %vm519, %v1211
        %1234 = vst.msk [vmem:[#allocation3 + $0x8] sm:$0xf] %vm519, %v1213
        %1235 = vst.msk [vmem:[#allocation3 + $0xc] sm:$0xf] %vm519, %v1215
        %1236 = vst.msk [vmem:[#allocation3 + $0x10] sm:$0xf] %vm519, %v1217
        %1237 = vst.msk [vmem:[#allocation3 + $0x14] sm:$0xf] %vm519, %v1219
        %1238 = vst.msk [vmem:[#allocation3 + $0x18] sm:$0xf] %vm519, %v1221
        %1239 = vst.msk [vmem:[#allocation3 + $0x1c] sm:$0xf] %vm519, %v1223
        %v1240 = vld [vmem:[#allocation3] sm:$0xf]
        %v1241 = vld [vmem:[#allocation3 + $0x4] sm:$0xf]
        %v1242 = vld [vmem:[#allocation3 + $0x8] sm:$0xf]
        %v1243 = vld [vmem:[#allocation3 + $0xc] sm:$0xf]
        %v1244 = vld [vmem:[#allocation3 + $0x10] sm:$0xf]
        %v1245 = vld [vmem:[#allocation3 + $0x14] sm:$0xf]
        %v1246 = vld [vmem:[#allocation3 + $0x18] sm:$0xf]
        %v1247 = vld [vmem:[#allocation3 + $0x1c] sm:$0xf]
        %s1248 = scalar_lea.vmem %s1, 48
        %v1249 = vld [vmem:[%s1248] sm:$0xf]
        %v1250 = vld [vmem:[%s1248 + $0x4] sm:$0xf]
        %v1251 = vld [vmem:[%s1248 + $0x8] sm:$0xf]
        %v1252 = vld [vmem:[%s1248 + $0xc] sm:$0xf]
        %v1253 = vld [vmem:[%s1248 + $0x10] sm:$0xf]
        %v1254 = vld [vmem:[%s1248 + $0x14] sm:$0xf]
        %v1263 = vunpack.c.l.b16 %v1240
        %v1264 = vunpack.c.l.b16 %v1241
        %v1265 = vunpack.c.l.b16 %v1242
        %v1266 = vunpack.c.l.b16 %v1243
        %v1267 = vunpack.c.l.b16 %v1244
        %v1268 = vunpack.c.l.b16 %v1245
        %v1269 = vunpack.c.l.b16 %v1246
        %v1270 = vunpack.c.l.b16 %v1247
        %v1271 = vpack.c.b16 %v1264, %v1263
        %v1272 = vpack.c.b16 %v1266, %v1265
        %v1273 = vpack.c.b16 %v1268, %v1267
        %v1274 = vpack.c.b16 %v1270, %v1269
        %v1281 = vunpack.c.l.b16 %v1249
        %v1282 = vunpack.c.l.b16 %v1250
        %v1283 = vunpack.c.l.b16 %v1251
        %v1284 = vunpack.c.l.b16 %v1252
        %v1285 = vunpack.c.l.b16 %v1253
        %v1286 = vunpack.c.l.b16 %v1254
        %v1287 = vpack.c.b16 %v1282, %v1281
        %v1288 = vpack.c.b16 %v1284, %v1283
        %v1289 = vpack.c.b16 %v1286, %v1285
        %v1294 = vsel %vm821, %v1271, 0
        %v1297 = vsel %vm821, %v1272, 0
        %v1300 = vsel %vm821, %v1273, 0
        %v1303 = vsel %vm821, %v1274, 0
        %1305 = vmatprep.subr.bf16.mxu0 0
        %1306 = vmatpush1.bf16.msra.mxu0 0
        %1307 = vmatprep.subr.bf16.mxu0 0
        %1308 = vmatpush1.bf16.msra.mxu0 0
        %1309 = vmatprep.subr.bf16.mxu0 0
        %1310 = vmatpush1.bf16.msra.mxu0 0
        %1311 = vmatprep.subr.bf16.mxu0 0
        %1312 = vmatpush1.bf16.msra.mxu0 0
        %1313 = vmatprep.subr.bf16.mxu0 0
        %1314 = vmatpush1.bf16.msra.mxu0 0
        %1315 = vmatprep.subr.bf16.mxu0 0
        %1316 = vmatpush1.bf16.msra.mxu0 %v1289
        %1317 = vmatprep.subr.bf16.mxu0 0
        %1318 = vmatpush1.bf16.msra.mxu0 %v1288
        %1319 = vmatprep.subr.bf16.mxu0 0
        %1320 = vmatpush1.bf16.msra.mxu0 %v1287
        %1321 = vmatprep.subr.bf16.mxu0 0
        %1322 = vmatpush2.bf16.msra.mxu0 0
        %1323 = vmatprep.subr.bf16.mxu0 0
        %1324 = vmatpush2.bf16.msra.mxu0 0
        %1325 = vmatprep.subr.bf16.mxu0 0
        %1326 = vmatpush2.bf16.msra.mxu0 0
        %1327 = vmatprep.subr.bf16.mxu0 0
        %1328 = vmatpush2.bf16.msra.mxu0 0
        %1329 = vmatprep.subr.bf16.mxu0 0
        %1330 = vmatpush2.bf16.msra.mxu0 0
        %1331 = vmatprep.subr.bf16.mxu0 0
        %1332 = vmatpush2.bf16.msra.mxu0 0
        %1333 = vmatprep.subr.bf16.mxu0 0
        %1334 = vmatpush2.bf16.msra.mxu0 0
        %1335 = vmatprep.subr.bf16.mxu0 0
        %1336 = vmatpush2.bf16.msra.mxu0 0
        %1337 = vmatprep.mubr.bf16.mxu0 0
        %1338 = vmatmul.mubr.bf16.gmra.mxu0 %v1294
        %v1339 = vpop.f32.mrf.mxu0
        %v1340 = vadd.f32 0.0, %v1339
        %v1341 = vpop.f32.mrf.mxu0
        %v1342 = vpop.f32.mrf.mxu0
        %v1343 = vadd.f32 0.0, %v1342
        %v1344 = vpop.f32.mrf.mxu0
        %1345 = vmatprep.mubr.bf16.mxu0 0
        %1346 = vmatmul.mubr.bf16.gmra.mxu0 %v1297
        %v1347 = vpop.f32.mrf.mxu0
        %v1348 = vadd.f32 0.0, %v1347
        %v1349 = vpop.f32.mrf.mxu0
        %v1350 = vpop.f32.mrf.mxu0
        %v1351 = vadd.f32 0.0, %v1350
        %v1352 = vpop.f32.mrf.mxu0
        %1353 = vmatprep.mubr.bf16.mxu0 0
        %1354 = vmatmul.mubr.bf16.gmra.mxu0 %v1300
        %v1355 = vpop.f32.mrf.mxu0
        %v1356 = vadd.f32 0.0, %v1355
        %v1357 = vpop.f32.mrf.mxu0
        %v1358 = vpop.f32.mrf.mxu0
        %v1359 = vadd.f32 0.0, %v1358
        %v1360 = vpop.f32.mrf.mxu0
        %1361 = vmatprep.mubr.bf16.mxu0 0
        %1362 = vmatmul.mubr.bf16.gmra.mxu0 %v1303
        %v1363 = vpop.f32.mrf.mxu0
        %v1364 = vadd.f32 0.0, %v1363
        %v1365 = vpop.f32.mrf.mxu0
        %v1366 = vpop.f32.mrf.mxu0
        %v1367 = vadd.f32 0.0, %v1366
        %v1368 = vpop.f32.mrf.mxu0
        %1369 = vdwg.mxu0
        %v1370 = vadd.f32 %v984, %v1340
        %v1371 = vadd.f32 %v987, %v1343
        %v1372 = vadd.f32 %v992, %v1348
        %v1373 = vadd.f32 %v995, %v1351
        %v1374 = vadd.f32 %v1000, %v1356
        %v1375 = vadd.f32 %v1003, %v1359
        %v1376 = vadd.f32 %v1008, %v1364
        %v1377 = vadd.f32 %v1011, %v1367
        %v1378 = vlaneseq
        %v1379 = vshrl.u32 %v1378, 7
        %v1380 = vsub.s32 0, %v1379
        %v1381 = vrot.slane %v224, %v1380
        %v1382 = vmul.f32 %v1370, %v1381
        %v1383 = vmul.f32 %v1371, %v1381
        %v1384 = vmul.f32 %v1372, %v1381
        %v1385 = vmul.f32 %v1373, %v1381
        %v1386 = vmul.f32 %v1374, %v1381
        %v1387 = vmul.f32 %v1375, %v1381
        %v1388 = vmul.f32 %v1376, %v1381
        %v1389 = vmul.f32 %v1377, %v1381
        %v1390 = vlaneseq
        %v1391 = vshrl.u32 %v1390, 7
        %v1392 = vsub.s32 1, %v1391
        %v1393 = vrot.slane %v224, %v1392
        %v1394 = vadd.f32 %v1382, %v1393
        %v1395 = vadd.f32 %v1383, %v1393
        %v1396 = vadd.f32 %v1384, %v1393
        %v1397 = vadd.f32 %v1385, %v1393
        %v1398 = vadd.f32 %v1386, %v1393
        %v1399 = vadd.f32 %v1387, %v1393
        %v1400 = vadd.f32 %v1388, %v1393
        %v1401 = vadd.f32 %v1389, %v1393
        %v1402 = vmax.f32 %v1394, 0.0
        %v1403 = vmax.f32 %v1395, 0.0
        %v1404 = vmax.f32 %v1396, 0.0
        %v1405 = vmax.f32 %v1397, 0.0
        %v1406 = vmax.f32 %v1398, 0.0
        %v1407 = vmax.f32 %v1399, 0.0
        %v1408 = vmax.f32 %v1400, 0.0
        %v1409 = vmax.f32 %v1401, 0.0
        %v1410 = vpack.c.bf16 %v1402, %v1402
        %v1411 = vpack.c.bf16 %v1403, %v1403
        %v1412 = vpack.c.bf16 %v1404, %v1404
        %v1413 = vpack.c.bf16 %v1405, %v1405
        %v1414 = vpack.c.bf16 %v1406, %v1406
        %v1415 = vpack.c.bf16 %v1407, %v1407
        %v1416 = vpack.c.bf16 %v1408, %v1408
        %v1417 = vpack.c.bf16 %v1409, %v1409
        %v1426 = vunpack.c.l.b16 %v1410
        %v1427 = vunpack.c.l.b16 %v1411
        %v1428 = vunpack.c.l.b16 %v1412
        %v1429 = vunpack.c.l.b16 %v1413
        %v1430 = vunpack.c.l.b16 %v1414
        %v1431 = vunpack.c.l.b16 %v1415
        %v1432 = vunpack.c.l.b16 %v1416
        %v1433 = vunpack.c.l.b16 %v1417
        %v1434 = vpack.c.b16 %v1426, %v1426
        %v1435 = vpack.c.b16 %v1427, %v1427
        %v1436 = vpack.c.b16 %v1428, %v1428
        %v1437 = vpack.c.b16 %v1429, %v1429
        %v1438 = vpack.c.b16 %v1430, %v1430
        %v1439 = vpack.c.b16 %v1431, %v1431
        %v1440 = vpack.c.b16 %v1432, %v1432
        %v1441 = vpack.c.b16 %v1433, %v1433
        %v1443 = vshrl.u32 %v1434, 16
        %v1445 = vrot.slane %v1443, 7
        %v1446 = vshll.u32 %v1434, 16
        %v1448 = vor.u32 %v1445, %v1446
        %v1449 = vrot.slane %v1445, 4
        %v1451 = vshrl.u32 %v1435, 16
        %v1453 = vrot.slane %v1451, 7
        %v1454 = vshll.u32 %v1435, 16
        %v1456 = vor.u32 %v1453, %v1454
        %v1457 = vrot.slane %v1453, 4
        %v1459 = vshrl.u32 %v1436, 16
        %v1461 = vrot.slane %v1459, 7
        %v1462 = vshll.u32 %v1436, 16
        %v1464 = vor.u32 %v1461, %v1462
        %v1465 = vrot.slane %v1461, 4
        %v1467 = vshrl.u32 %v1437, 16
        %v1469 = vrot.slane %v1467, 7
        %v1470 = vshll.u32 %v1437, 16
        %v1472 = vor.u32 %v1469, %v1470
        %v1473 = vrot.slane %v1469, 4
        %v1475 = vshrl.u32 %v1438, 16
        %v1477 = vrot.slane %v1475, 7
        %v1478 = vshll.u32 %v1438, 16
        %v1480 = vor.u32 %v1477, %v1478
        %v1481 = vrot.slane %v1477, 4
        %v1483 = vshrl.u32 %v1439, 16
        %v1485 = vrot.slane %v1483, 7
        %v1486 = vshll.u32 %v1439, 16
        %v1488 = vor.u32 %v1485, %v1486
        %v1489 = vrot.slane %v1485, 4
        %v1491 = vshrl.u32 %v1440, 16
        %v1493 = vrot.slane %v1491, 7
        %v1494 = vshll.u32 %v1440, 16
        %v1496 = vor.u32 %v1493, %v1494
        %v1497 = vrot.slane %v1493, 4
        %v1499 = vshrl.u32 %v1441, 16
        %v1501 = vrot.slane %v1499, 7
        %v1502 = vshll.u32 %v1441, 16
        %v1504 = vor.u32 %v1501, %v1502
        %v1505 = vrot.slane %v1501, 4
        %s1522 = scalar_lea.vmem [#allocation2], 8
        %vm1523 = vcmask 257024
        %vm1524 = vmand %vm1523, %vm265
        %v1525 = vld [vmem:[%s1522] sm:$0xf]
        %v1526 = vsel %vm1524, %v1448, %v1525
        %1527 = vst [vmem:[%s1522] sm:$0xf] %v1526
        %v1528 = vld [vmem:[%s1522 + $0x4] sm:$0x1]
        %v1529 = vsel %vm234, %v1449, %v1528
        %1530 = vst [vmem:[%s1522 + $0x4] sm:$0x1] %v1529
        %v1531 = vld [vmem:[%s1522 + $0x8] sm:$0xf]
        %v1532 = vsel %vm1524, %v1456, %v1531
        %1533 = vst [vmem:[%s1522 + $0x8] sm:$0xf] %v1532
        %v1534 = vld [vmem:[%s1522 + $0xc] sm:$0x1]
        %v1535 = vsel %vm234, %v1457, %v1534
        %1536 = vst [vmem:[%s1522 + $0xc] sm:$0x1] %v1535
        %v1537 = vld [vmem:[%s1522 + $0x10] sm:$0xf]
        %v1538 = vsel %vm1524, %v1464, %v1537
        %1539 = vst [vmem:[%s1522 + $0x10] sm:$0xf] %v1538
        %v1540 = vld [vmem:[%s1522 + $0x14] sm:$0x1]
        %v1541 = vsel %vm234, %v1465, %v1540
        %1542 = vst [vmem:[%s1522 + $0x14] sm:$0x1] %v1541
        %v1543 = vld [vmem:[%s1522 + $0x18] sm:$0xf]
        %v1544 = vsel %vm1524, %v1472, %v1543
        %1545 = vst [vmem:[%s1522 + $0x18] sm:$0xf] %v1544
        %v1546 = vld [vmem:[%s1522 + $0x1c] sm:$0x1]
        %v1547 = vsel %vm234, %v1473, %v1546
        %1548 = vst [vmem:[%s1522 + $0x1c] sm:$0x1] %v1547
        %v1549 = vld [vmem:[%s1522 + $0x20] sm:$0xf]
        %v1550 = vsel %vm1524, %v1480, %v1549
        %1551 = vst [vmem:[%s1522 + $0x20] sm:$0xf] %v1550
        %v1552 = vld [vmem:[%s1522 + $0x24] sm:$0x1]
        %v1553 = vsel %vm234, %v1481, %v1552
        %1554 = vst [vmem:[%s1522 + $0x24] sm:$0x1] %v1553
        %v1555 = vld [vmem:[%s1522 + $0x28] sm:$0xf]
        %v1556 = vsel %vm1524, %v1488, %v1555
        %1557 = vst [vmem:[%s1522 + $0x28] sm:$0xf] %v1556
        %v1558 = vld [vmem:[%s1522 + $0x2c] sm:$0x1]
        %v1559 = vsel %vm234, %v1489, %v1558
        %1560 = vst [vmem:[%s1522 + $0x2c] sm:$0x1] %v1559
        %v1561 = vld [vmem:[%s1522 + $0x30] sm:$0xf]
        %v1562 = vsel %vm1524, %v1496, %v1561
        %1563 = vst [vmem:[%s1522 + $0x30] sm:$0xf] %v1562
        %v1564 = vld [vmem:[%s1522 + $0x34] sm:$0x1]
        %v1565 = vsel %vm234, %v1497, %v1564
        %1566 = vst [vmem:[%s1522 + $0x34] sm:$0x1] %v1565
        %v1567 = vld [vmem:[%s1522 + $0x38] sm:$0xf]
        %v1568 = vsel %vm1524, %v1504, %v1567
        %1569 = vst [vmem:[%s1522 + $0x38] sm:$0xf] %v1568
        %v1570 = vld [vmem:[%s1522 + $0x3c] sm:$0x1]
        %v1571 = vsel %vm234, %v1505, %v1570
        %1572 = vst [vmem:[%s1522 + $0x3c] sm:$0x1] %v1571
        %v1573 = vld [vmem:[#allocation2] sm:$0xf]
        %v1574 = vld [vmem:[#allocation2 + $0x8] sm:$0xf]
        %v1575 = vld [vmem:[#allocation2 + $0x10] sm:$0xf]
        %v1576 = vld [vmem:[#allocation2 + $0x18] sm:$0xf]
        %v1577 = vld [vmem:[#allocation2 + $0x20] sm:$0xf]
        %v1578 = vld [vmem:[#allocation2 + $0x28] sm:$0xf]
        %v1579 = vld [vmem:[#allocation2 + $0x30] sm:$0xf]
        %v1580 = vld [vmem:[#allocation2 + $0x38] sm:$0xf]
        %1581 = vst.msk [vmem:[#allocation3] sm:$0xf] %vm225, %v1573
        %1582 = vst.msk [vmem:[#allocation3 + $0x4] sm:$0xf] %vm225, %v1574
        %1583 = vst.msk [vmem:[#allocation3 + $0x8] sm:$0xf] %vm225, %v1575
        %1584 = vst.msk [vmem:[#allocation3 + $0xc] sm:$0xf] %vm225, %v1576
        %1585 = vst.msk [vmem:[#allocation3 + $0x10] sm:$0xf] %vm225, %v1577
        %1586 = vst.msk [vmem:[#allocation3 + $0x14] sm:$0xf] %vm225, %v1578
        %1587 = vst.msk [vmem:[#allocation3 + $0x18] sm:$0xf] %vm225, %v1579
        %1588 = vst.msk [vmem:[#allocation3 + $0x1c] sm:$0xf] %vm225, %v1580
        %v1589 = vld [vmem:[#allocation2] sm:$0xf]
        %v1590 = vld [vmem:[#allocation2 + $0x4] sm:$0x1]
        %v1591 = vld [vmem:[#allocation2 + $0x8] sm:$0xf]
        %v1592 = vld [vmem:[#allocation2 + $0xc] sm:$0x1]
        %v1593 = vld [vmem:[#allocation2 + $0x10] sm:$0xf]
        %v1594 = vld [vmem:[#allocation2 + $0x14] sm:$0x1]
        %v1595 = vld [vmem:[#allocation2 + $0x18] sm:$0xf]
        %v1596 = vld [vmem:[#allocation2 + $0x1c] sm:$0x1]
        %v1597 = vld [vmem:[#allocation2 + $0x20] sm:$0xf]
        %v1598 = vld [vmem:[#allocation2 + $0x24] sm:$0x1]
        %v1599 = vld [vmem:[#allocation2 + $0x28] sm:$0xf]
        %v1600 = vld [vmem:[#allocation2 + $0x2c] sm:$0x1]
        %v1601 = vld [vmem:[#allocation2 + $0x30] sm:$0xf]
        %v1602 = vld [vmem:[#allocation2 + $0x34] sm:$0x1]
        %v1603 = vld [vmem:[#allocation2 + $0x38] sm:$0xf]
        %v1604 = vld [vmem:[#allocation2 + $0x3c] sm:$0x1]
        %v1606 = vshrl.u32 %v1589, 16
        %v1608 = vrot.slane %v1606, 4
        %v1609 = vshll.u32 %v1589, 16
        %v1611 = vrot.slane %v1609, 5
        %v1612 = vor.u32 %v1608, %v1611
        %v1613 = vrot.slane %v1612, 4
        %v1615 = vshll.u32 %v1590, 16
        %v1617 = vrot.slane %v1615, 5
        %v1618 = vsel %vm382, %v1613, %v1617
        %v1620 = vshrl.u32 %v1591, 16
        %v1622 = vrot.slane %v1620, 4
        %v1623 = vshll.u32 %v1591, 16
        %v1625 = vrot.slane %v1623, 5
        %v1626 = vor.u32 %v1622, %v1625
        %v1627 = vrot.slane %v1626, 4
        %v1629 = vshll.u32 %v1592, 16
        %v1631 = vrot.slane %v1629, 5
        %v1632 = vsel %vm382, %v1627, %v1631
        %v1634 = vshrl.u32 %v1593, 16
        %v1636 = vrot.slane %v1634, 4
        %v1637 = vshll.u32 %v1593, 16
        %v1639 = vrot.slane %v1637, 5
        %v1640 = vor.u32 %v1636, %v1639
        %v1641 = vrot.slane %v1640, 4
        %v1643 = vshll.u32 %v1594, 16
        %v1645 = vrot.slane %v1643, 5
        %v1646 = vsel %vm382, %v1641, %v1645
        %v1648 = vshrl.u32 %v1595, 16
        %v1650 = vrot.slane %v1648, 4
        %v1651 = vshll.u32 %v1595, 16
        %v1653 = vrot.slane %v1651, 5
        %v1654 = vor.u32 %v1650, %v1653
        %v1655 = vrot.slane %v1654, 4
        %v1657 = vshll.u32 %v1596, 16
        %v1659 = vrot.slane %v1657, 5
        %v1660 = vsel %vm382, %v1655, %v1659
        %v1662 = vshrl.u32 %v1597, 16
        %v1664 = vrot.slane %v1662, 4
        %v1665 = vshll.u32 %v1597, 16
        %v1667 = vrot.slane %v1665, 5
        %v1668 = vor.u32 %v1664, %v1667
        %v1669 = vrot.slane %v1668, 4
        %v1671 = vshll.u32 %v1598, 16
        %v1673 = vrot.slane %v1671, 5
        %v1674 = vsel %vm382, %v1669, %v1673
        %v1676 = vshrl.u32 %v1599, 16
        %v1678 = vrot.slane %v1676, 4
        %v1679 = vshll.u32 %v1599, 16
        %v1681 = vrot.slane %v1679, 5
        %v1682 = vor.u32 %v1678, %v1681
        %v1683 = vrot.slane %v1682, 4
        %v1685 = vshll.u32 %v1600, 16
        %v1687 = vrot.slane %v1685, 5
        %v1688 = vsel %vm382, %v1683, %v1687
        %v1690 = vshrl.u32 %v1601, 16
        %v1692 = vrot.slane %v1690, 4
        %v1693 = vshll.u32 %v1601, 16
        %v1695 = vrot.slane %v1693, 5
        %v1696 = vor.u32 %v1692, %v1695
        %v1697 = vrot.slane %v1696, 4
        %v1699 = vshll.u32 %v1602, 16
        %v1701 = vrot.slane %v1699, 5
        %v1702 = vsel %vm382, %v1697, %v1701
        %v1704 = vshrl.u32 %v1603, 16
        %v1706 = vrot.slane %v1704, 4
        %v1707 = vshll.u32 %v1603, 16
        %v1709 = vrot.slane %v1707, 5
        %v1710 = vor.u32 %v1706, %v1709
        %v1711 = vrot.slane %v1710, 4
        %v1713 = vshll.u32 %v1604, 16
        %v1715 = vrot.slane %v1713, 5
        %v1716 = vsel %vm382, %v1711, %v1715
        %1717 = vrot.lane.b32.xlu0 %v1618, 32
        %v1718 = vpop.permute.xlu0 %1717
        %1719 = vrot.lane.b32.xlu0 %v1632, 32
        %v1720 = vpop.permute.xlu0 %1719
        %1721 = vrot.lane.b32.xlu0 %v1646, 32
        %v1722 = vpop.permute.xlu0 %1721
        %1723 = vrot.lane.b32.xlu0 %v1660, 32
        %v1724 = vpop.permute.xlu0 %1723
        %1725 = vrot.lane.b32.xlu0 %v1674, 32
        %v1726 = vpop.permute.xlu0 %1725
        %1727 = vrot.lane.b32.xlu0 %v1688, 32
        %v1728 = vpop.permute.xlu0 %1727
        %1729 = vrot.lane.b32.xlu0 %v1702, 32
        %v1730 = vpop.permute.xlu0 %1729
        %1731 = vrot.lane.b32.xlu0 %v1716, 32
        %v1732 = vpop.permute.xlu0 %1731
        %vm1741 = vcmask 519424
        %1742 = vst.msk [vmem:[#allocation3] sm:$0xf] %vm1741, %v1718
        %1743 = vst.msk [vmem:[#allocation3 + $0x4] sm:$0xf] %vm1741, %v1720
        %1744 = vst.msk [vmem:[#allocation3 + $0x8] sm:$0xf] %vm1741, %v1722
        %1745 = vst.msk [vmem:[#allocation3 + $0xc] sm:$0xf] %vm1741, %v1724
        %1746 = vst.msk [vmem:[#allocation3 + $0x10] sm:$0xf] %vm1741, %v1726
        %1747 = vst.msk [vmem:[#allocation3 + $0x14] sm:$0xf] %vm1741, %v1728
        %1748 = vst.msk [vmem:[#allocation3 + $0x18] sm:$0xf] %vm1741, %v1730
        %1749 = vst.msk [vmem:[#allocation3 + $0x1c] sm:$0xf] %vm1741, %v1732
        %v1750 = vld [vmem:[#allocation2] sm:$0xe]
        %v1751 = vld [vmem:[#allocation2 + $0x4] sm:$0x1]
        %v1752 = vld [vmem:[#allocation2 + $0x8] sm:$0xe]
        %v1753 = vld [vmem:[#allocation2 + $0xc] sm:$0x1]
        %v1754 = vld [vmem:[#allocation2 + $0x10] sm:$0xe]
        %v1755 = vld [vmem:[#allocation2 + $0x14] sm:$0x1]
        %v1756 = vld [vmem:[#allocation2 + $0x18] sm:$0xe]
        %v1757 = vld [vmem:[#allocation2 + $0x1c] sm:$0x1]
        %v1758 = vld [vmem:[#allocation2 + $0x20] sm:$0xe]
        %v1759 = vld [vmem:[#allocation2 + $0x24] sm:$0x1]
        %v1760 = vld [vmem:[#allocation2 + $0x28] sm:$0xe]
        %v1761 = vld [vmem:[#allocation2 + $0x2c] sm:$0x1]
        %v1762 = vld [vmem:[#allocation2 + $0x30] sm:$0xe]
        %v1763 = vld [vmem:[#allocation2 + $0x34] sm:$0x1]
        %v1764 = vld [vmem:[#allocation2 + $0x38] sm:$0xe]
        %v1765 = vld [vmem:[#allocation2 + $0x3c] sm:$0x1]
        %vm1782 = vcmask 1042432
        %vm1783 = vcmask 1046532
        %vm1784 = vmor %vm1782, %vm1783
        %v1785 = vrot.slane %v1750, 5
        %v1786 = vrot.slane %v1785, 4
        %v1787 = vrot.slane %v1751, 5
        %v1788 = vsel %vm1784, %v1786, %v1787
        %v1789 = vrot.slane %v1752, 5
        %v1790 = vrot.slane %v1789, 4
        %v1791 = vrot.slane %v1753, 5
        %v1792 = vsel %vm1784, %v1790, %v1791
        %v1793 = vrot.slane %v1754, 5
        %v1794 = vrot.slane %v1793, 4
        %v1795 = vrot.slane %v1755, 5
        %v1796 = vsel %vm1784, %v1794, %v1795
        %v1797 = vrot.slane %v1756, 5
        %v1798 = vrot.slane %v1797, 4
        %v1799 = vrot.slane %v1757, 5
        %v1800 = vsel %vm1784, %v1798, %v1799
        %v1801 = vrot.slane %v1758, 5
        %v1802 = vrot.slane %v1801, 4
        %v1803 = vrot.slane %v1759, 5
        %v1804 = vsel %vm1784, %v1802, %v1803
        %v1805 = vrot.slane %v1760, 5
        %v1806 = vrot.slane %v1805, 4
        %v1807 = vrot.slane %v1761, 5
        %v1808 = vsel %vm1784, %v1806, %v1807
        %v1809 = vrot.slane %v1762, 5
        %v1810 = vrot.slane %v1809, 4
        %v1811 = vrot.slane %v1763, 5
        %v1812 = vsel %vm1784, %v1810, %v1811
        %v1813 = vrot.slane %v1764, 5
        %v1814 = vrot.slane %v1813, 4
        %v1815 = vrot.slane %v1765, 5
        %v1816 = vsel %vm1784, %v1814, %v1815
        %1817 = vrot.lane.b32.xlu0 %v1788, 64
        %v1818 = vpop.permute.xlu0 %1817
        %1819 = vrot.lane.b32.xlu0 %v1792, 64
        %v1820 = vpop.permute.xlu0 %1819
        %1821 = vrot.lane.b32.xlu0 %v1796, 64
        %v1822 = vpop.permute.xlu0 %1821
        %1823 = vrot.lane.b32.xlu0 %v1800, 64
        %v1824 = vpop.permute.xlu0 %1823
        %1825 = vrot.lane.b32.xlu0 %v1804, 64
        %v1826 = vpop.permute.xlu0 %1825
        %1827 = vrot.lane.b32.xlu0 %v1808, 64
        %v1828 = vpop.permute.xlu0 %1827
        %1829 = vrot.lane.b32.xlu0 %v1812, 64
        %v1830 = vpop.permute.xlu0 %1829
        %1831 = vrot.lane.b32.xlu0 %v1816, 64
        %v1832 = vpop.permute.xlu0 %1831
        %vm1841 = vcmask 781824
        %1842 = vst.msk [vmem:[#allocation3] sm:$0xf] %vm1841, %v1818
        %1843 = vst.msk [vmem:[#allocation3 + $0x4] sm:$0xf] %vm1841, %v1820
        %1844 = vst.msk [vmem:[#allocation3 + $0x8] sm:$0xf] %vm1841, %v1822
        %1845 = vst.msk [vmem:[#allocation3 + $0xc] sm:$0xf] %vm1841, %v1824
        %1846 = vst.msk [vmem:[#allocation3 + $0x10] sm:$0xf] %vm1841, %v1826
        %1847 = vst.msk [vmem:[#allocation3 + $0x14] sm:$0xf] %vm1841, %v1828
        %1848 = vst.msk [vmem:[#allocation3 + $0x18] sm:$0xf] %vm1841, %v1830
        %1849 = vst.msk [vmem:[#allocation3 + $0x1c] sm:$0xf] %vm1841, %v1832
        %v1850 = vld [vmem:[#allocation3] sm:$0xf]
        %v1851 = vld [vmem:[#allocation3 + $0x4] sm:$0xf]
        %v1852 = vld [vmem:[#allocation3 + $0x8] sm:$0xf]
        %v1853 = vld [vmem:[#allocation3 + $0xc] sm:$0xf]
        %v1854 = vld [vmem:[#allocation3 + $0x10] sm:$0xf]
        %v1855 = vld [vmem:[#allocation3 + $0x14] sm:$0xf]
        %v1856 = vld [vmem:[#allocation3 + $0x18] sm:$0xf]
        %v1857 = vld [vmem:[#allocation3 + $0x1c] sm:$0xf]
        %v1858 = vld [vmem:[%s2] sm:$0xf]
        %v1859 = vld [vmem:[%s2 + $0x4] sm:$0xf]
        %v1860 = vld [vmem:[%s2 + $0x8] sm:$0xf]
        %v1861 = vld [vmem:[%s2 + $0xc] sm:$0xf]
        %v1862 = vld [vmem:[%s2 + $0x10] sm:$0xf]
        %v1863 = vld [vmem:[%s2 + $0x14] sm:$0xf]
        %v1864 = vld [vmem:[%s2 + $0x18] sm:$0xf]
        %v1865 = vld [vmem:[%s2 + $0x1c] sm:$0xf]
        %v1866 = vld [vmem:[%s2 + $0x20] sm:$0xf]
        %v1867 = vld [vmem:[%s2 + $0x24] sm:$0xf]
        %v1868 = vld [vmem:[%s2 + $0x28] sm:$0xf]
        %v1869 = vld [vmem:[%s2 + $0x2c] sm:$0xf]
        %v1870 = vld [vmem:[%s1522] sm:$0xf]
        %v1871 = vld [vmem:[%s1522 + $0x8] sm:$0xf]
        %v1872 = vld [vmem:[%s1522 + $0x10] sm:$0xf]
        %v1873 = vld [vmem:[%s1522 + $0x18] sm:$0xf]
        %v1874 = vld [vmem:[%s1522 + $0x20] sm:$0xf]
        %v1875 = vld [vmem:[%s1522 + $0x28] sm:$0xf]
        %v1876 = vld [vmem:[%s1522 + $0x30] sm:$0xf]
        %v1877 = vld [vmem:[%s1522 + $0x38] sm:$0xf]
        %1878 = vst.msk [vmem:[#allocation3] sm:$0xf] %vm225, %v1870
        %1879 = vst.msk [vmem:[#allocation3 + $0x4] sm:$0xf] %vm225, %v1871
        %1880 = vst.msk [vmem:[#allocation3 + $0x8] sm:$0xf] %vm225, %v1872
        %1881 = vst.msk [vmem:[#allocation3 + $0xc] sm:$0xf] %vm225, %v1873
        %1882 = vst.msk [vmem:[#allocation3 + $0x10] sm:$0xf] %vm225, %v1874
        %1883 = vst.msk [vmem:[#allocation3 + $0x14] sm:$0xf] %vm225, %v1875
        %1884 = vst.msk [vmem:[#allocation3 + $0x18] sm:$0xf] %vm225, %v1876
        %1885 = vst.msk [vmem:[#allocation3 + $0x1c] sm:$0xf] %vm225, %v1877
        %v1886 = vld [vmem:[%s1522] sm:$0xf]
        %v1887 = vld [vmem:[%s1522 + $0x4] sm:$0x1]
        %v1888 = vld [vmem:[%s1522 + $0x8] sm:$0xf]
        %v1889 = vld [vmem:[%s1522 + $0xc] sm:$0x1]
        %v1890 = vld [vmem:[%s1522 + $0x10] sm:$0xf]
        %v1891 = vld [vmem:[%s1522 + $0x14] sm:$0x1]
        %v1892 = vld [vmem:[%s1522 + $0x18] sm:$0xf]
        %v1893 = vld [vmem:[%s1522 + $0x1c] sm:$0x1]
        %v1894 = vld [vmem:[%s1522 + $0x20] sm:$0xf]
        %v1895 = vld [vmem:[%s1522 + $0x24] sm:$0x1]
        %v1896 = vld [vmem:[%s1522 + $0x28] sm:$0xf]
        %v1897 = vld [vmem:[%s1522 + $0x2c] sm:$0x1]
        %v1898 = vld [vmem:[%s1522 + $0x30] sm:$0xf]
        %v1899 = vld [vmem:[%s1522 + $0x34] sm:$0x1]
        %v1900 = vld [vmem:[%s1522 + $0x38] sm:$0xf]
        %v1901 = vld [vmem:[%s1522 + $0x3c] sm:$0x1]
        %v1903 = vshrl.u32 %v1886, 16
        %v1905 = vrot.slane %v1903, 4
        %v1906 = vshll.u32 %v1886, 16
        %v1908 = vrot.slane %v1906, 5
        %v1909 = vor.u32 %v1905, %v1908
        %v1910 = vrot.slane %v1909, 4
        %v1912 = vshll.u32 %v1887, 16
        %v1914 = vrot.slane %v1912, 5
        %v1915 = vsel %vm382, %v1910, %v1914
        %v1917 = vshrl.u32 %v1888, 16
        %v1919 = vrot.slane %v1917, 4
        %v1920 = vshll.u32 %v1888, 16
        %v1922 = vrot.slane %v1920, 5
        %v1923 = vor.u32 %v1919, %v1922
        %v1924 = vrot.slane %v1923, 4
        %v1926 = vshll.u32 %v1889, 16
        %v1928 = vrot.slane %v1926, 5
        %v1929 = vsel %vm382, %v1924, %v1928
        %v1931 = vshrl.u32 %v1890, 16
        %v1933 = vrot.slane %v1931, 4
        %v1934 = vshll.u32 %v1890, 16
        %v1936 = vrot.slane %v1934, 5
        %v1937 = vor.u32 %v1933, %v1936
        %v1938 = vrot.slane %v1937, 4
        %v1940 = vshll.u32 %v1891, 16
        %v1942 = vrot.slane %v1940, 5
        %v1943 = vsel %vm382, %v1938, %v1942
        %v1945 = vshrl.u32 %v1892, 16
        %v1947 = vrot.slane %v1945, 4
        %v1948 = vshll.u32 %v1892, 16
        %v1950 = vrot.slane %v1948, 5
        %v1951 = vor.u32 %v1947, %v1950
        %v1952 = vrot.slane %v1951, 4
        %v1954 = vshll.u32 %v1893, 16
        %v1956 = vrot.slane %v1954, 5
        %v1957 = vsel %vm382, %v1952, %v1956
        %v1959 = vshrl.u32 %v1894, 16
        %v1961 = vrot.slane %v1959, 4
        %v1962 = vshll.u32 %v1894, 16
        %v1964 = vrot.slane %v1962, 5
        %v1965 = vor.u32 %v1961, %v1964
        %v1966 = vrot.slane %v1965, 4
        %v1968 = vshll.u32 %v1895, 16
        %v1970 = vrot.slane %v1968, 5
        %v1971 = vsel %vm382, %v1966, %v1970
        %v1973 = vshrl.u32 %v1896, 16
        %v1975 = vrot.slane %v1973, 4
        %v1976 = vshll.u32 %v1896, 16
        %v1978 = vrot.slane %v1976, 5
        %v1979 = vor.u32 %v1975, %v1978
        %v1980 = vrot.slane %v1979, 4
        %v1982 = vshll.u32 %v1897, 16
        %v1984 = vrot.slane %v1982, 5
        %v1985 = vsel %vm382, %v1980, %v1984
        %v1987 = vshrl.u32 %v1898, 16
        %v1989 = vrot.slane %v1987, 4
        %v1990 = vshll.u32 %v1898, 16
        %v1992 = vrot.slane %v1990, 5
        %v1993 = vor.u32 %v1989, %v1992
        %v1994 = vrot.slane %v1993, 4
        %v1996 = vshll.u32 %v1899, 16
        %v1998 = vrot.slane %v1996, 5
        %v1999 = vsel %vm382, %v1994, %v1998
        %v2001 = vshrl.u32 %v1900, 16
        %v2003 = vrot.slane %v2001, 4
        %v2004 = vshll.u32 %v1900, 16
        %v2006 = vrot.slane %v2004, 5
        %v2007 = vor.u32 %v2003, %v2006
        %v2008 = vrot.slane %v2007, 4
        %v2010 = vshll.u32 %v1901, 16
        %v2012 = vrot.slane %v2010, 5
        %v2013 = vsel %vm382, %v2008, %v2012
        %2014 = vrot.lane.b32.xlu0 %v1915, 32
        %v2015 = vpop.permute.xlu0 %2014
        %2016 = vrot.lane.b32.xlu0 %v1929, 32
        %v2017 = vpop.permute.xlu0 %2016
        %2018 = vrot.lane.b32.xlu0 %v1943, 32
        %v2019 = vpop.permute.xlu0 %2018
        %2020 = vrot.lane.b32.xlu0 %v1957, 32
        %v2021 = vpop.permute.xlu0 %2020
        %2022 = vrot.lane.b32.xlu0 %v1971, 32
        %v2023 = vpop.permute.xlu0 %2022
        %2024 = vrot.lane.b32.xlu0 %v1985, 32
        %v2025 = vpop.permute.xlu0 %2024
        %2026 = vrot.lane.b32.xlu0 %v1999, 32
        %v2027 = vpop.permute.xlu0 %2026
        %2028 = vrot.lane.b32.xlu0 %v2013, 32
        %v2029 = vpop.permute.xlu0 %2028
        %2038 = vst.msk [vmem:[#allocation3] sm:$0xf] %vm1741, %v2015
        %2039 = vst.msk [vmem:[#allocation3 + $0x4] sm:$0xf] %vm1741, %v2017
        %2040 = vst.msk [vmem:[#allocation3 + $0x8] sm:$0xf] %vm1741, %v2019
        %2041 = vst.msk [vmem:[#allocation3 + $0xc] sm:$0xf] %vm1741, %v2021
        %2042 = vst.msk [vmem:[#allocation3 + $0x10] sm:$0xf] %vm1741, %v2023
        %2043 = vst.msk [vmem:[#allocation3 + $0x14] sm:$0xf] %vm1741, %v2025
        %2044 = vst.msk [vmem:[#allocation3 + $0x18] sm:$0xf] %vm1741, %v2027
        %2045 = vst.msk [vmem:[#allocation3 + $0x1c] sm:$0xf] %vm1741, %v2029
        %v2046 = vld [vmem:[%s1522] sm:$0xe]
        %v2047 = vld [vmem:[%s1522 + $0x4] sm:$0x1]
        %v2048 = vld [vmem:[%s1522 + $0x8] sm:$0xe]
        %v2049 = vld [vmem:[%s1522 + $0xc] sm:$0x1]
        %v2050 = vld [vmem:[%s1522 + $0x10] sm:$0xe]
        %v2051 = vld [vmem:[%s1522 + $0x14] sm:$0x1]
        %v2052 = vld [vmem:[%s1522 + $0x18] sm:$0xe]
        %v2053 = vld [vmem:[%s1522 + $0x1c] sm:$0x1]
        %v2054 = vld [vmem:[%s1522 + $0x20] sm:$0xe]
        %v2055 = vld [vmem:[%s1522 + $0x24] sm:$0x1]
        %v2056 = vld [vmem:[%s1522 + $0x28] sm:$0xe]
        %v2057 = vld [vmem:[%s1522 + $0x2c] sm:$0x1]
        %v2058 = vld [vmem:[%s1522 + $0x30] sm:$0xe]
        %v2059 = vld [vmem:[%s1522 + $0x34] sm:$0x1]
        %v2060 = vld [vmem:[%s1522 + $0x38] sm:$0xe]
        %v2061 = vld [vmem:[%s1522 + $0x3c] sm:$0x1]
        %v2078 = vrot.slane %v2046, 5
        %v2079 = vrot.slane %v2078, 4
        %v2080 = vrot.slane %v2047, 5
        %v2081 = vsel %vm1784, %v2079, %v2080
        %v2082 = vrot.slane %v2048, 5
        %v2083 = vrot.slane %v2082, 4
        %v2084 = vrot.slane %v2049, 5
        %v2085 = vsel %vm1784, %v2083, %v2084
        %v2086 = vrot.slane %v2050, 5
        %v2087 = vrot.slane %v2086, 4
        %v2088 = vrot.slane %v2051, 5
        %v2089 = vsel %vm1784, %v2087, %v2088
        %v2090 = vrot.slane %v2052, 5
        %v2091 = vrot.slane %v2090, 4
        %v2092 = vrot.slane %v2053, 5
        %v2093 = vsel %vm1784, %v2091, %v2092
        %v2094 = vrot.slane %v2054, 5
        %v2095 = vrot.slane %v2094, 4
        %v2096 = vrot.slane %v2055, 5
        %v2097 = vsel %vm1784, %v2095, %v2096
        %v2098 = vrot.slane %v2056, 5
        %v2099 = vrot.slane %v2098, 4
        %v2100 = vrot.slane %v2057, 5
        %v2101 = vsel %vm1784, %v2099, %v2100
        %v2102 = vrot.slane %v2058, 5
        %v2103 = vrot.slane %v2102, 4
        %v2104 = vrot.slane %v2059, 5
        %v2105 = vsel %vm1784, %v2103, %v2104
        %v2106 = vrot.slane %v2060, 5
        %v2107 = vrot.slane %v2106, 4
        %v2108 = vrot.slane %v2061, 5
        %v2109 = vsel %vm1784, %v2107, %v2108
        %2110 = vrot.lane.b32.xlu0 %v2081, 64
        %v2111 = vpop.permute.xlu0 %2110
        %2112 = vrot.lane.b32.xlu0 %v2085, 64
        %v2113 = vpop.permute.xlu0 %2112
        %2114 = vrot.lane.b32.xlu0 %v2089, 64
        %v2115 = vpop.permute.xlu0 %2114
        %2116 = vrot.lane.b32.xlu0 %v2093, 64
        %v2117 = vpop.permute.xlu0 %2116
        %2118 = vrot.lane.b32.xlu0 %v2097, 64
        %v2119 = vpop.permute.xlu0 %2118
        %2120 = vrot.lane.b32.xlu0 %v2101, 64
        %v2121 = vpop.permute.xlu0 %2120
        %2122 = vrot.lane.b32.xlu0 %v2105, 64
        %v2123 = vpop.permute.xlu0 %2122
        %2124 = vrot.lane.b32.xlu0 %v2109, 64
        %v2125 = vpop.permute.xlu0 %2124
        %2134 = vst.msk [vmem:[#allocation3] sm:$0xf] %vm1841, %v2111
        %2135 = vst.msk [vmem:[#allocation3 + $0x4] sm:$0xf] %vm1841, %v2113
        %2136 = vst.msk [vmem:[#allocation3 + $0x8] sm:$0xf] %vm1841, %v2115
        %2137 = vst.msk [vmem:[#allocation3 + $0xc] sm:$0xf] %vm1841, %v2117
        %2138 = vst.msk [vmem:[#allocation3 + $0x10] sm:$0xf] %vm1841, %v2119
        %2139 = vst.msk [vmem:[#allocation3 + $0x14] sm:$0xf] %vm1841, %v2121
        %2140 = vst.msk [vmem:[#allocation3 + $0x18] sm:$0xf] %vm1841, %v2123
        %2141 = vst.msk [vmem:[#allocation3 + $0x1c] sm:$0xf] %vm1841, %v2125
        %v2142 = vld [vmem:[#allocation3] sm:$0xf]
        %v2143 = vld [vmem:[#allocation3 + $0x4] sm:$0xf]
        %v2144 = vld [vmem:[#allocation3 + $0x8] sm:$0xf]
        %v2145 = vld [vmem:[#allocation3 + $0xc] sm:$0xf]
        %v2146 = vld [vmem:[#allocation3 + $0x10] sm:$0xf]
        %v2147 = vld [vmem:[#allocation3 + $0x14] sm:$0xf]
        %v2148 = vld [vmem:[#allocation3 + $0x18] sm:$0xf]
        %v2149 = vld [vmem:[#allocation3 + $0x1c] sm:$0xf]
        %s2150 = scalar_lea.vmem %s2, 48
        %v2151 = vld [vmem:[%s2150] sm:$0xf]
        %v2152 = vld [vmem:[%s2150 + $0x4] sm:$0xf]
        %v2153 = vld [vmem:[%s2150 + $0x8] sm:$0xf]
        %v2154 = vld [vmem:[%s2150 + $0xc] sm:$0xf]
        %v2155 = vld [vmem:[%s2150 + $0x10] sm:$0xf]
        %v2156 = vld [vmem:[%s2150 + $0x14] sm:$0xf]
        %v2157 = vld [vmem:[%s2150 + $0x18] sm:$0xf]
        %v2158 = vld [vmem:[%s2150 + $0x1c] sm:$0xf]
        %v2159 = vld [vmem:[%s2150 + $0x20] sm:$0xf]
        %v2160 = vld [vmem:[%s2150 + $0x24] sm:$0xf]
        %v2161 = vld [vmem:[%s2150 + $0x28] sm:$0xf]
        %v2162 = vld [vmem:[%s2150 + $0x2c] sm:$0xf]
        %v2171 = vunpack.c.l.b16 %v2142
        %v2172 = vunpack.c.l.b16 %v2143
        %v2173 = vunpack.c.l.b16 %v2144
        %v2174 = vunpack.c.l.b16 %v2145
        %v2175 = vunpack.c.l.b16 %v2146
        %v2176 = vunpack.c.l.b16 %v2147
        %v2177 = vunpack.c.l.b16 %v2148
        %v2178 = vunpack.c.l.b16 %v2149
        %v2179 = vpack.c.b16 %v2172, %v2171
        %v2180 = vpack.c.b16 %v2174, %v2173
        %v2181 = vpack.c.b16 %v2176, %v2175
        %v2182 = vpack.c.b16 %v2178, %v2177
        %v2195 = vunpack.c.l.b16 %v2151
        %v2196 = vunpack.c.l.b16 %v2152
        %v2197 = vunpack.c.l.b16 %v2153
        %v2198 = vunpack.c.l.b16 %v2154
        %v2199 = vunpack.c.l.b16 %v2155
        %v2200 = vunpack.c.l.b16 %v2156
        %v2201 = vunpack.c.l.b16 %v2157
        %v2202 = vunpack.c.l.b16 %v2158
        %v2203 = vunpack.c.l.b16 %v2159
        %v2204 = vunpack.c.l.b16 %v2160
        %v2205 = vunpack.c.l.b16 %v2161
        %v2206 = vunpack.c.l.b16 %v2162
        %v2207 = vpack.c.b16 %v2196, %v2195
        %v2208 = vpack.c.b16 %v2198, %v2197
        %v2209 = vpack.c.b16 %v2200, %v2199
        %v2210 = vpack.c.b16 %v2202, %v2201
        %v2211 = vpack.c.b16 %v2204, %v2203
        %v2212 = vpack.c.b16 %v2206, %v2205
        %vm2219 = vcmask 785408
        %v2221 = vsel %vm2219, %v2179, 0
        %v2224 = vsel %vm2219, %v2180, 0
        %v2227 = vsel %vm2219, %v2181, 0
        %v2230 = vsel %vm2219, %v2182, 0
        %2232 = vmatprep.subr.bf16.mxu0 0
        %2233 = vmatpush1.bf16.msra.mxu0 0
        %2234 = vmatprep.subr.bf16.mxu0 0
        %2235 = vmatpush1.bf16.msra.mxu0 0
        %2236 = vmatprep.subr.bf16.mxu0 0
        %2237 = vmatpush1.bf16.msra.mxu0 %v2212
        %2238 = vmatprep.subr.bf16.mxu0 0
        %2239 = vmatpush1.bf16.msra.mxu0 %v2211
        %2240 = vmatprep.subr.bf16.mxu0 0
        %2241 = vmatpush1.bf16.msra.mxu0 %v2210
        %2242 = vmatprep.subr.bf16.mxu0 0
        %2243 = vmatpush1.bf16.msra.mxu0 %v2209
        %2244 = vmatprep.subr.bf16.mxu0 0
        %2245 = vmatpush1.bf16.msra.mxu0 %v2208
        %2246 = vmatprep.subr.bf16.mxu0 0
        %2247 = vmatpush1.bf16.msra.mxu0 %v2207
        %2248 = vmatprep.subr.bf16.mxu0 0
        %2249 = vmatpush2.bf16.msra.mxu0 0
        %2250 = vmatprep.subr.bf16.mxu0 0
        %2251 = vmatpush2.bf16.msra.mxu0 0
        %2252 = vmatprep.subr.bf16.mxu0 0
        %2253 = vmatpush2.bf16.msra.mxu0 0
        %2254 = vmatprep.subr.bf16.mxu0 0
        %2255 = vmatpush2.bf16.msra.mxu0 0
        %2256 = vmatprep.subr.bf16.mxu0 0
        %2257 = vmatpush2.bf16.msra.mxu0 0
        %2258 = vmatprep.subr.bf16.mxu0 0
        %2259 = vmatpush2.bf16.msra.mxu0 0
        %2260 = vmatprep.subr.bf16.mxu0 0
        %2261 = vmatpush2.bf16.msra.mxu0 0
        %2262 = vmatprep.subr.bf16.mxu0 0
        %2263 = vmatpush2.bf16.msra.mxu0 0
        %2264 = vmatprep.mubr.bf16.mxu0 0
        %2265 = vmatmul.mubr.bf16.gmra.mxu0 %v2221
        %v2266 = vpop.f32.mrf.mxu0
        %v2267 = vadd.f32 0.0, %v2266
        %v2268 = vpop.f32.mrf.mxu0
        %v2269 = vpop.f32.mrf.mxu0
        %v2270 = vadd.f32 0.0, %v2269
        %v2271 = vpop.f32.mrf.mxu0
        %2272 = vmatprep.mubr.bf16.mxu0 0
        %2273 = vmatmul.mubr.bf16.gmra.mxu0 %v2224
        %v2274 = vpop.f32.mrf.mxu0
        %v2275 = vadd.f32 0.0, %v2274
        %v2276 = vpop.f32.mrf.mxu0
        %v2277 = vpop.f32.mrf.mxu0
        %v2278 = vadd.f32 0.0, %v2277
        %v2279 = vpop.f32.mrf.mxu0
        %2280 = vmatprep.mubr.bf16.mxu0 0
        %2281 = vmatmul.mubr.bf16.gmra.mxu0 %v2227
        %v2282 = vpop.f32.mrf.mxu0
        %v2283 = vadd.f32 0.0, %v2282
        %v2284 = vpop.f32.mrf.mxu0
        %v2285 = vpop.f32.mrf.mxu0
        %v2286 = vadd.f32 0.0, %v2285
        %v2287 = vpop.f32.mrf.mxu0
        %2288 = vmatprep.mubr.bf16.mxu0 0
        %2289 = vmatmul.mubr.bf16.gmra.mxu0 %v2230
        %v2290 = vpop.f32.mrf.mxu0
        %v2291 = vadd.f32 0.0, %v2290
        %v2292 = vpop.f32.mrf.mxu0
        %v2293 = vpop.f32.mrf.mxu0
        %v2294 = vadd.f32 0.0, %v2293
        %v2295 = vpop.f32.mrf.mxu0
        %2296 = vdwg.mxu0
        %v2305 = vunpack.c.l.b16 %v1850
        %v2306 = vunpack.c.l.b16 %v1851
        %v2307 = vunpack.c.l.b16 %v1852
        %v2308 = vunpack.c.l.b16 %v1853
        %v2309 = vunpack.c.l.b16 %v1854
        %v2310 = vunpack.c.l.b16 %v1855
        %v2311 = vunpack.c.l.b16 %v1856
        %v2312 = vunpack.c.l.b16 %v1857
        %v2313 = vpack.c.b16 %v2306, %v2305
        %v2314 = vpack.c.b16 %v2308, %v2307
        %v2315 = vpack.c.b16 %v2310, %v2309
        %v2316 = vpack.c.b16 %v2312, %v2311
        %v2329 = vunpack.c.l.b16 %v1858
        %v2330 = vunpack.c.l.b16 %v1859
        %v2331 = vunpack.c.l.b16 %v1860
        %v2332 = vunpack.c.l.b16 %v1861
        %v2333 = vunpack.c.l.b16 %v1862
        %v2334 = vunpack.c.l.b16 %v1863
        %v2335 = vunpack.c.l.b16 %v1864
        %v2336 = vunpack.c.l.b16 %v1865
        %v2337 = vunpack.c.l.b16 %v1866
        %v2338 = vunpack.c.l.b16 %v1867
        %v2339 = vunpack.c.l.b16 %v1868
        %v2340 = vunpack.c.l.b16 %v1869
        %v2341 = vpack.c.b16 %v2330, %v2329
        %v2342 = vpack.c.b16 %v2332, %v2331
        %v2343 = vpack.c.b16 %v2334, %v2333
        %v2344 = vpack.c.b16 %v2336, %v2335
        %v2345 = vpack.c.b16 %v2338, %v2337
        %v2346 = vpack.c.b16 %v2340, %v2339
        %v2354 = vsel %vm2219, %v2313, 0
        %v2357 = vsel %vm2219, %v2314, 0
        %v2360 = vsel %vm2219, %v2315, 0
        %v2363 = vsel %vm2219, %v2316, 0
        %2365 = vmatprep.subr.bf16.mxu0 0
        %2366 = vmatpush1.bf16.msra.mxu0 0
        %2367 = vmatprep.subr.bf16.mxu0 0
        %2368 = vmatpush1.bf16.msra.mxu0 0
        %2369 = vmatprep.subr.bf16.mxu0 0
        %2370 = vmatpush1.bf16.msra.mxu0 %v2346
        %2371 = vmatprep.subr.bf16.mxu0 0
        %2372 = vmatpush1.bf16.msra.mxu0 %v2345
        %2373 = vmatprep.subr.bf16.mxu0 0
        %2374 = vmatpush1.bf16.msra.mxu0 %v2344
        %2375 = vmatprep.subr.bf16.mxu0 0
        %2376 = vmatpush1.bf16.msra.mxu0 %v2343
        %2377 = vmatprep.subr.bf16.mxu0 0
        %2378 = vmatpush1.bf16.msra.mxu0 %v2342
        %2379 = vmatprep.subr.bf16.mxu0 0
        %2380 = vmatpush1.bf16.msra.mxu0 %v2341
        %2381 = vmatprep.subr.bf16.mxu0 0
        %2382 = vmatpush2.bf16.msra.mxu0 0
        %2383 = vmatprep.subr.bf16.mxu0 0
        %2384 = vmatpush2.bf16.msra.mxu0 0
        %2385 = vmatprep.subr.bf16.mxu0 0
        %2386 = vmatpush2.bf16.msra.mxu0 0
        %2387 = vmatprep.subr.bf16.mxu0 0
        %2388 = vmatpush2.bf16.msra.mxu0 0
        %2389 = vmatprep.subr.bf16.mxu0 0
        %2390 = vmatpush2.bf16.msra.mxu0 0
        %2391 = vmatprep.subr.bf16.mxu0 0
        %2392 = vmatpush2.bf16.msra.mxu0 0
        %2393 = vmatprep.subr.bf16.mxu0 0
        %2394 = vmatpush2.bf16.msra.mxu0 0
        %2395 = vmatprep.subr.bf16.mxu0 0
        %2396 = vmatpush2.bf16.msra.mxu0 0
        %2397 = vmatprep.mubr.bf16.mxu0 0
        %2398 = vmatmul.mubr.bf16.gmra.mxu0 %v2354
        %v2399 = vpop.f32.mrf.mxu0
        %v2400 = vadd.f32 %v2267, %v2399
        %v2401 = vpop.f32.mrf.mxu0
        %v2402 = vpop.f32.mrf.mxu0
        %v2403 = vadd.f32 %v2270, %v2402
        %v2404 = vpop.f32.mrf.mxu0
        %2405 = vmatprep.mubr.bf16.mxu0 0
        %2406 = vmatmul.mubr.bf16.gmra.mxu0 %v2357
        %v2407 = vpop.f32.mrf.mxu0
        %v2408 = vadd.f32 %v2275, %v2407
        %v2409 = vpop.f32.mrf.mxu0
        %v2410 = vpop.f32.mrf.mxu0
        %v2411 = vadd.f32 %v2278, %v2410
        %v2412 = vpop.f32.mrf.mxu0
        %2413 = vmatprep.mubr.bf16.mxu0 0
        %2414 = vmatmul.mubr.bf16.gmra.mxu0 %v2360
        %v2415 = vpop.f32.mrf.mxu0
        %v2416 = vadd.f32 %v2283, %v2415
        %v2417 = vpop.f32.mrf.mxu0
        %v2418 = vpop.f32.mrf.mxu0
        %v2419 = vadd.f32 %v2286, %v2418
        %v2420 = vpop.f32.mrf.mxu0
        %2421 = vmatprep.mubr.bf16.mxu0 0
        %2422 = vmatmul.mubr.bf16.gmra.mxu0 %v2363
        %v2423 = vpop.f32.mrf.mxu0
        %v2424 = vadd.f32 %v2291, %v2423
        %v2425 = vpop.f32.mrf.mxu0
        %v2426 = vpop.f32.mrf.mxu0
        %v2427 = vadd.f32 %v2294, %v2426
        %v2428 = vpop.f32.mrf.mxu0
        %2429 = vdwg.mxu0
        %s2430 = scalar_lea.vmem [#allocation2], 16
        %v2431 = vld [vmem:[%s2430] sm:$0xf]
        %v2432 = vld [vmem:[%s2430 + $0x8] sm:$0xf]
        %v2433 = vld [vmem:[%s2430 + $0x10] sm:$0xf]
        %v2434 = vld [vmem:[%s2430 + $0x18] sm:$0xf]
        %v2435 = vld [vmem:[%s2430 + $0x20] sm:$0xf]
        %v2436 = vld [vmem:[%s2430 + $0x28] sm:$0xf]
        %v2437 = vld [vmem:[%s2430 + $0x30] sm:$0xf]
        %v2438 = vld [vmem:[%s2430 + $0x38] sm:$0xf]
        %2439 = vst.msk [vmem:[#allocation3] sm:$0xf] %vm225, %v2431
        %2440 = vst.msk [vmem:[#allocation3 + $0x4] sm:$0xf] %vm225, %v2432
        %2441 = vst.msk [vmem:[#allocation3 + $0x8] sm:$0xf] %vm225, %v2433
        %2442 = vst.msk [vmem:[#allocation3 + $0xc] sm:$0xf] %vm225, %v2434
        %2443 = vst.msk [vmem:[#allocation3 + $0x10] sm:$0xf] %vm225, %v2435
        %2444 = vst.msk [vmem:[#allocation3 + $0x14] sm:$0xf] %vm225, %v2436
        %2445 = vst.msk [vmem:[#allocation3 + $0x18] sm:$0xf] %vm225, %v2437
        %2446 = vst.msk [vmem:[#allocation3 + $0x1c] sm:$0xf] %vm225, %v2438
        %v2447 = vld [vmem:[%s2430] sm:$0xf]
        %v2448 = vld [vmem:[%s2430 + $0x4] sm:$0x1]
        %v2449 = vld [vmem:[%s2430 + $0x8] sm:$0xf]
        %v2450 = vld [vmem:[%s2430 + $0xc] sm:$0x1]
        %v2451 = vld [vmem:[%s2430 + $0x10] sm:$0xf]
        %v2452 = vld [vmem:[%s2430 + $0x14] sm:$0x1]
        %v2453 = vld [vmem:[%s2430 + $0x18] sm:$0xf]
        %v2454 = vld [vmem:[%s2430 + $0x1c] sm:$0x1]
        %v2455 = vld [vmem:[%s2430 + $0x20] sm:$0xf]
        %v2456 = vld [vmem:[%s2430 + $0x24] sm:$0x1]
        %v2457 = vld [vmem:[%s2430 + $0x28] sm:$0xf]
        %v2458 = vld [vmem:[%s2430 + $0x2c] sm:$0x1]
        %v2459 = vld [vmem:[%s2430 + $0x30] sm:$0xf]
        %v2460 = vld [vmem:[%s2430 + $0x34] sm:$0x1]
        %v2461 = vld [vmem:[%s2430 + $0x38] sm:$0xf]
        %v2462 = vld [vmem:[%s2430 + $0x3c] sm:$0x1]
        %v2464 = vshrl.u32 %v2447, 16
        %v2466 = vrot.slane %v2464, 4
        %v2467 = vshll.u32 %v2447, 16
        %v2469 = vrot.slane %v2467, 5
        %v2470 = vor.u32 %v2466, %v2469
        %v2471 = vrot.slane %v2470, 4
        %v2473 = vshll.u32 %v2448, 16
        %v2475 = vrot.slane %v2473, 5
        %v2476 = vsel %vm382, %v2471, %v2475
        %v2478 = vshrl.u32 %v2449, 16
        %v2480 = vrot.slane %v2478, 4
        %v2481 = vshll.u32 %v2449, 16
        %v2483 = vrot.slane %v2481, 5
        %v2484 = vor.u32 %v2480, %v2483
        %v2485 = vrot.slane %v2484, 4
        %v2487 = vshll.u32 %v2450, 16
        %v2489 = vrot.slane %v2487, 5
        %v2490 = vsel %vm382, %v2485, %v2489
        %v2492 = vshrl.u32 %v2451, 16
        %v2494 = vrot.slane %v2492, 4
        %v2495 = vshll.u32 %v2451, 16
        %v2497 = vrot.slane %v2495, 5
        %v2498 = vor.u32 %v2494, %v2497
        %v2499 = vrot.slane %v2498, 4
        %v2501 = vshll.u32 %v2452, 16
        %v2503 = vrot.slane %v2501, 5
        %v2504 = vsel %vm382, %v2499, %v2503
        %v2506 = vshrl.u32 %v2453, 16
        %v2508 = vrot.slane %v2506, 4
        %v2509 = vshll.u32 %v2453, 16
        %v2511 = vrot.slane %v2509, 5
        %v2512 = vor.u32 %v2508, %v2511
        %v2513 = vrot.slane %v2512, 4
        %v2515 = vshll.u32 %v2454, 16
        %v2517 = vrot.slane %v2515, 5
        %v2518 = vsel %vm382, %v2513, %v2517
        %v2520 = vshrl.u32 %v2455, 16
        %v2522 = vrot.slane %v2520, 4
        %v2523 = vshll.u32 %v2455, 16
        %v2525 = vrot.slane %v2523, 5
        %v2526 = vor.u32 %v2522, %v2525
        %v2527 = vrot.slane %v2526, 4
        %v2529 = vshll.u32 %v2456, 16
        %v2531 = vrot.slane %v2529, 5
        %v2532 = vsel %vm382, %v2527, %v2531
        %v2534 = vshrl.u32 %v2457, 16
        %v2536 = vrot.slane %v2534, 4
        %v2537 = vshll.u32 %v2457, 16
        %v2539 = vrot.slane %v2537, 5
        %v2540 = vor.u32 %v2536, %v2539
        %v2541 = vrot.slane %v2540, 4
        %v2543 = vshll.u32 %v2458, 16
        %v2545 = vrot.slane %v2543, 5
        %v2546 = vsel %vm382, %v2541, %v2545
        %v2548 = vshrl.u32 %v2459, 16
        %v2550 = vrot.slane %v2548, 4
        %v2551 = vshll.u32 %v2459, 16
        %v2553 = vrot.slane %v2551, 5
        %v2554 = vor.u32 %v2550, %v2553
        %v2555 = vrot.slane %v2554, 4
        %v2557 = vshll.u32 %v2460, 16
        %v2559 = vrot.slane %v2557, 5
        %v2560 = vsel %vm382, %v2555, %v2559
        %v2562 = vshrl.u32 %v2461, 16
        %v2564 = vrot.slane %v2562, 4
        %v2565 = vshll.u32 %v2461, 16
        %v2567 = vrot.slane %v2565, 5
        %v2568 = vor.u32 %v2564, %v2567
        %v2569 = vrot.slane %v2568, 4
        %v2571 = vshll.u32 %v2462, 16
        %v2573 = vrot.slane %v2571, 5
        %v2574 = vsel %vm382, %v2569, %v2573
        %2575 = vrot.lane.b32.xlu0 %v2476, 32
        %v2576 = vpop.permute.xlu0 %2575
        %2577 = vrot.lane.b32.xlu0 %v2490, 32
        %v2578 = vpop.permute.xlu0 %2577
        %2579 = vrot.lane.b32.xlu0 %v2504, 32
        %v2580 = vpop.permute.xlu0 %2579
        %2581 = vrot.lane.b32.xlu0 %v2518, 32
        %v2582 = vpop.permute.xlu0 %2581
        %2583 = vrot.lane.b32.xlu0 %v2532, 32
        %v2584 = vpop.permute.xlu0 %2583
        %2585 = vrot.lane.b32.xlu0 %v2546, 32
        %v2586 = vpop.permute.xlu0 %2585
        %2587 = vrot.lane.b32.xlu0 %v2560, 32
        %v2588 = vpop.permute.xlu0 %2587
        %2589 = vrot.lane.b32.xlu0 %v2574, 32
        %v2590 = vpop.permute.xlu0 %2589
        %2599 = vst.msk [vmem:[#allocation3] sm:$0xf] %vm1741, %v2576
        %2600 = vst.msk [vmem:[#allocation3 + $0x4] sm:$0xf] %vm1741, %v2578
        %2601 = vst.msk [vmem:[#allocation3 + $0x8] sm:$0xf] %vm1741, %v2580
        %2602 = vst.msk [vmem:[#allocation3 + $0xc] sm:$0xf] %vm1741, %v2582
        %2603 = vst.msk [vmem:[#allocation3 + $0x10] sm:$0xf] %vm1741, %v2584
        %2604 = vst.msk [vmem:[#allocation3 + $0x14] sm:$0xf] %vm1741, %v2586
        %2605 = vst.msk [vmem:[#allocation3 + $0x18] sm:$0xf] %vm1741, %v2588
        %2606 = vst.msk [vmem:[#allocation3 + $0x1c] sm:$0xf] %vm1741, %v2590
        %v2607 = vld [vmem:[%s2430] sm:$0xe]
        %v2608 = vld [vmem:[%s2430 + $0x4] sm:$0x1]
        %v2609 = vld [vmem:[%s2430 + $0x8] sm:$0xe]
        %v2610 = vld [vmem:[%s2430 + $0xc] sm:$0x1]
        %v2611 = vld [vmem:[%s2430 + $0x10] sm:$0xe]
        %v2612 = vld [vmem:[%s2430 + $0x14] sm:$0x1]
        %v2613 = vld [vmem:[%s2430 + $0x18] sm:$0xe]
        %v2614 = vld [vmem:[%s2430 + $0x1c] sm:$0x1]
        %v2615 = vld [vmem:[%s2430 + $0x20] sm:$0xe]
        %v2616 = vld [vmem:[%s2430 + $0x24] sm:$0x1]
        %v2617 = vld [vmem:[%s2430 + $0x28] sm:$0xe]
        %v2618 = vld [vmem:[%s2430 + $0x2c] sm:$0x1]
        %v2619 = vld [vmem:[%s2430 + $0x30] sm:$0xe]
        %v2620 = vld [vmem:[%s2430 + $0x34] sm:$0x1]
        %v2621 = vld [vmem:[%s2430 + $0x38] sm:$0xe]
        %v2622 = vld [vmem:[%s2430 + $0x3c] sm:$0x1]
        %v2639 = vrot.slane %v2607, 5
        %v2640 = vrot.slane %v2639, 4
        %v2641 = vrot.slane %v2608, 5
        %v2642 = vsel %vm1784, %v2640, %v2641
        %v2643 = vrot.slane %v2609, 5
        %v2644 = vrot.slane %v2643, 4
        %v2645 = vrot.slane %v2610, 5
        %v2646 = vsel %vm1784, %v2644, %v2645
        %v2647 = vrot.slane %v2611, 5
        %v2648 = vrot.slane %v2647, 4
        %v2649 = vrot.slane %v2612, 5
        %v2650 = vsel %vm1784, %v2648, %v2649
        %v2651 = vrot.slane %v2613, 5
        %v2652 = vrot.slane %v2651, 4
        %v2653 = vrot.slane %v2614, 5
        %v2654 = vsel %vm1784, %v2652, %v2653
        %v2655 = vrot.slane %v2615, 5
        %v2656 = vrot.slane %v2655, 4
        %v2657 = vrot.slane %v2616, 5
        %v2658 = vsel %vm1784, %v2656, %v2657
        %v2659 = vrot.slane %v2617, 5
        %v2660 = vrot.slane %v2659, 4
        %v2661 = vrot.slane %v2618, 5
        %v2662 = vsel %vm1784, %v2660, %v2661
        %v2663 = vrot.slane %v2619, 5
        %v2664 = vrot.slane %v2663, 4
        %v2665 = vrot.slane %v2620, 5
        %v2666 = vsel %vm1784, %v2664, %v2665
        %v2667 = vrot.slane %v2621, 5
        %v2668 = vrot.slane %v2667, 4
        %v2669 = vrot.slane %v2622, 5
        %v2670 = vsel %vm1784, %v2668, %v2669
        %2671 = vrot.lane.b32.xlu0 %v2642, 64
        %v2672 = vpop.permute.xlu0 %2671
        %2673 = vrot.lane.b32.xlu0 %v2646, 64
        %v2674 = vpop.permute.xlu0 %2673
        %2675 = vrot.lane.b32.xlu0 %v2650, 64
        %v2676 = vpop.permute.xlu0 %2675
        %2677 = vrot.lane.b32.xlu0 %v2654, 64
        %v2678 = vpop.permute.xlu0 %2677
        %2679 = vrot.lane.b32.xlu0 %v2658, 64
        %v2680 = vpop.permute.xlu0 %2679
        %2681 = vrot.lane.b32.xlu0 %v2662, 64
        %v2682 = vpop.permute.xlu0 %2681
        %2683 = vrot.lane.b32.xlu0 %v2666, 64
        %v2684 = vpop.permute.xlu0 %2683
        %2685 = vrot.lane.b32.xlu0 %v2670, 64
        %v2686 = vpop.permute.xlu0 %2685
        %2695 = vst.msk [vmem:[#allocation3] sm:$0xf] %vm1841, %v2672
        %2696 = vst.msk [vmem:[#allocation3 + $0x4] sm:$0xf] %vm1841, %v2674
        %2697 = vst.msk [vmem:[#allocation3 + $0x8] sm:$0xf] %vm1841, %v2676
        %2698 = vst.msk [vmem:[#allocation3 + $0xc] sm:$0xf] %vm1841, %v2678
        %2699 = vst.msk [vmem:[#allocation3 + $0x10] sm:$0xf] %vm1841, %v2680
        %2700 = vst.msk [vmem:[#allocation3 + $0x14] sm:$0xf] %vm1841, %v2682
        %2701 = vst.msk [vmem:[#allocation3 + $0x18] sm:$0xf] %vm1841, %v2684
        %2702 = vst.msk [vmem:[#allocation3 + $0x1c] sm:$0xf] %vm1841, %v2686
        %v2703 = vld [vmem:[#allocation3] sm:$0xf]
        %v2704 = vld [vmem:[#allocation3 + $0x4] sm:$0xf]
        %v2705 = vld [vmem:[#allocation3 + $0x8] sm:$0xf]
        %v2706 = vld [vmem:[#allocation3 + $0xc] sm:$0xf]
        %v2707 = vld [vmem:[#allocation3 + $0x10] sm:$0xf]
        %v2708 = vld [vmem:[#allocation3 + $0x14] sm:$0xf]
        %v2709 = vld [vmem:[#allocation3 + $0x18] sm:$0xf]
        %v2710 = vld [vmem:[#allocation3 + $0x1c] sm:$0xf]
        %s2711 = scalar_lea.vmem %s2, 96
        %v2712 = vld [vmem:[%s2711] sm:$0xf]
        %v2713 = vld [vmem:[%s2711 + $0x4] sm:$0xf]
        %v2714 = vld [vmem:[%s2711 + $0x8] sm:$0xf]
        %v2715 = vld [vmem:[%s2711 + $0xc] sm:$0xf]
        %v2716 = vld [vmem:[%s2711 + $0x10] sm:$0xf]
        %v2717 = vld [vmem:[%s2711 + $0x14] sm:$0xf]
        %v2718 = vld [vmem:[%s2711 + $0x18] sm:$0xf]
        %v2719 = vld [vmem:[%s2711 + $0x1c] sm:$0xf]
        %v2720 = vld [vmem:[%s2711 + $0x20] sm:$0xf]
        %v2721 = vld [vmem:[%s2711 + $0x24] sm:$0xf]
        %v2722 = vld [vmem:[%s2711 + $0x28] sm:$0xf]
        %v2723 = vld [vmem:[%s2711 + $0x2c] sm:$0xf]
        %v2732 = vunpack.c.l.b16 %v2703
        %v2733 = vunpack.c.l.b16 %v2704
        %v2734 = vunpack.c.l.b16 %v2705
        %v2735 = vunpack.c.l.b16 %v2706
        %v2736 = vunpack.c.l.b16 %v2707
        %v2737 = vunpack.c.l.b16 %v2708
        %v2738 = vunpack.c.l.b16 %v2709
        %v2739 = vunpack.c.l.b16 %v2710
        %v2740 = vpack.c.b16 %v2733, %v2732
        %v2741 = vpack.c.b16 %v2735, %v2734
        %v2742 = vpack.c.b16 %v2737, %v2736
        %v2743 = vpack.c.b16 %v2739, %v2738
        %v2756 = vunpack.c.l.b16 %v2712
        %v2757 = vunpack.c.l.b16 %v2713
        %v2758 = vunpack.c.l.b16 %v2714
        %v2759 = vunpack.c.l.b16 %v2715
        %v2760 = vunpack.c.l.b16 %v2716
        %v2761 = vunpack.c.l.b16 %v2717
        %v2762 = vunpack.c.l.b16 %v2718
        %v2763 = vunpack.c.l.b16 %v2719
        %v2764 = vunpack.c.l.b16 %v2720
        %v2765 = vunpack.c.l.b16 %v2721
        %v2766 = vunpack.c.l.b16 %v2722
        %v2767 = vunpack.c.l.b16 %v2723
        %v2768 = vpack.c.b16 %v2757, %v2756
        %v2769 = vpack.c.b16 %v2759, %v2758
        %v2770 = vpack.c.b16 %v2761, %v2760
        %v2771 = vpack.c.b16 %v2763, %v2762
        %v2772 = vpack.c.b16 %v2765, %v2764
        %v2773 = vpack.c.b16 %v2767, %v2766
        %v2781 = vsel %vm2219, %v2740, 0
        %v2784 = vsel %vm2219, %v2741, 0
        %v2787 = vsel %vm2219, %v2742, 0
        %v2790 = vsel %vm2219, %v2743, 0
        %2792 = vmatprep.subr.bf16.mxu0 0
        %2793 = vmatpush1.bf16.msra.mxu0 0
        %2794 = vmatprep.subr.bf16.mxu0 0
        %2795 = vmatpush1.bf16.msra.mxu0 0
        %2796 = vmatprep.subr.bf16.mxu0 0
        %2797 = vmatpush1.bf16.msra.mxu0 %v2773
        %2798 = vmatprep.subr.bf16.mxu0 0
        %2799 = vmatpush1.bf16.msra.mxu0 %v2772
        %2800 = vmatprep.subr.bf16.mxu0 0
        %2801 = vmatpush1.bf16.msra.mxu0 %v2771
        %2802 = vmatprep.subr.bf16.mxu0 0
        %2803 = vmatpush1.bf16.msra.mxu0 %v2770
        %2804 = vmatprep.subr.bf16.mxu0 0
        %2805 = vmatpush1.bf16.msra.mxu0 %v2769
        %2806 = vmatprep.subr.bf16.mxu0 0
        %2807 = vmatpush1.bf16.msra.mxu0 %v2768
        %2808 = vmatprep.subr.bf16.mxu0 0
        %2809 = vmatpush2.bf16.msra.mxu0 0
        %2810 = vmatprep.subr.bf16.mxu0 0
        %2811 = vmatpush2.bf16.msra.mxu0 0
        %2812 = vmatprep.subr.bf16.mxu0 0
        %2813 = vmatpush2.bf16.msra.mxu0 0
        %2814 = vmatprep.subr.bf16.mxu0 0
        %2815 = vmatpush2.bf16.msra.mxu0 0
        %2816 = vmatprep.subr.bf16.mxu0 0
        %2817 = vmatpush2.bf16.msra.mxu0 0
        %2818 = vmatprep.subr.bf16.mxu0 0
        %2819 = vmatpush2.bf16.msra.mxu0 0
        %2820 = vmatprep.subr.bf16.mxu0 0
        %2821 = vmatpush2.bf16.msra.mxu0 0
        %2822 = vmatprep.subr.bf16.mxu0 0
        %2823 = vmatpush2.bf16.msra.mxu0 0
        %2824 = vmatprep.mubr.bf16.mxu0 0
        %2825 = vmatmul.mubr.bf16.gmra.mxu0 %v2781
        %v2826 = vpop.f32.mrf.mxu0
        %v2827 = vadd.f32 0.0, %v2826
        %v2828 = vpop.f32.mrf.mxu0
        %v2829 = vpop.f32.mrf.mxu0
        %v2830 = vadd.f32 0.0, %v2829
        %v2831 = vpop.f32.mrf.mxu0
        %2832 = vmatprep.mubr.bf16.mxu0 0
        %2833 = vmatmul.mubr.bf16.gmra.mxu0 %v2784
        %v2834 = vpop.f32.mrf.mxu0
        %v2835 = vadd.f32 0.0, %v2834
        %v2836 = vpop.f32.mrf.mxu0
        %v2837 = vpop.f32.mrf.mxu0
        %v2838 = vadd.f32 0.0, %v2837
        %v2839 = vpop.f32.mrf.mxu0
        %2840 = vmatprep.mubr.bf16.mxu0 0
        %2841 = vmatmul.mubr.bf16.gmra.mxu0 %v2787
        %v2842 = vpop.f32.mrf.mxu0
        %v2843 = vadd.f32 0.0, %v2842
        %v2844 = vpop.f32.mrf.mxu0
        %v2845 = vpop.f32.mrf.mxu0
        %v2846 = vadd.f32 0.0, %v2845
        %v2847 = vpop.f32.mrf.mxu0
        %2848 = vmatprep.mubr.bf16.mxu0 0
        %2849 = vmatmul.mubr.bf16.gmra.mxu0 %v2790
        %v2850 = vpop.f32.mrf.mxu0
        %v2851 = vadd.f32 0.0, %v2850
        %v2852 = vpop.f32.mrf.mxu0
        %v2853 = vpop.f32.mrf.mxu0
        %v2854 = vadd.f32 0.0, %v2853
        %v2855 = vpop.f32.mrf.mxu0
        %2856 = vdwg.mxu0
        %v2857 = vadd.f32 %v2400, %v2827
        %v2858 = vadd.f32 %v2403, %v2830
        %v2859 = vadd.f32 %v2408, %v2835
        %v2860 = vadd.f32 %v2411, %v2838
        %v2861 = vadd.f32 %v2416, %v2843
        %v2862 = vadd.f32 %v2419, %v2846
        %v2863 = vadd.f32 %v2424, %v2851
        %v2864 = vadd.f32 %v2427, %v2854
        %v2865 = vlaneseq
        %v2866 = vshrl.u32 %v2865, 7
        %v2867 = vsub.s32 2, %v2866
        %v2868 = vrot.slane %v224, %v2867
        %v2869 = vmul.f32 %v2857, %v2868
        %v2870 = vmul.f32 %v2858, %v2868
        %v2871 = vmul.f32 %v2859, %v2868
        %v2872 = vmul.f32 %v2860, %v2868
        %v2873 = vmul.f32 %v2861, %v2868
        %v2874 = vmul.f32 %v2862, %v2868
        %v2875 = vmul.f32 %v2863, %v2868
        %v2876 = vmul.f32 %v2864, %v2868
        %v2877 = vlaneseq
        %v2878 = vshrl.u32 %v2877, 7
        %v2879 = vsub.s32 3, %v2878
        %v2880 = vrot.slane %v224, %v2879
        %v2881 = vadd.f32 %v2869, %v2880
        %v2882 = vadd.f32 %v2870, %v2880
        %v2883 = vadd.f32 %v2871, %v2880
        %v2884 = vadd.f32 %v2872, %v2880
        %v2885 = vadd.f32 %v2873, %v2880
        %v2886 = vadd.f32 %v2874, %v2880
        %v2887 = vadd.f32 %v2875, %v2880
        %v2888 = vadd.f32 %v2876, %v2880
        %v2889 = vld [vmem:[%s559] sm:$0xf]
        %v2890 = vld [vmem:[%s559 + $0x8] sm:$0xf]
        %v2891 = vld [vmem:[%s559 + $0x10] sm:$0xf]
        %v2892 = vld [vmem:[%s559 + $0x18] sm:$0xf]
        %v2893 = vld [vmem:[%s559 + $0x20] sm:$0xf]
        %v2894 = vld [vmem:[%s559 + $0x28] sm:$0xf]
        %v2895 = vld [vmem:[%s559 + $0x30] sm:$0xf]
        %v2896 = vld [vmem:[%s559 + $0x38] sm:$0xf]
        %v2897 = vld [vmem:[%s4] sm:$0xf]
        %v2898 = vld [vmem:[%s4 + $0x4] sm:$0xf]
        %v2907 = vunpack.c.l.b16 %v2889
        %v2908 = vunpack.c.l.b16 %v2890
        %v2909 = vunpack.c.l.b16 %v2891
        %v2910 = vunpack.c.l.b16 %v2892
        %v2911 = vunpack.c.l.b16 %v2893
        %v2912 = vunpack.c.l.b16 %v2894
        %v2913 = vunpack.c.l.b16 %v2895
        %v2914 = vunpack.c.l.b16 %v2896
        %v2915 = vpack.c.b16 %v2908, %v2907
        %v2916 = vpack.c.b16 %v2910, %v2909
        %v2917 = vpack.c.b16 %v2912, %v2911
        %v2918 = vpack.c.b16 %v2914, %v2913
        %v2921 = vunpack.c.l.b16 %v2897
        %v2922 = vunpack.c.l.b16 %v2898
        %v2923 = vpack.c.b16 %v2922, %v2921
        %vm2925 = vcmask 130048
        %v2927 = vsel %vm2925, %v2915, 0
        %v2930 = vsel %vm2925, %v2916, 0
        %v2933 = vsel %vm2925, %v2917, 0
        %v2936 = vsel %vm2925, %v2918, 0
        %2938 = vmatprep.subr.bf16.mxu0 0
        %2939 = vmatpush1.bf16.msra.mxu0 0
        %2940 = vmatprep.subr.bf16.mxu0 0
        %2941 = vmatpush1.bf16.msra.mxu0 0
        %2942 = vmatprep.subr.bf16.mxu0 0
        %2943 = vmatpush1.bf16.msra.mxu0 0
        %2944 = vmatprep.subr.bf16.mxu0 0
        %2945 = vmatpush1.bf16.msra.mxu0 0
        %2946 = vmatprep.subr.bf16.mxu0 0
        %2947 = vmatpush1.bf16.msra.mxu0 0
        %2948 = vmatprep.subr.bf16.mxu0 0
        %2949 = vmatpush1.bf16.msra.mxu0 0
        %2950 = vmatprep.subr.bf16.mxu0 0
        %2951 = vmatpush1.bf16.msra.mxu0 0
        %2952 = vmatprep.subr.bf16.mxu0 0
        %2953 = vmatpush1.bf16.msra.mxu0 %v2923
        %2954 = vmatprep.subr.bf16.mxu0 0
        %2955 = vmatpush2.bf16.msra.mxu0 0
        %2956 = vmatprep.subr.bf16.mxu0 0
        %2957 = vmatpush2.bf16.msra.mxu0 0
        %2958 = vmatprep.subr.bf16.mxu0 0
        %2959 = vmatpush2.bf16.msra.mxu0 0
        %2960 = vmatprep.subr.bf16.mxu0 0
        %2961 = vmatpush2.bf16.msra.mxu0 0
        %2962 = vmatprep.subr.bf16.mxu0 0
        %2963 = vmatpush2.bf16.msra.mxu0 0
        %2964 = vmatprep.subr.bf16.mxu0 0
        %2965 = vmatpush2.bf16.msra.mxu0 0
        %2966 = vmatprep.subr.bf16.mxu0 0
        %2967 = vmatpush2.bf16.msra.mxu0 0
        %2968 = vmatprep.subr.bf16.mxu0 0
        %2969 = vmatpush2.bf16.msra.mxu0 0
        %2970 = vmatprep.mubr.bf16.mxu0 0
        %2971 = vmatmul.mubr.bf16.gmra.mxu0 %v2927
        %v2972 = vpop.f32.mrf.mxu0
        %v2973 = vadd.f32 0.0, %v2972
        %v2974 = vpop.f32.mrf.mxu0
        %v2975 = vpop.f32.mrf.mxu0
        %v2976 = vadd.f32 0.0, %v2975
        %v2977 = vpop.f32.mrf.mxu0
        %2978 = vmatprep.mubr.bf16.mxu0 0
        %2979 = vmatmul.mubr.bf16.gmra.mxu0 %v2930
        %v2980 = vpop.f32.mrf.mxu0
        %v2981 = vadd.f32 0.0, %v2980
        %v2982 = vpop.f32.mrf.mxu0
        %v2983 = vpop.f32.mrf.mxu0
        %v2984 = vadd.f32 0.0, %v2983
        %v2985 = vpop.f32.mrf.mxu0
        %2986 = vmatprep.mubr.bf16.mxu0 0
        %2987 = vmatmul.mubr.bf16.gmra.mxu0 %v2933
        %v2988 = vpop.f32.mrf.mxu0
        %v2989 = vadd.f32 0.0, %v2988
        %v2990 = vpop.f32.mrf.mxu0
        %v2991 = vpop.f32.mrf.mxu0
        %v2992 = vadd.f32 0.0, %v2991
        %v2993 = vpop.f32.mrf.mxu0
        %2994 = vmatprep.mubr.bf16.mxu0 0
        %2995 = vmatmul.mubr.bf16.gmra.mxu0 %v2936
        %v2996 = vpop.f32.mrf.mxu0
        %v2997 = vadd.f32 0.0, %v2996
        %v2998 = vpop.f32.mrf.mxu0
        %v2999 = vpop.f32.mrf.mxu0
        %v3000 = vadd.f32 0.0, %v2999
        %v3001 = vpop.f32.mrf.mxu0
        %3002 = vdwg.mxu0
        %v3003 = vlaneseq
        %v3004 = vshrl.u32 %v3003, 7
        %v3005 = vsub.s32 4, %v3004
        %v3006 = vrot.slane %v224, %v3005
        %v3007 = vmul.f32 %v2973, %v3006
        %v3008 = vmul.f32 %v2976, %v3006
        %v3009 = vmul.f32 %v2981, %v3006
        %v3010 = vmul.f32 %v2984, %v3006
        %v3011 = vmul.f32 %v2989, %v3006
        %v3012 = vmul.f32 %v2992, %v3006
        %v3013 = vmul.f32 %v2997, %v3006
        %v3014 = vmul.f32 %v3000, %v3006
        %v3015 = vlaneseq
        %v3016 = vshrl.u32 %v3015, 7
        %v3017 = vsub.s32 5, %v3016
        %v3018 = vrot.slane %v224, %v3017
        %v3019 = vadd.f32 %v3007, %v3018
        %v3020 = vadd.f32 %v3008, %v3018
        %v3021 = vadd.f32 %v3009, %v3018
        %v3022 = vadd.f32 %v3010, %v3018
        %v3023 = vadd.f32 %v3011, %v3018
        %v3024 = vadd.f32 %v3012, %v3018
        %v3025 = vadd.f32 %v3013, %v3018
        %v3026 = vadd.f32 %v3014, %v3018
        %v3027 = vadd.f32 %v2881, %v3019
        %v3028 = vadd.f32 %v2882, %v3020
        %v3029 = vadd.f32 %v2883, %v3021
        %v3030 = vadd.f32 %v2884, %v3022
        %v3031 = vadd.f32 %v2885, %v3023
        %v3032 = vadd.f32 %v2886, %v3024
        %v3033 = vadd.f32 %v2887, %v3025
        %v3034 = vadd.f32 %v2888, %v3026
        %v3035 = vmax.f32 %v3027, 0.0
        %v3036 = vmax.f32 %v3028, 0.0
        %v3037 = vmax.f32 %v3029, 0.0
        %v3038 = vmax.f32 %v3030, 0.0
        %v3039 = vmax.f32 %v3031, 0.0
        %v3040 = vmax.f32 %v3032, 0.0
        %v3041 = vmax.f32 %v3033, 0.0
        %v3042 = vmax.f32 %v3034, 0.0
        %vm3043 = vcmask 261120
        %3044 = vst.msk [vmem:[%s217] sm:$0xff] %vm3043, %v3035
        %3045 = vst.msk [vmem:[%s217 + $0x8] sm:$0xff] %vm3043, %v3036
        %3046 = vst.msk [vmem:[%s217 + $0x10] sm:$0xff] %vm3043, %v3037
        %3047 = vst.msk [vmem:[%s217 + $0x18] sm:$0xff] %vm3043, %v3038
        %3048 = vst.msk [vmem:[%s217 + $0x20] sm:$0xff] %vm3043, %v3039
        %3049 = vst.msk [vmem:[%s217 + $0x28] sm:$0xff] %vm3043, %v3040
        %3050 = vst.msk [vmem:[%s217 + $0x30] sm:$0xff] %vm3043, %v3041
        %3051 = vst.msk [vmem:[%s217 + $0x38] sm:$0xff] %vm3043, %v3042
        %s3052 = sand.u32 %s137, 1
        %s3053 = scalar_lea.sflag [#allocation5], %s3052
        %s3054 = sand.u32 %s137, 1
        %s3055 = smul.addr %s3054, 64
        %s3056 = scalar_lea.vmem [#allocation4], %s3055
        // Predicated region
        $region41: #{basic_block_forward.1} parent=39 // pred_check
          %p3057 = pneg %p147
        $region42: #{basic_block_forward.1} parent=39 // pred_check_branch
          %3059 = sbr.rel (%p3057) target = $region44
        $region43: #{basic_block_forward.1} parent=39 // pred_region
          %s3061 = ssub.s32 1024, 1024
          %3062 = vsyncadd %s3053, %s3061
          %s3063 = smul.addr %s19, 8
          %s3064 = smul.addr %s3063, 128
          %s3065 = scalar_lea.hbm %s5, %s3064
          %s3066 = sshll.u32 %s3056, 4
          %s3067 = int_to_ptr.vmem [resolvable:$true] %s3066
          %3072 = dma.vmem_to_hbm [thread:$0]  %s3067, 1024, %s3065, %s3053, 128, 128, 8
        $region44: #{basic_block_forward.1} parent=39 // pred_fallthru
          _
      $region40: #{basic_block_forward.1} parent=5 // pred_fallthru
        _
      %p3073 = scmp.le.s32.totalorder 2, %s14
      // Predicated region
      $region45: #{basic_block_forward.1} parent=5 // pred_check
        %p3074 = pneg %p3073
      $region46: #{basic_block_forward.1} parent=5 // pred_check_branch
        %3076 = sbr.rel (%p3074) target = $region48
      $region47: #{basic_block_forward.1} parent=5 // pred_region
        %s3077 = ssub.s32 %s14, 2
        // Predicated region
        $region49: #{basic_block_forward.1} parent=47 // pred_check
          %p3078 = pneg %p153
        $region50: #{basic_block_forward.1} parent=47 // pred_check_branch
          %3080 = sbr.rel (%p3078) target = $region52
        $region51: #{basic_block_forward.1} parent=47 // pred_region
          %s3081 = sand.u32 %s138, 1
          %s3082 = scalar_lea.sflag [#allocation5], %s3081
          %s3083 = sand.u32 %s138, 1
          %s3084 = smul.addr %s3083, 64
          %s3085 = scalar_lea.vmem [#allocation4], %s3084
          %3086 = dma.done %s3082, 1024
        $region52: #{basic_block_forward.1} parent=47 // pred_fallthru
          _
      $region48: #{basic_block_forward.1} parent=5 // pred_fallthru
        _
    $region6: #{basic_block_forward.1} parent=1 // loop_footer
      %s18 = sadd.s32 1, %s14
    $region7: #{basic_block_forward.1} parent=1 // loop_footer_branch
      %13 = sbr.rel target = $region3
    $region8: #{basic_block_forward.1} parent=1 // loop_exit
      _
    %3087 = vsyncpa [#allocation5], 1
    %s3088 = scalar_lea.sflag [#allocation5], 1
    %3089 = vsyncpa %s3088, 1

</llo_original>
